<compile_context>
chip_gen: v7x
topology: tpu7x:2x2x1
jax: 0.10.0
libtpu: 0.0.40
codegen_flags: <defaults>
</compile_context>

<pallas_src>
import jax
import jax.numpy as jnp
from jax import lax
from jax.experimental import pallas as pl
from jax.experimental.pallas import tpu as pltpu

# Full-f32 matmuls everywhere outside the Mosaic-compiled kernel (reference,
# wrapper prep, and interpret-mode evaluation of the kernel's dots).
jax.config.update("jax_default_matmul_precision", "highest")


# -----------------------------------------------------------------------------
# Kernel
# -----------------------------------------------------------------------------
def answer_pointer_kernel(
    pass_ref, ques_ref, vt1_ref, vt2_ref,
    wqu_t_ref, q_bias_ref, wph_t_ref, wph_b_ref, wah_t_ref, wah_b_ref,
    w_ih_t_ref, w_hh_t_ref, b_ih_ref, b_hh_ref,
    out_ref,
):
    f32 = jnp.float32
    passE = pass_ref[...]                       # (Bb, lP, D2)  compute dtype
    quesE = ques_ref[...]                       # (Bb, lQ, D2)  compute dtype
    Bb, lP, D2 = passE.shape
    lQ = quesE.shape[1]
    cdt = passE.dtype                           # MXU operand dtype (f32 or bf16)

    vt1 = vt1_ref[...]                          # (Bb, H) f32
    vt2 = vt2_ref[...]                          # (Bb, H) f32

    def softmax_lane(s):                        # softmax over lanes of (Bb, L), f32
        m = jnp.max(s, axis=-1, keepdims=True)
        e = jnp.exp(s - m)
        return e / jnp.sum(e, axis=-1, keepdims=True)

    # ---- question pooling: rQ = softmax_l(v1^T tanh(Wu u + Wv vr)) @ u ----
    # WQ_sub_v(VQ_sub_r) is batch-independent and already folded into q_bias.
    q_u = jnp.dot(quesE.reshape(Bb * lQ, D2), wqu_t_ref[...],
                  preferred_element_type=f32) + q_bias_ref[...]      # (Bb*lQ, H)
    temp = jnp.tanh(q_u).reshape(Bb, lQ, -1)                         # (Bb, lQ, H)
    sQ = jnp.sum(temp * vt1[:, None, :], axis=-1)                    # (Bb, lQ)
    a = softmax_lane(sQ)
    rQ = jnp.sum(a[:, :, None] * quesE, axis=1)                      # (Bb, D2) f32

    # passage projection is rQ-independent: hoisted out of both pointer steps
    p_h = (jnp.dot(passE.reshape(Bb * lP, D2), wph_t_ref[...],
                   preferred_element_type=f32)
           + wph_b_ref[...]).reshape(Bb, lP, -1)                     # (Bb, lP, H)

    def pointer(rq):
        a_h = jnp.dot(rq.astype(cdt), wah_t_ref[...],
                      preferred_element_type=f32) + wah_b_ref[...]   # (Bb, H)
        t2 = jnp.tanh(p_h + a_h[:, None, :])                         # (Bb, lP, H)
        sP = jnp.sum(t2 * vt2[:, None, :], axis=-1)                  # (Bb, lP)
        return softmax_lane(sP)

    # ---- pointer step 1 ----
    aP1 = pointer(rQ)                                                # (Bb, lP)
    ct = jnp.sum(aP1[:, :, None] * passE, axis=1)                    # (Bb, D2) f32

    # ---- GRUCell(input=rQ, hidden=ct): fused (D2, 3*D2) weights ----
    gi = jnp.dot(rQ.astype(cdt), w_ih_t_ref[...],
                 preferred_element_type=f32) + b_ih_ref[...]         # (Bb, 3*D2)
    gh = jnp.dot(ct.astype(cdt), w_hh_t_ref[...],
                 preferred_element_type=f32) + b_hh_ref[...]         # (Bb, 3*D2)
    r = jax.nn.sigmoid(gi[:, :D2] + gh[:, :D2])
    z = jax.nn.sigmoid(gi[:, D2:2 * D2] + gh[:, D2:2 * D2])
    n = jnp.tanh(gi[:, 2 * D2:] + r * gh[:, 2 * D2:])
    rQ2 = (1.0 - z) * n + z * ct                                     # (Bb, D2)

    # ---- pointer step 2 ----
    aP2 = pointer(rQ2)

    # single lane-dense packed output slab: [aP1 | aP2]
    out_ref[...] = jnp.concatenate([aP1, aP2], axis=-1)              # (Bb, 2*lP)


# -----------------------------------------------------------------------------
# Wrapper
# -----------------------------------------------------------------------------
def answer_pointer_network(passEnc, quesEnc, params, *,
                           compute_dtype=jnp.float32,
                           inputs_batch_major=False,
                           b_blk=None,
                           vmem_budget_bytes=40 * 2**20):
    """passEnc: (lP, B, 2H), quesEnc: (lQ, B, 2H)  ->  (aP1, aP2), each (B, lP).

    compute_dtype=jnp.bfloat16 casts MXU operands only (production path);
    inputs_batch_major=True accepts (B, L, 2H) activations and skips the HBM
    transpose of the largest arrays.
    """
    f32 = jnp.float32
    cdt = jnp.dtype(compute_dtype)

    if inputs_batch_major:
        passE = passEnc.astype(cdt)                                  # (B, lP, D2)
        quesE = quesEnc.astype(cdt)                                  # (B, lQ, D2)
    else:
        passE = jnp.transpose(passEnc, (1, 0, 2)).astype(cdt)
        quesE = jnp.transpose(quesEnc, (1, 0, 2)).astype(cdt)
    B, lP, D2 = passE.shape
    lQ = quesE.shape[1]
    H = params['wqu_w'].shape[0]

    vt1 = params['vt1'][:, :, 0].astype(f32)                         # (B, H)
    vt2 = params['vt2'][:, :, 0].astype(f32)                         # (B, H)

    # fold batch-independent WQ_sub_v(VQ_sub_r) projection into the pooling bias
    vqr2d = params['vqr'].reshape(1, H).astype(f32)
    q_bias = (jnp.dot(vqr2d, params['wqv_w'].T.astype(f32),
                      precision=lax.Precision.HIGHEST)
              + params['wqv_b'] + params['wqu_b']).astype(f32)       # (1, H)

    wqu_t = params['wqu_w'].T.astype(cdt)                            # (D2, H)
    wph_t = params['wph_w'].T.astype(cdt)                            # (D2, H)
    wah_t = params['wah_w'].T.astype(cdt)                            # (D2, H)
    wph_b = params['wph_b'][None, :].astype(f32)                     # (1, H)
    wah_b = params['wah_b'][None, :].astype(f32)                     # (1, H)

    # fused GRU weights: one dot per operand, gates sliced in-kernel
    w_ih_t = params['w_ih'].T.astype(cdt)                            # (D2, 3*D2)
    w_hh_t = params['w_hh'].T.astype(cdt)                            # (D2, 3*D2)
    b_ih = params['b_ih'][None, :].astype(f32)                       # (1, 3*D2)
    b_hh = params['b_hh'][None, :].astype(f32)                       # (1, 3*D2)

    # ---- VMEM-budget-derived batch blocking ----
    weight_bytes = ((wqu_t.size + wph_t.size + wah_t.size
                     + w_ih_t.size + w_hh_t.size) * cdt.itemsize
                    + (q_bias.size + wph_b.size + wah_b.size
                       + b_ih.size + b_hh.size) * 4)
    per_row_bytes = (2 * (lP + lQ) * D2 * cdt.itemsize               # dbl-buffered tiles
                     + (3 * lP + 2 * lQ) * H * 4                     # p_h, t2, temp (f32)
                     + 2 * (2 * lP) * 4                              # packed output bufs
                     + 16 * D2 * 4)                                  # rQ/ct/gates + slack
    if b_blk is None:
        avail = max(vmem_budget_bytes - weight_bytes - (2 << 20), per_row_bytes)
        b_blk = max(1, int(avail // per_row_bytes))
        if B >= 16:
            # keep >= 2 batch blocks so the "parallel" axis can use both v7x TCs
            b_blk = min(b_blk, ((B + 1) // 2 + 7) // 8 * 8)
    b_blk = int(max(1, min(b_blk, B)))
    if b_blk < B:
        b_blk = max(8, (b_blk // 8) * 8)                             # sublane-aligned blocks
    n_blk = pl.cdiv(B, b_blk)
    B_pad = n_blk * b_blk
    if B_pad != B:
        pad = B_pad - B
        passE = jnp.pad(passE, ((0, pad), (0, 0), (0, 0)))
        quesE = jnp.pad(quesE, ((0, pad), (0, 0), (0, 0)))
        vt1 = jnp.pad(vt1, ((0, pad), (0, 0)))
        vt2 = jnp.pad(vt2, ((0, pad), (0, 0)))

    full2 = lambda arr: pl.BlockSpec(arr.shape, lambda i: (0, 0))
    in_specs = [
        pl.BlockSpec((b_blk, lP, D2), lambda i: (i, 0, 0)),          # passE
        pl.BlockSpec((b_blk, lQ, D2), lambda i: (i, 0, 0)),          # quesE
        pl.BlockSpec((b_blk, H), lambda i: (i, 0)),                  # vt1
        pl.BlockSpec((b_blk, H), lambda i: (i, 0)),                  # vt2
        full2(wqu_t), full2(q_bias),
        full2(wph_t), full2(wph_b),
        full2(wah_t), full2(wah_b),
        full2(w_ih_t), full2(w_hh_t), full2(b_ih), full2(b_hh),
    ]
    out_specs = pl.BlockSpec((b_blk, 2 * lP), lambda i: (i, 0))
    out_shape = jax.ShapeDtypeStruct((B_pad, 2 * lP), f32)

    vmem_need = int(b_blk * per_row_bytes + weight_bytes)
    vmem_limit = int(min(64 * 2**20, max(32 * 2**20, int(1.3 * vmem_need))))

    packed = pl.pallas_call(
        answer_pointer_kernel,
        grid=(n_blk,),
        in_specs=in_specs,
        out_specs=out_specs,
        out_shape=out_shape,
        compiler_params=pltpu.CompilerParams(
            dimension_semantics=("parallel",),
            vmem_limit_bytes=vmem_limit),
    )(passE, quesE, vt1, vt2,
      wqu_t, q_bias, wph_t, wph_b, wah_t, wah_b,
      w_ih_t, w_hh_t, b_ih, b_hh)

    return packed[:B, :lP], packed[:B, lP:]


# -----------------------------------------------------------------------------
# Pure-JAX reference (mirrors the PyTorch forward)
# -----------------------------------------------------------------------------
def reference(passEnc, quesEnc, p):
    def linear(x, w, b):
        return x @ w.T + b

    temp = jnp.tanh(linear(quesEnc, p['wqu_w'], p['wqu_b'])
                    + linear(p['vqr'], p['wqv_w'], p['wqv_b']))
    temp = jnp.transpose(temp, (1, 0, 2))                    # (B, lQ, H)
    sQ = jnp.matmul(temp, p['vt1'])                          # (B, lQ, 1)
    a = jax.nn.softmax(sQ, axis=1)
    quesEnc_bf = jnp.transpose(quesEnc, (1, 0, 2))
    passEnc_bf = jnp.transpose(passEnc, (1, 0, 2))
    a = jnp.transpose(a, (0, 2, 1))
    rQ = jnp.matmul(a, quesEnc_bf)[:, 0, :]                  # (B, 2H)

    def pointer(rq):
        t2 = jnp.tanh(linear(passEnc, p['wph_w'], p['wph_b'])
                      + linear(rq, p['wah_w'], p['wah_b']))
        t2 = jnp.transpose(t2, (1, 0, 2))                    # (B, lP, H)
        sP = jnp.matmul(t2, p['vt2'])                        # (B, lP, 1)
        return jax.nn.softmax(sP, axis=1)[:, :, 0]           # (B, lP)

    aP1 = pointer(rQ)
    ct = jnp.matmul(aP1[:, None, :], passEnc_bf)[:, 0, :]    # (B, 2H)

    gi = rQ @ p['w_ih'].T + p['b_ih']
    gh = ct @ p['w_hh'].T + p['b_hh']
    i_r, i_z, i_n = jnp.split(gi, 3, axis=-1)
    h_r, h_z, h_n = jnp.split(gh, 3, axis=-1)
    r = jax.nn.sigmoid(i_r + h_r)
    z = jax.nn.sigmoid(i_z + h_z)
    n = jnp.tanh(i_n + r * h_n)
    rQ2 = (1.0 - z) * n + z * ct

    aP2 = pointer(rQ2)
    return aP1, aP2


if __name__ == "__main__":
    # small, module-consistent shapes
    B, H, lP, lQ = 2, 32, 16, 8
    D2 = 2 * H

    key = jax.random.PRNGKey(0)
    ks = jax.random.split(key, 12)

    def linear_init(k, out_f, in_f):
        kw, kb = jax.random.split(k)
        lim = 1.0 / (in_f ** 0.5)
        w = jax.random.uniform(kw, (out_f, in_f), jnp.float32, -lim, lim)
        b = jax.random.uniform(kb, (out_f,), jnp.float32, -lim, lim)
        return w, b

    wph_w, wph_b = linear_init(ks[0], H, D2)     # WP_sub_h
    wah_w, wah_b = linear_init(ks[1], H, D2)     # Wa_sub_h
    wqu_w, wqu_b = linear_init(ks[2], H, D2)     # WQ_sub_u
    wqv_w, wqv_b = linear_init(ks[3], H, H)      # WQ_sub_v

    glim = 1.0 / (D2 ** 0.5)
    w_ih = jax.random.uniform(ks[4], (3 * D2, D2), jnp.float32, -glim, glim)
    w_hh = jax.random.uniform(ks[5], (3 * D2, D2), jnp.float32, -glim, glim)
    b_ih = jax.random.uniform(ks[6], (3 * D2,), jnp.float32, -glim, glim)
    b_hh = jax.random.uniform(ks[7], (3 * D2,), jnp.float32, -glim, glim)

    params = dict(
        wph_w=wph_w, wph_b=wph_b, wah_w=wah_w, wah_b=wah_b,
        wqu_w=wqu_w, wqu_b=wqu_b, wqv_w=wqv_w, wqv_b=wqv_b,
        vt1=jax.random.normal(ks[8], (B, H, 1), jnp.float32),
        vt2=jax.random.normal(ks[9], (B, H, 1), jnp.float32),
        vqr=jax.random.normal(ks[10], (1, 1, H), jnp.float32),
        w_ih=w_ih, w_hh=w_hh, b_ih=b_ih, b_hh=b_hh,
    )

    kin = jax.random.split(ks[11], 2)
    passEnc = jax.random.normal(kin[0], (lP, B, D2), jnp.float32)
    quesEnc = jax.random.normal(kin[1], (lQ, B, D2), jnp.float32)

    # f32 operand path for the tight-tolerance self-check; pass
    # compute_dtype=jnp.bfloat16 for the production MXU path.
    ap1, ap2 = answer_pointer_network(passEnc, quesEnc, params,
                                      compute_dtype=jnp.float32)
    jax.block_until_ready((ap1, ap2))

    ref1, ref2 = reference(passEnc, quesEnc, params)
    assert ap1.shape == (B, lP) and ap2.shape == (B, lP)
    assert jnp.allclose(ap1, ref1, atol=2e-3, rtol=2e-3), \
        float(jnp.max(jnp.abs(ap1 - ref1)))
    assert jnp.allclose(ap2, ref2, atol=2e-3, rtol=2e-3), \
        float(jnp.max(jnp.abs(ap2 - ref2)))

    print("KERNEL_OK")
</pallas_src>

<mosaic_0001>
module attributes {stable_mosaic.version = 11 : i64} {
  func.func @answer_pointer_kernel(%arg0: i32, %arg1: memref<2x16x64xf32, #tpu.memory_space<vmem>>, %arg2: memref<2x8x64xf32, #tpu.memory_space<vmem>>, %arg3: memref<2x32xf32, #tpu.memory_space<vmem>>, %arg4: memref<2x32xf32, #tpu.memory_space<vmem>>, %arg5: memref<64x32xf32, #tpu.memory_space<vmem>>, %arg6: memref<1x32xf32, #tpu.memory_space<vmem>>, %arg7: memref<64x32xf32, #tpu.memory_space<vmem>>, %arg8: memref<1x32xf32, #tpu.memory_space<vmem>>, %arg9: memref<64x32xf32, #tpu.memory_space<vmem>>, %arg10: memref<1x32xf32, #tpu.memory_space<vmem>>, %arg11: memref<64x192xf32, #tpu.memory_space<vmem>>, %arg12: memref<64x192xf32, #tpu.memory_space<vmem>>, %arg13: memref<1x192xf32, #tpu.memory_space<vmem>>, %arg14: memref<1x192xf32, #tpu.memory_space<vmem>>, %arg15: memref<2x32xf32, #tpu.memory_space<vmem>>) attributes {dimension_semantics = [#tpu.dimension_semantics<parallel>], iteration_bounds = array<i64: 1>, scalar_prefetch = 0 : i64, scratch_operands = 0 : i64, tpu.core_type = #tpu.core_type<tc>, window_params = [{transform_indices = @transform_0, window_bounds = array<i64: 2, 16, 64>}, {transform_indices = @transform_1, window_bounds = array<i64: 2, 8, 64>}, {transform_indices = @transform_2, window_bounds = array<i64: 2, 32>}, {transform_indices = @transform_3, window_bounds = array<i64: 2, 32>}, {pipeline_mode = #tpu.pipeline_mode<synchronous>, transform_indices = @transform_4, window_bounds = array<i64: 64, 32>}, {pipeline_mode = #tpu.pipeline_mode<synchronous>, transform_indices = @transform_5, window_bounds = array<i64: 1, 32>}, {pipeline_mode = #tpu.pipeline_mode<synchronous>, transform_indices = @transform_6, window_bounds = array<i64: 64, 32>}, {pipeline_mode = #tpu.pipeline_mode<synchronous>, transform_indices = @transform_7, window_bounds = array<i64: 1, 32>}, {pipeline_mode = #tpu.pipeline_mode<synchronous>, transform_indices = @transform_8, window_bounds = array<i64: 64, 32>}, {pipeline_mode = #tpu.pipeline_mode<synchronous>, transform_indices = @transform_9, window_bounds = array<i64: 1, 32>}, {pipeline_mode = #tpu.pipeline_mode<synchronous>, transform_indices = @transform_10, window_bounds = array<i64: 64, 192>}, {pipeline_mode = #tpu.pipeline_mode<synchronous>, transform_indices = @transform_11, window_bounds = array<i64: 64, 192>}, {pipeline_mode = #tpu.pipeline_mode<synchronous>, transform_indices = @transform_12, window_bounds = array<i64: 1, 192>}, {pipeline_mode = #tpu.pipeline_mode<synchronous>, transform_indices = @transform_13, window_bounds = array<i64: 1, 192>}, {transform_indices = @transform_14, window_bounds = array<i64: 2, 32>}]} {
    %c0 = arith.constant 0 : index
    %c0_0 = arith.constant 0 : index
    %c0_1 = arith.constant 0 : index
    %0 = vector.load %arg1[%c0, %c0_0, %c0_1] : memref<2x16x64xf32, #tpu.memory_space<vmem>>, vector<2x16x64xf32>
    %c0_2 = arith.constant 0 : index
    %c0_3 = arith.constant 0 : index
    %c0_4 = arith.constant 0 : index
    %1 = vector.load %arg2[%c0_2, %c0_3, %c0_4] : memref<2x8x64xf32, #tpu.memory_space<vmem>>, vector<2x8x64xf32>
    %c0_5 = arith.constant 0 : index
    %c0_6 = arith.constant 0 : index
    %2 = vector.load %arg3[%c0_5, %c0_6] : memref<2x32xf32, #tpu.memory_space<vmem>>, vector<2x32xf32>
    %c0_7 = arith.constant 0 : index
    %c0_8 = arith.constant 0 : index
    %3 = vector.load %arg4[%c0_7, %c0_8] : memref<2x32xf32, #tpu.memory_space<vmem>>, vector<2x32xf32>
    %4 = vector.shape_cast %1 : vector<2x8x64xf32> to vector<16x64xf32>
    %c0_9 = arith.constant 0 : index
    %c0_10 = arith.constant 0 : index
    %5 = vector.load %arg5[%c0_9, %c0_10] : memref<64x32xf32, #tpu.memory_space<vmem>>, vector<64x32xf32>
    %cst = arith.constant dense<0.000000e+00> : vector<16x32xf32>
    %6 = tpu.matmul %4, %5, %cst {dimension_numbers = #tpu.dot_dimension_numbers<[1], [0], [0], [1], [0, 0, 1, 1], [], []>, precision = #tpu.contract_precision<fp32>} : vector<16x64xf32>, vector<64x32xf32>, vector<16x32xf32> -> vector<16x32xf32>
    %c0_11 = arith.constant 0 : index
    %c0_12 = arith.constant 0 : index
    %7 = vector.load %arg6[%c0_11, %c0_12] : memref<1x32xf32, #tpu.memory_space<vmem>>, vector<1x32xf32>
    %8 = vector.broadcast %7 : vector<1x32xf32> to vector<16x32xf32>
    %9 = arith.addf %6, %8 : vector<16x32xf32>
    %10 = math.tanh %9 : vector<16x32xf32>
    %11 = vector.shape_cast %10 : vector<16x32xf32> to vector<2x8x32xf32>
    %12 = vector.shape_cast %2 : vector<2x32xf32> to vector<2x1x32xf32>
    %13 = vector.broadcast %12 : vector<2x1x32xf32> to vector<2x8x32xf32>
    %14 = arith.mulf %11, %13 : vector<2x8x32xf32>
    %cst_13 = arith.constant dense<0.000000e+00> : vector<2x8xf32>
    %15 = vector.multi_reduction <add>, %14, %cst_13 [2] : vector<2x8x32xf32> to vector<2x8xf32>
    %cst_14 = arith.constant dense<0xFF800000> : vector<2xf32>
    %16 = vector.multi_reduction <maximumf>, %15, %cst_14 [1] : vector<2x8xf32> to vector<2xf32>
    %17 = vector.shape_cast %16 : vector<2xf32> to vector<2x1xf32>
    %18 = vector.broadcast %17 : vector<2x1xf32> to vector<2x8xf32>
    %19 = arith.subf %15, %18 : vector<2x8xf32>
    %20 = math.exp %19 : vector<2x8xf32>
    %cst_15 = arith.constant dense<0.000000e+00> : vector<2xf32>
    %21 = vector.multi_reduction <add>, %20, %cst_15 [1] : vector<2x8xf32> to vector<2xf32>
    %22 = vector.shape_cast %21 : vector<2xf32> to vector<2x1xf32>
    %23 = vector.broadcast %22 : vector<2x1xf32> to vector<2x8xf32>
    %24 = arith.divf %20, %23 : vector<2x8xf32>
    %25 = vector.shape_cast %24 : vector<2x8xf32> to vector<2x8x1xf32>
    %26 = vector.broadcast %25 : vector<2x8x1xf32> to vector<2x8x64xf32>
    %27 = arith.mulf %26, %1 : vector<2x8x64xf32>
    %cst_16 = arith.constant dense<0.000000e+00> : vector<2x64xf32>
    %28 = vector.multi_reduction <add>, %27, %cst_16 [1] : vector<2x8x64xf32> to vector<2x64xf32>
    %29 = vector.shape_cast %0 : vector<2x16x64xf32> to vector<32x64xf32>
    %c0_17 = arith.constant 0 : index
    %c0_18 = arith.constant 0 : index
    %30 = vector.load %arg7[%c0_17, %c0_18] : memref<64x32xf32, #tpu.memory_space<vmem>>, vector<64x32xf32>
    %cst_19 = arith.constant dense<0.000000e+00> : vector<32x32xf32>
    %31 = tpu.matmul %29, %30, %cst_19 {dimension_numbers = #tpu.dot_dimension_numbers<[1], [0], [0], [1], [0, 0, 1, 1], [], []>, precision = #tpu.contract_precision<fp32>} : vector<32x64xf32>, vector<64x32xf32>, vector<32x32xf32> -> vector<32x32xf32>
    %c0_20 = arith.constant 0 : index
    %c0_21 = arith.constant 0 : index
    %32 = vector.load %arg8[%c0_20, %c0_21] : memref<1x32xf32, #tpu.memory_space<vmem>>, vector<1x32xf32>
    %33 = vector.broadcast %32 : vector<1x32xf32> to vector<32x32xf32>
    %34 = arith.addf %31, %33 : vector<32x32xf32>
    %35 = vector.shape_cast %34 : vector<32x32xf32> to vector<2x16x32xf32>
    %c0_22 = arith.constant 0 : index
    %c0_23 = arith.constant 0 : index
    %36 = vector.load %arg9[%c0_22, %c0_23] : memref<64x32xf32, #tpu.memory_space<vmem>>, vector<64x32xf32>
    %cst_24 = arith.constant dense<0.000000e+00> : vector<2x32xf32>
    %37 = tpu.matmul %28, %36, %cst_24 {dimension_numbers = #tpu.dot_dimension_numbers<[1], [0], [0], [1], [0, 0, 1, 1], [], []>, precision = #tpu.contract_precision<fp32>} : vector<2x64xf32>, vector<64x32xf32>, vector<2x32xf32> -> vector<2x32xf32>
    %c0_25 = arith.constant 0 : index
    %c0_26 = arith.constant 0 : index
    %38 = vector.load %arg10[%c0_25, %c0_26] : memref<1x32xf32, #tpu.memory_space<vmem>>, vector<1x32xf32>
    %39 = vector.broadcast %38 : vector<1x32xf32> to vector<2x32xf32>
    %40 = arith.addf %37, %39 : vector<2x32xf32>
    %41 = vector.shape_cast %40 : vector<2x32xf32> to vector<2x1x32xf32>
    %42 = vector.broadcast %41 : vector<2x1x32xf32> to vector<2x16x32xf32>
    %43 = arith.addf %35, %42 : vector<2x16x32xf32>
    %44 = math.tanh %43 : vector<2x16x32xf32>
    %45 = vector.shape_cast %3 : vector<2x32xf32> to vector<2x1x32xf32>
    %46 = vector.broadcast %45 : vector<2x1x32xf32> to vector<2x16x32xf32>
    %47 = arith.mulf %44, %46 : vector<2x16x32xf32>
    %cst_27 = arith.constant dense<0.000000e+00> : vector<2x16xf32>
    %48 = vector.multi_reduction <add>, %47, %cst_27 [2] : vector<2x16x32xf32> to vector<2x16xf32>
    %cst_28 = arith.constant dense<0xFF800000> : vector<2xf32>
    %49 = vector.multi_reduction <maximumf>, %48, %cst_28 [1] : vector<2x16xf32> to vector<2xf32>
    %50 = vector.shape_cast %49 : vector<2xf32> to vector<2x1xf32>
    %51 = vector.broadcast %50 : vector<2x1xf32> to vector<2x16xf32>
    %52 = arith.subf %48, %51 : vector<2x16xf32>
    %53 = math.exp %52 : vector<2x16xf32>
    %cst_29 = arith.constant dense<0.000000e+00> : vector<2xf32>
    %54 = vector.multi_reduction <add>, %53, %cst_29 [1] : vector<2x16xf32> to vector<2xf32>
    %55 = vector.shape_cast %54 : vector<2xf32> to vector<2x1xf32>
    %56 = vector.broadcast %55 : vector<2x1xf32> to vector<2x16xf32>
    %57 = arith.divf %53, %56 : vector<2x16xf32>
    %58 = vector.shape_cast %57 : vector<2x16xf32> to vector<2x16x1xf32>
    %59 = vector.broadcast %58 : vector<2x16x1xf32> to vector<2x16x64xf32>
    %60 = arith.mulf %59, %0 : vector<2x16x64xf32>
    %cst_30 = arith.constant dense<0.000000e+00> : vector<2x64xf32>
    %61 = vector.multi_reduction <add>, %60, %cst_30 [1] : vector<2x16x64xf32> to vector<2x64xf32>
    %c0_31 = arith.constant 0 : index
    %c0_32 = arith.constant 0 : index
    %62 = vector.load %arg11[%c0_31, %c0_32] : memref<64x192xf32, #tpu.memory_space<vmem>>, vector<64x192xf32>
    %cst_33 = arith.constant dense<0.000000e+00> : vector<2x192xf32>
    %63 = tpu.matmul %28, %62, %cst_33 {dimension_numbers = #tpu.dot_dimension_numbers<[1], [0], [0], [1], [0, 0, 1, 1], [], []>, precision = #tpu.contract_precision<fp32>} : vector<2x64xf32>, vector<64x192xf32>, vector<2x192xf32> -> vector<2x192xf32>
    %c0_34 = arith.constant 0 : index
    %c0_35 = arith.constant 0 : index
    %64 = vector.load %arg13[%c0_34, %c0_35] : memref<1x192xf32, #tpu.memory_space<vmem>>, vector<1x192xf32>
    %65 = vector.broadcast %64 : vector<1x192xf32> to vector<2x192xf32>
    %66 = arith.addf %63, %65 : vector<2x192xf32>
    %c0_36 = arith.constant 0 : index
    %c0_37 = arith.constant 0 : index
    %67 = vector.load %arg12[%c0_36, %c0_37] : memref<64x192xf32, #tpu.memory_space<vmem>>, vector<64x192xf32>
    %cst_38 = arith.constant dense<0.000000e+00> : vector<2x192xf32>
    %68 = tpu.matmul %61, %67, %cst_38 {dimension_numbers = #tpu.dot_dimension_numbers<[1], [0], [0], [1], [0, 0, 1, 1], [], []>, precision = #tpu.contract_precision<fp32>} : vector<2x64xf32>, vector<64x192xf32>, vector<2x192xf32> -> vector<2x192xf32>
    %c0_39 = arith.constant 0 : index
    %c0_40 = arith.constant 0 : index
    %69 = vector.load %arg14[%c0_39, %c0_40] : memref<1x192xf32, #tpu.memory_space<vmem>>, vector<1x192xf32>
    %70 = vector.broadcast %69 : vector<1x192xf32> to vector<2x192xf32>
    %71 = arith.addf %68, %70 : vector<2x192xf32>
    %72 = vector.extract_strided_slice %66 {offsets = [0, 0], sizes = [2, 64], strides = [1, 1]} : vector<2x192xf32> to vector<2x64xf32>
    %73 = vector.extract_strided_slice %71 {offsets = [0, 0], sizes = [2, 64], strides = [1, 1]} : vector<2x192xf32> to vector<2x64xf32>
    %74 = arith.addf %72, %73 : vector<2x64xf32>
    %75 = arith.negf %74 : vector<2x64xf32>
    %76 = math.exp %75 : vector<2x64xf32>
    %cst_41 = arith.constant 1.000000e+00 : f32
    %77 = vector.broadcast %cst_41 : f32 to vector<2x64xf32>
    %78 = arith.addf %77, %76 : vector<2x64xf32>
    %79 = arith.divf %77, %78 : vector<2x64xf32>
    %80 = vector.extract_strided_slice %66 {offsets = [0, 64], sizes = [2, 64], strides = [1, 1]} : vector<2x192xf32> to vector<2x64xf32>
    %81 = vector.extract_strided_slice %71 {offsets = [0, 64], sizes = [2, 64], strides = [1, 1]} : vector<2x192xf32> to vector<2x64xf32>
    %82 = arith.addf %80, %81 : vector<2x64xf32>
    %83 = arith.negf %82 : vector<2x64xf32>
    %84 = math.exp %83 : vector<2x64xf32>
    %cst_42 = arith.constant 1.000000e+00 : f32
    %85 = vector.broadcast %cst_42 : f32 to vector<2x64xf32>
    %86 = arith.addf %85, %84 : vector<2x64xf32>
    %87 = arith.divf %85, %86 : vector<2x64xf32>
    %88 = vector.extract_strided_slice %66 {offsets = [0, 128], sizes = [2, 64], strides = [1, 1]} : vector<2x192xf32> to vector<2x64xf32>
    %89 = vector.extract_strided_slice %71 {offsets = [0, 128], sizes = [2, 64], strides = [1, 1]} : vector<2x192xf32> to vector<2x64xf32>
    %90 = arith.mulf %79, %89 : vector<2x64xf32>
    %91 = arith.addf %88, %90 : vector<2x64xf32>
    %92 = math.tanh %91 : vector<2x64xf32>
    %cst_43 = arith.constant 1.000000e+00 : f32
    %93 = vector.broadcast %cst_43 : f32 to vector<2x64xf32>
    %94 = arith.subf %93, %87 : vector<2x64xf32>
    %95 = arith.mulf %94, %92 : vector<2x64xf32>
    %96 = arith.mulf %87, %61 : vector<2x64xf32>
    %97 = arith.addf %95, %96 : vector<2x64xf32>
    %c0_44 = arith.constant 0 : index
    %c0_45 = arith.constant 0 : index
    %98 = vector.load %arg9[%c0_44, %c0_45] : memref<64x32xf32, #tpu.memory_space<vmem>>, vector<64x32xf32>
    %cst_46 = arith.constant dense<0.000000e+00> : vector<2x32xf32>
    %99 = tpu.matmul %97, %98, %cst_46 {dimension_numbers = #tpu.dot_dimension_numbers<[1], [0], [0], [1], [0, 0, 1, 1], [], []>, precision = #tpu.contract_precision<fp32>} : vector<2x64xf32>, vector<64x32xf32>, vector<2x32xf32> -> vector<2x32xf32>
    %c0_47 = arith.constant 0 : index
    %c0_48 = arith.constant 0 : index
    %100 = vector.load %arg10[%c0_47, %c0_48] : memref<1x32xf32, #tpu.memory_space<vmem>>, vector<1x32xf32>
    %101 = vector.broadcast %100 : vector<1x32xf32> to vector<2x32xf32>
    %102 = arith.addf %99, %101 : vector<2x32xf32>
    %103 = vector.shape_cast %102 : vector<2x32xf32> to vector<2x1x32xf32>
    %104 = vector.broadcast %103 : vector<2x1x32xf32> to vector<2x16x32xf32>
    %105 = arith.addf %35, %104 : vector<2x16x32xf32>
    %106 = math.tanh %105 : vector<2x16x32xf32>
    %107 = vector.shape_cast %3 : vector<2x32xf32> to vector<2x1x32xf32>
    %108 = vector.broadcast %107 : vector<2x1x32xf32> to vector<2x16x32xf32>
    %109 = arith.mulf %106, %108 : vector<2x16x32xf32>
    %cst_49 = arith.constant dense<0.000000e+00> : vector<2x16xf32>
    %110 = vector.multi_reduction <add>, %109, %cst_49 [2] : vector<2x16x32xf32> to vector<2x16xf32>
    %cst_50 = arith.constant dense<0xFF800000> : vector<2xf32>
    %111 = vector.multi_reduction <maximumf>, %110, %cst_50 [1] : vector<2x16xf32> to vector<2xf32>
    %112 = vector.shape_cast %111 : vector<2xf32> to vector<2x1xf32>
    %113 = vector.broadcast %112 : vector<2x1xf32> to vector<2x16xf32>
    %114 = arith.subf %110, %113 : vector<2x16xf32>
    %115 = math.exp %114 : vector<2x16xf32>
    %cst_51 = arith.constant dense<0.000000e+00> : vector<2xf32>
    %116 = vector.multi_reduction <add>, %115, %cst_51 [1] : vector<2x16xf32> to vector<2xf32>
    %117 = vector.shape_cast %116 : vector<2xf32> to vector<2x1xf32>
    %118 = vector.broadcast %117 : vector<2x1xf32> to vector<2x16xf32>
    %119 = arith.divf %115, %118 : vector<2x16xf32>
    %120 = tpu.concatenate %57, %119 in 1 : vector<2x16xf32>, vector<2x16xf32> -> vector<2x32xf32>
    %c0_52 = arith.constant 0 : index
    %c0_53 = arith.constant 0 : index
    %121 = vector.load %arg15[%c0_52, %c0_53] : memref<2x32xf32, #tpu.memory_space<vmem>>, vector<2x32xf32>
    tpu.vector_store %arg15[%c0_52, %c0_53], %120 {strides = array<i32>} : memref<2x32xf32, #tpu.memory_space<vmem>>, vector<2x32xf32>,
    return
  }
  func.func @transform_0(%arg0: i32) -> (i32, i32, i32) {
    %c0_i32 = arith.constant 0 : i32
    %c0_i32_0 = arith.constant 0 : i32
    %c0_i32_1 = arith.constant 0 : i32
    return %arg0, %c0_i32, %c0_i32_0 : i32, i32, i32
  }
  func.func @transform_1(%arg0: i32) -> (i32, i32, i32) {
    %c0_i32 = arith.constant 0 : i32
    %c0_i32_0 = arith.constant 0 : i32
    %c0_i32_1 = arith.constant 0 : i32
    return %arg0, %c0_i32, %c0_i32_0 : i32, i32, i32
  }
  func.func @transform_2(%arg0: i32) -> (i32, i32) {
    %c0_i32 = arith.constant 0 : i32
    %c0_i32_0 = arith.constant 0 : i32
    return %arg0, %c0_i32 : i32, i32
  }
  func.func @transform_3(%arg0: i32) -> (i32, i32) {
    %c0_i32 = arith.constant 0 : i32
    %c0_i32_0 = arith.constant 0 : i32
    return %arg0, %c0_i32 : i32, i32
  }
  func.func @transform_4(%arg0: i32) -> (i32, i32) {
    %c0_i32 = arith.constant 0 : i32
    %c0_i32_0 = arith.constant 0 : i32
    %c0_i32_1 = arith.constant 0 : i32
    return %c0_i32, %c0_i32_0 : i32, i32
  }
  func.func @transform_5(%arg0: i32) -> (i32, i32) {
    %c0_i32 = arith.constant 0 : i32
    %c0_i32_0 = arith.constant 0 : i32
    %c0_i32_1 = arith.constant 0 : i32
    return %c0_i32, %c0_i32_0 : i32, i32
  }
  func.func @transform_6(%arg0: i32) -> (i32, i32) {
    %c0_i32 = arith.constant 0 : i32
    %c0_i32_0 = arith.constant 0 : i32
    %c0_i32_1 = arith.constant 0 : i32
    return %c0_i32, %c0_i32_0 : i32, i32
  }
  func.func @transform_7(%arg0: i32) -> (i32, i32) {
    %c0_i32 = arith.constant 0 : i32
    %c0_i32_0 = arith.constant 0 : i32
    %c0_i32_1 = arith.constant 0 : i32
    return %c0_i32, %c0_i32_0 : i32, i32
  }
  func.func @transform_8(%arg0: i32) -> (i32, i32) {
    %c0_i32 = arith.constant 0 : i32
    %c0_i32_0 = arith.constant 0 : i32
    %c0_i32_1 = arith.constant 0 : i32
    return %c0_i32, %c0_i32_0 : i32, i32
  }
  func.func @transform_9(%arg0: i32) -> (i32, i32) {
    %c0_i32 = arith.constant 0 : i32
    %c0_i32_0 = arith.constant 0 : i32
    %c0_i32_1 = arith.constant 0 : i32
    return %c0_i32, %c0_i32_0 : i32, i32
  }
  func.func @transform_10(%arg0: i32) -> (i32, i32) {
    %c0_i32 = arith.constant 0 : i32
    %c0_i32_0 = arith.constant 0 : i32
    %c0_i32_1 = arith.constant 0 : i32
    return %c0_i32, %c0_i32_0 : i32, i32
  }
  func.func @transform_11(%arg0: i32) -> (i32, i32) {
    %c0_i32 = arith.constant 0 : i32
    %c0_i32_0 = arith.constant 0 : i32
    %c0_i32_1 = arith.constant 0 : i32
    return %c0_i32, %c0_i32_0 : i32, i32
  }
  func.func @transform_12(%arg0: i32) -> (i32, i32) {
    %c0_i32 = arith.constant 0 : i32
    %c0_i32_0 = arith.constant 0 : i32
    %c0_i32_1 = arith.constant 0 : i32
    return %c0_i32, %c0_i32_0 : i32, i32
  }
  func.func @transform_13(%arg0: i32) -> (i32, i32) {
    %c0_i32 = arith.constant 0 : i32
    %c0_i32_0 = arith.constant 0 : i32
    %c0_i32_1 = arith.constant 0 : i32
    return %c0_i32, %c0_i32_0 : i32, i32
  }
  func.func @transform_14(%arg0: i32) -> (i32, i32) {
    %c0_i32 = arith.constant 0 : i32
    %c0_i32_0 = arith.constant 0 : i32
    return %arg0, %c0_i32 : i32, i32
  }
}

</mosaic_0001>

<llo_original>
// kernel: tpu_custom_call.1
$region0: #{tpu_custom_call.1}
  #allocation0 [shape = 'u32[]', space=smem, size = 0x4, offset = 0x4, fixed_abs, tag = 'smem constant byte address 0x4 - core index']
  #allocation1 [shape = 'u32[144,128]{1,0:T(1,128)}', space=vmem, size = 0x12000, scoped, tag = 'internal scratch']
  %s0 = inlined_call_operand.hbm [shape: f32[2,16,64], index: 0, kind: input, shape index: {}]
  %s1 = inlined_call_operand.hbm [shape: f32[2,8,64], index: 1, kind: input, shape index: {}]
  %s2 = inlined_call_operand.vmem [shape: f32[2,32], index: 2, kind: input, shape index: {}]
  %s3 = inlined_call_operand.vmem [shape: f32[2,32], index: 3, kind: input, shape index: {}]
  %s4 = inlined_call_operand.vmem [shape: f32[64,32], index: 4, kind: input, shape index: {}]
  %s5 = inlined_call_operand.vmem [shape: f32[1,32], index: 5, kind: input, shape index: {}]
  %s6 = inlined_call_operand.vmem [shape: f32[64,32], index: 6, kind: input, shape index: {}]
  %s7 = inlined_call_operand.vmem [shape: f32[1,32], index: 7, kind: input, shape index: {}]
  %s8 = inlined_call_operand.vmem [shape: f32[64,32], index: 8, kind: input, shape index: {}]
  %s9 = inlined_call_operand.vmem [shape: f32[1,32], index: 9, kind: input, shape index: {}]
  %s10 = inlined_call_operand.vmem [shape: f32[64,192], index: 10, kind: input, shape index: {}]
  %s11 = inlined_call_operand.vmem [shape: f32[64,192], index: 11, kind: input, shape index: {}]
  %s12 = inlined_call_operand.vmem [shape: f32[1,192], index: 12, kind: input, shape index: {}]
  %s13 = inlined_call_operand.vmem [shape: f32[1,192], index: 13, kind: input, shape index: {}]
  %s14 = inlined_call_operand.hbm [shape: f32[2,32], index: 14, kind: output, shape index: {}]
  %s15 = sld [smem:[#allocation0]]
  $region74: #{tpu_custom_call.1} parent=0
    _
  %s17 = ssub.s32 1, %s15
  %s18 = scalar_select 0, %s17, %s15
  $region1: #{tpu_custom_call.1} parent=0
    #allocation2 [shape = 'u8[16384]{0}', space=vmem, size = 0x4000, scoped, tag = 'input window, operand 0, single buffered']
    #allocation3 [shape = 's32[1]{0}', space=sflag, size = 0x4, scoped, tag = 'scoped memory for tpu_custom_call.1']
    #allocation4 [shape = 's32[1]{0}', space=sflag, size = 0x4, scoped, tag = 'scoped memory for tpu_custom_call.1']
    #allocation5 [shape = 'u8[8192]{0}', space=vmem, size = 0x2000, scoped, tag = 'input window, operand 1, single buffered']
    #allocation6 [shape = 's32[1]{0}', space=sflag, size = 0x4, scoped, tag = 'scoped memory for tpu_custom_call.1']
    #allocation7 [shape = 'u8[1024]{0}', space=vmem, size = 0x400, scoped, tag = 'output window, operand 0, single buffered']
    %19 = vsyncpa [#allocation3], 0
    %20 = vsyncpa [#allocation6], 0
    %21 = vsyncpa [#allocation4], 0
    // Predicated region
    $region2: #{tpu_custom_call.1} parent=1 // pred_check
      _
    $region3: #{tpu_custom_call.1} parent=1 // pred_check_branch
      %23 = sbr.rel (0) target = $region5
    $region4: #{tpu_custom_call.1} parent=1 // pred_region
      %s25 = ssub.s32 512, 512
      %26 = vsyncadd [#allocation3], %s25
      %s27 = sshll.u32 [#allocation2], 4
      %s28 = int_to_ptr.vmem [resolvable:$true] %s27
      %33 = dma.hbm_to_vmem [thread:$0]  %s0, 512, %s28, [#allocation3], 128, 128, 8
    $region5: #{tpu_custom_call.1} parent=1 // pred_fallthru
      _
    // Predicated region
    $region6: #{tpu_custom_call.1} parent=1 // pred_check
      _
    $region7: #{tpu_custom_call.1} parent=1 // pred_check_branch
      %35 = sbr.rel (0) target = $region9
    $region8: #{tpu_custom_call.1} parent=1 // pred_region
      %s37 = ssub.s32 256, 256
      %38 = vsyncadd [#allocation6], %s37
      %s39 = sshll.u32 [#allocation5], 4
      %s40 = int_to_ptr.vmem [resolvable:$true] %s39
      %45 = dma.hbm_to_vmem [thread:$0]  %s1, 256, %s40, [#allocation6], 128, 128, 8
    $region9: #{tpu_custom_call.1} parent=1 // pred_fallthru
      _
    // Predicated region
    $region10: #{tpu_custom_call.1} parent=1 // pred_check
      _
    $region11: #{tpu_custom_call.1} parent=1 // pred_check_branch
      %47 = sbr.rel (0) target = $region13
    $region12: #{tpu_custom_call.1} parent=1 // pred_region
      _
    $region13: #{tpu_custom_call.1} parent=1 // pred_fallthru
      _
    // Predicated region
    $region14: #{tpu_custom_call.1} parent=1 // pred_check
      _
    $region15: #{tpu_custom_call.1} parent=1 // pred_check_branch
      %49 = sbr.rel (0) target = $region17
    $region16: #{tpu_custom_call.1} parent=1 // pred_region
      _
    $region17: #{tpu_custom_call.1} parent=1 // pred_fallthru
      _
    // Predicated region
    $region18: #{tpu_custom_call.1} parent=1 // pred_check
      _
    $region19: #{tpu_custom_call.1} parent=1 // pred_check_branch
      %51 = sbr.rel (0) target = $region21
    $region20: #{tpu_custom_call.1} parent=1 // pred_region
      _
    $region21: #{tpu_custom_call.1} parent=1 // pred_fallthru
      _
    // Predicated region
    $region22: #{tpu_custom_call.1} parent=1 // pred_check
      _
    $region23: #{tpu_custom_call.1} parent=1 // pred_check_branch
      %53 = sbr.rel (0) target = $region25
    $region24: #{tpu_custom_call.1} parent=1 // pred_region
      _
    $region25: #{tpu_custom_call.1} parent=1 // pred_fallthru
      _
    // Predicated region
    $region26: #{tpu_custom_call.1} parent=1 // pred_check
      _
    $region27: #{tpu_custom_call.1} parent=1 // pred_check_branch
      %55 = sbr.rel (0) target = $region29
    $region28: #{tpu_custom_call.1} parent=1 // pred_region
      _
    $region29: #{tpu_custom_call.1} parent=1 // pred_fallthru
      _
    // Predicated region
    $region30: #{tpu_custom_call.1} parent=1 // pred_check
      _
    $region31: #{tpu_custom_call.1} parent=1 // pred_check_branch
      %57 = sbr.rel (0) target = $region33
    $region32: #{tpu_custom_call.1} parent=1 // pred_region
      _
    $region33: #{tpu_custom_call.1} parent=1 // pred_fallthru
      _
    // Predicated region
    $region34: #{tpu_custom_call.1} parent=1 // pred_check
      _
    $region35: #{tpu_custom_call.1} parent=1 // pred_check_branch
      %59 = sbr.rel (0) target = $region37
    $region36: #{tpu_custom_call.1} parent=1 // pred_region
      _
    $region37: #{tpu_custom_call.1} parent=1 // pred_fallthru
      _
    // Predicated region
    $region38: #{tpu_custom_call.1} parent=1 // pred_check
      _
    $region39: #{tpu_custom_call.1} parent=1 // pred_check_branch
      %61 = sbr.rel (0) target = $region41
    $region40: #{tpu_custom_call.1} parent=1 // pred_region
      _
    $region41: #{tpu_custom_call.1} parent=1 // pred_fallthru
      _
    // Predicated region
    $region42: #{tpu_custom_call.1} parent=1 // pred_check
      _
    $region43: #{tpu_custom_call.1} parent=1 // pred_check_branch
      %63 = sbr.rel (0) target = $region45
    $region44: #{tpu_custom_call.1} parent=1 // pred_region
      _
    $region45: #{tpu_custom_call.1} parent=1 // pred_fallthru
      _
    // Predicated region
    $region46: #{tpu_custom_call.1} parent=1 // pred_check
      _
    $region47: #{tpu_custom_call.1} parent=1 // pred_check_branch
      %65 = sbr.rel (0) target = $region49
    $region48: #{tpu_custom_call.1} parent=1 // pred_region
      _
    $region49: #{tpu_custom_call.1} parent=1 // pred_fallthru
      _
    // Predicated region
    $region50: #{tpu_custom_call.1} parent=1 // pred_check
      _
    $region51: #{tpu_custom_call.1} parent=1 // pred_check_branch
      %67 = sbr.rel (0) target = $region53
    $region52: #{tpu_custom_call.1} parent=1 // pred_region
      _
    $region53: #{tpu_custom_call.1} parent=1 // pred_fallthru
      _
    // Predicated region
    $region54: #{tpu_custom_call.1} parent=1 // pred_check
      _
    $region55: #{tpu_custom_call.1} parent=1 // pred_check_branch
      %69 = sbr.rel (0) target = $region57
    $region56: #{tpu_custom_call.1} parent=1 // pred_region
      _
    $region57: #{tpu_custom_call.1} parent=1 // pred_fallthru
      _
    // Predicated region
    $region58: #{tpu_custom_call.1} parent=1 // pred_check
      _
    $region59: #{tpu_custom_call.1} parent=1 // pred_check_branch
      %71 = sbr.rel (0) target = $region61
    $region60: #{tpu_custom_call.1} parent=1 // pred_region
      %72 = dma.done [#allocation3], 512
    $region61: #{tpu_custom_call.1} parent=1 // pred_fallthru
      _
    // Predicated region
    $region62: #{tpu_custom_call.1} parent=1 // pred_check
      _
    $region63: #{tpu_custom_call.1} parent=1 // pred_check_branch
      %74 = sbr.rel (0) target = $region65
    $region64: #{tpu_custom_call.1} parent=1 // pred_region
      %75 = dma.done [#allocation6], 256
    $region65: #{tpu_custom_call.1} parent=1 // pred_fallthru
      _
    %v76 = vld [vmem:[#allocation2] sm:$0xff]
    %v77 = vld [vmem:[#allocation2 + $0x8] sm:$0xff]
    %v78 = vld [vmem:[#allocation2 + $0x10] sm:$0xff]
    %v79 = vld [vmem:[#allocation2 + $0x18] sm:$0xff]
    %v80 = vld [vmem:[#allocation5] sm:$0xff]
    %v81 = vld [vmem:[#allocation5 + $0x8] sm:$0xff]
    %v82 = vld [vmem:[%s2] sm:$0x3]
    %v83 = vld [vmem:[%s3] sm:$0x3]
    %v84 = vld [vmem:[%s4] sm:$0xff]
    %v85 = vld [vmem:[%s4 + $0x8] sm:$0xff]
    %v86 = vld [vmem:[%s4 + $0x10] sm:$0xff]
    %v87 = vld [vmem:[%s4 + $0x18] sm:$0xff]
    %v88 = vld [vmem:[%s4 + $0x20] sm:$0xff]
    %v89 = vld [vmem:[%s4 + $0x28] sm:$0xff]
    %v90 = vld [vmem:[%s4 + $0x30] sm:$0xff]
    %v91 = vld [vmem:[%s4 + $0x38] sm:$0xff]
    %v92 = vld [vmem:[%s5] sm:$0x1]
    %v94 = vlaneseq
    %v95 = vshrl.u32 %v94, 7
    %v96 = vsub.s32 0, %v95
    %v97 = vrot.slane %v92, %v96
    %vm99 = vcmask 523264
    %v101 = vsel %vm99, %v80, 0
    %v104 = vsel %vm99, %v81, 0
    %106 = vmatprep.subr.mxu0 0.0
    %v107 = vand.u32 %v84, 4294901760
    %108 = vmatpush1.msra.mxu0 %v107
    %109 = vmatprep.subr.mxu0 0.0
    %v110 = vand.u32 %v85, 4294901760
    %111 = vmatpush1.msra.mxu0 %v110
    %112 = vmatprep.subr.mxu0 0.0
    %v113 = vand.u32 %v86, 4294901760
    %114 = vmatpush1.msra.mxu0 %v113
    %115 = vmatprep.subr.mxu0 0.0
    %v116 = vand.u32 %v87, 4294901760
    %117 = vmatpush1.msra.mxu0 %v116
    %118 = vmatprep.subr.mxu0 0.0
    %v119 = vand.u32 %v88, 4294901760
    %120 = vmatpush1.msra.mxu0 %v119
    %121 = vmatprep.subr.mxu0 0.0
    %v122 = vand.u32 %v89, 4294901760
    %123 = vmatpush1.msra.mxu0 %v122
    %124 = vmatprep.subr.mxu0 0.0
    %v125 = vand.u32 %v90, 4294901760
    %126 = vmatpush1.msra.mxu0 %v125
    %127 = vmatprep.subr.mxu0 0.0
    %v128 = vand.u32 %v91, 4294901760
    %129 = vmatpush1.msra.mxu0 %v128
    %130 = vmatprep.subr.mxu0 0.0
    %131 = vmatpush1.msra.mxu0 0.0
    %132 = vmatprep.subr.mxu0 0.0
    %133 = vmatpush1.msra.mxu0 0.0
    %134 = vmatprep.subr.mxu0 0.0
    %135 = vmatpush1.msra.mxu0 0.0
    %136 = vmatprep.subr.mxu0 0.0
    %137 = vmatpush1.msra.mxu0 0.0
    %138 = vmatprep.subr.mxu0 0.0
    %139 = vmatpush1.msra.mxu0 0.0
    %140 = vmatprep.subr.mxu0 0.0
    %141 = vmatpush1.msra.mxu0 0.0
    %142 = vmatprep.subr.mxu0 0.0
    %143 = vmatpush1.msra.mxu0 0.0
    %144 = vmatprep.subr.mxu0 0.0
    %145 = vmatpush1.msra.mxu0 0.0
    %146 = vmatprep.subr.mxu0 0.0
    %147 = vmatpush1.msra.mxu0 0.0
    %148 = vmatprep.subr.mxu0 0.0
    %149 = vmatpush1.msra.mxu0 0.0
    %150 = vmatprep.subr.mxu0 0.0
    %151 = vmatpush1.msra.mxu0 0.0
    %152 = vmatprep.subr.mxu0 0.0
    %153 = vmatpush1.msra.mxu0 0.0
    %154 = vmatprep.subr.mxu0 0.0
    %155 = vmatpush1.msra.mxu0 0.0
    %156 = vmatprep.subr.mxu0 0.0
    %157 = vmatpush1.msra.mxu0 0.0
    %158 = vmatprep.subr.mxu0 0.0
    %159 = vmatpush1.msra.mxu0 0.0
    %160 = vmatprep.subr.mxu0 0.0
    %161 = vmatpush1.msra.mxu0 0.0
    %162 = vmatprep.subr.mxu0 0.0
    %163 = vmatpush1.msra.mxu0 0.0
    %164 = vmatprep.subr.mxu0 0.0
    %165 = vmatpush1.msra.mxu0 0.0
    %166 = vmatprep.subr.mxu0 0.0
    %167 = vmatpush1.msra.mxu0 0.0
    %168 = vmatprep.subr.mxu0 0.0
    %169 = vmatpush1.msra.mxu0 0.0
    %170 = vmatprep.subr.mxu0 0.0
    %171 = vmatpush1.msra.mxu0 0.0
    %172 = vmatprep.subr.mxu0 0.0
    %173 = vmatpush1.msra.mxu0 0.0
    %174 = vmatprep.subr.mxu0 0.0
    %175 = vmatpush1.msra.mxu0 0.0
    %176 = vmatprep.subr.mxu0 0.0
    %177 = vmatpush1.msra.mxu0 0.0
    %178 = vmatprep.mubr.f32.mxu0 0.0
    %v179 = vand.u32 %v101, 4294901760
    %v180 = vsub.f32 %v101, %v179
    %v181 = vand.u32 %v180, 4294901760
    %v182 = vsub.f32 %v180, %v181
    %v183 = vand.u32 %v182, 4294901760
    %184 = vmatmul.mubr.f32.gmra.mrb[0].mxu0 %v183
    %v185 = vpop.f32.mrb[0].mxu0
    %v186 = vadd.f32 %v97, %v185
    %v187 = vpop.f32.mrb[0].mxu0
    %188 = vmatprep.mubr.f32.mxu0 0.0
    %v189 = vand.u32 %v104, 4294901760
    %v190 = vsub.f32 %v104, %v189
    %v191 = vand.u32 %v190, 4294901760
    %v192 = vsub.f32 %v190, %v191
    %v193 = vand.u32 %v192, 4294901760
    %194 = vmatmul.mubr.f32.gmra.mrb[0].mxu0 %v193
    %v195 = vpop.f32.mrb[0].mxu0
    %v196 = vadd.f32 %v97, %v195
    %v197 = vpop.f32.mrb[0].mxu0
    %198 = vdwg.mxu0
    %199 = vmatprep.subr.mxu0 0.0
    %v200 = vand.u32 %v84, 4294901760
    %v201 = vsub.f32 %v84, %v200
    %v202 = vand.u32 %v201, 4294901760
    %v203 = vsub.f32 %v201, %v202
    %v204 = vand.u32 %v203, 4294901760
    %205 = vmatpush1.msra.mxu0 %v204
    %206 = vmatprep.subr.mxu0 0.0
    %v207 = vand.u32 %v85, 4294901760
    %v208 = vsub.f32 %v85, %v207
    %v209 = vand.u32 %v208, 4294901760
    %v210 = vsub.f32 %v208, %v209
    %v211 = vand.u32 %v210, 4294901760
    %212 = vmatpush1.msra.mxu0 %v211
    %213 = vmatprep.subr.mxu0 0.0
    %v214 = vand.u32 %v86, 4294901760
    %v215 = vsub.f32 %v86, %v214
    %v216 = vand.u32 %v215, 4294901760
    %v217 = vsub.f32 %v215, %v216
    %v218 = vand.u32 %v217, 4294901760
    %219 = vmatpush1.msra.mxu0 %v218
    %220 = vmatprep.subr.mxu0 0.0
    %v221 = vand.u32 %v87, 4294901760
    %v222 = vsub.f32 %v87, %v221
    %v223 = vand.u32 %v222, 4294901760
    %v224 = vsub.f32 %v222, %v223
    %v225 = vand.u32 %v224, 4294901760
    %226 = vmatpush1.msra.mxu0 %v225
    %227 = vmatprep.subr.mxu0 0.0
    %v228 = vand.u32 %v88, 4294901760
    %v229 = vsub.f32 %v88, %v228
    %v230 = vand.u32 %v229, 4294901760
    %v231 = vsub.f32 %v229, %v230
    %v232 = vand.u32 %v231, 4294901760
    %233 = vmatpush1.msra.mxu0 %v232
    %234 = vmatprep.subr.mxu0 0.0
    %v235 = vand.u32 %v89, 4294901760
    %v236 = vsub.f32 %v89, %v235
    %v237 = vand.u32 %v236, 4294901760
    %v238 = vsub.f32 %v236, %v237
    %v239 = vand.u32 %v238, 4294901760
    %240 = vmatpush1.msra.mxu0 %v239
    %241 = vmatprep.subr.mxu0 0.0
    %v242 = vand.u32 %v90, 4294901760
    %v243 = vsub.f32 %v90, %v242
    %v244 = vand.u32 %v243, 4294901760
    %v245 = vsub.f32 %v243, %v244
    %v246 = vand.u32 %v245, 4294901760
    %247 = vmatpush1.msra.mxu0 %v246
    %248 = vmatprep.subr.mxu0 0.0
    %v249 = vand.u32 %v91, 4294901760
    %v250 = vsub.f32 %v91, %v249
    %v251 = vand.u32 %v250, 4294901760
    %v252 = vsub.f32 %v250, %v251
    %v253 = vand.u32 %v252, 4294901760
    %254 = vmatpush1.msra.mxu0 %v253
    %255 = vmatprep.subr.mxu0 0.0
    %256 = vmatpush1.msra.mxu0 0.0
    %257 = vmatprep.subr.mxu0 0.0
    %258 = vmatpush1.msra.mxu0 0.0
    %259 = vmatprep.subr.mxu0 0.0
    %260 = vmatpush1.msra.mxu0 0.0
    %261 = vmatprep.subr.mxu0 0.0
    %262 = vmatpush1.msra.mxu0 0.0
    %263 = vmatprep.subr.mxu0 0.0
    %264 = vmatpush1.msra.mxu0 0.0
    %265 = vmatprep.subr.mxu0 0.0
    %266 = vmatpush1.msra.mxu0 0.0
    %267 = vmatprep.subr.mxu0 0.0
    %268 = vmatpush1.msra.mxu0 0.0
    %269 = vmatprep.subr.mxu0 0.0
    %270 = vmatpush1.msra.mxu0 0.0
    %271 = vmatprep.subr.mxu0 0.0
    %272 = vmatpush1.msra.mxu0 0.0
    %273 = vmatprep.subr.mxu0 0.0
    %274 = vmatpush1.msra.mxu0 0.0
    %275 = vmatprep.subr.mxu0 0.0
    %276 = vmatpush1.msra.mxu0 0.0
    %277 = vmatprep.subr.mxu0 0.0
    %278 = vmatpush1.msra.mxu0 0.0
    %279 = vmatprep.subr.mxu0 0.0
    %280 = vmatpush1.msra.mxu0 0.0
    %281 = vmatprep.subr.mxu0 0.0
    %282 = vmatpush1.msra.mxu0 0.0
    %283 = vmatprep.subr.mxu0 0.0
    %284 = vmatpush1.msra.mxu0 0.0
    %285 = vmatprep.subr.mxu0 0.0
    %286 = vmatpush1.msra.mxu0 0.0
    %287 = vmatprep.subr.mxu0 0.0
    %288 = vmatpush1.msra.mxu0 0.0
    %289 = vmatprep.subr.mxu0 0.0
    %290 = vmatpush1.msra.mxu0 0.0
    %291 = vmatprep.subr.mxu0 0.0
    %292 = vmatpush1.msra.mxu0 0.0
    %293 = vmatprep.subr.mxu0 0.0
    %294 = vmatpush1.msra.mxu0 0.0
    %295 = vmatprep.subr.mxu0 0.0
    %296 = vmatpush1.msra.mxu0 0.0
    %297 = vmatprep.subr.mxu0 0.0
    %298 = vmatpush1.msra.mxu0 0.0
    %299 = vmatprep.subr.mxu0 0.0
    %300 = vmatpush1.msra.mxu0 0.0
    %301 = vmatprep.subr.mxu0 0.0
    %302 = vmatpush1.msra.mxu0 0.0
    %303 = vmatprep.mubr.f32.mxu0 0.0
    %v304 = vand.u32 %v101, 4294901760
    %305 = vmatmul.mubr.f32.gmra.mrb[0].mxu0 %v304
    %v306 = vpop.f32.mrb[0].mxu0
    %v307 = vadd.f32 %v186, %v306
    %v308 = vpop.f32.mrb[0].mxu0
    %309 = vmatprep.mubr.f32.mxu0 0.0
    %v310 = vand.u32 %v104, 4294901760
    %311 = vmatmul.mubr.f32.gmra.mrb[0].mxu0 %v310
    %v312 = vpop.f32.mrb[0].mxu0
    %v313 = vadd.f32 %v196, %v312
    %v314 = vpop.f32.mrb[0].mxu0
    %315 = vdwg.mxu0
    %316 = vmatprep.subr.mxu0 0.0
    %v317 = vand.u32 %v84, 4294901760
    %v318 = vsub.f32 %v84, %v317
    %319 = vmatpush1.msra.mxu0 %v318
    %320 = vmatprep.subr.mxu0 0.0
    %v321 = vand.u32 %v85, 4294901760
    %v322 = vsub.f32 %v85, %v321
    %323 = vmatpush1.msra.mxu0 %v322
    %324 = vmatprep.subr.mxu0 0.0
    %v325 = vand.u32 %v86, 4294901760
    %v326 = vsub.f32 %v86, %v325
    %327 = vmatpush1.msra.mxu0 %v326
    %328 = vmatprep.subr.mxu0 0.0
    %v329 = vand.u32 %v87, 4294901760
    %v330 = vsub.f32 %v87, %v329
    %331 = vmatpush1.msra.mxu0 %v330
    %332 = vmatprep.subr.mxu0 0.0
    %v333 = vand.u32 %v88, 4294901760
    %v334 = vsub.f32 %v88, %v333
    %335 = vmatpush1.msra.mxu0 %v334
    %336 = vmatprep.subr.mxu0 0.0
    %v337 = vand.u32 %v89, 4294901760
    %v338 = vsub.f32 %v89, %v337
    %339 = vmatpush1.msra.mxu0 %v338
    %340 = vmatprep.subr.mxu0 0.0
    %v341 = vand.u32 %v90, 4294901760
    %v342 = vsub.f32 %v90, %v341
    %343 = vmatpush1.msra.mxu0 %v342
    %344 = vmatprep.subr.mxu0 0.0
    %v345 = vand.u32 %v91, 4294901760
    %v346 = vsub.f32 %v91, %v345
    %347 = vmatpush1.msra.mxu0 %v346
    %348 = vmatprep.subr.mxu0 0.0
    %349 = vmatpush1.msra.mxu0 0.0
    %350 = vmatprep.subr.mxu0 0.0
    %351 = vmatpush1.msra.mxu0 0.0
    %352 = vmatprep.subr.mxu0 0.0
    %353 = vmatpush1.msra.mxu0 0.0
    %354 = vmatprep.subr.mxu0 0.0
    %355 = vmatpush1.msra.mxu0 0.0
    %356 = vmatprep.subr.mxu0 0.0
    %357 = vmatpush1.msra.mxu0 0.0
    %358 = vmatprep.subr.mxu0 0.0
    %359 = vmatpush1.msra.mxu0 0.0
    %360 = vmatprep.subr.mxu0 0.0
    %361 = vmatpush1.msra.mxu0 0.0
    %362 = vmatprep.subr.mxu0 0.0
    %363 = vmatpush1.msra.mxu0 0.0
    %364 = vmatprep.subr.mxu0 0.0
    %365 = vmatpush1.msra.mxu0 0.0
    %366 = vmatprep.subr.mxu0 0.0
    %367 = vmatpush1.msra.mxu0 0.0
    %368 = vmatprep.subr.mxu0 0.0
    %369 = vmatpush1.msra.mxu0 0.0
    %370 = vmatprep.subr.mxu0 0.0
    %371 = vmatpush1.msra.mxu0 0.0
    %372 = vmatprep.subr.mxu0 0.0
    %373 = vmatpush1.msra.mxu0 0.0
    %374 = vmatprep.subr.mxu0 0.0
    %375 = vmatpush1.msra.mxu0 0.0
    %376 = vmatprep.subr.mxu0 0.0
    %377 = vmatpush1.msra.mxu0 0.0
    %378 = vmatprep.subr.mxu0 0.0
    %379 = vmatpush1.msra.mxu0 0.0
    %380 = vmatprep.subr.mxu0 0.0
    %381 = vmatpush1.msra.mxu0 0.0
    %382 = vmatprep.subr.mxu0 0.0
    %383 = vmatpush1.msra.mxu0 0.0
    %384 = vmatprep.subr.mxu0 0.0
    %385 = vmatpush1.msra.mxu0 0.0
    %386 = vmatprep.subr.mxu0 0.0
    %387 = vmatpush1.msra.mxu0 0.0
    %388 = vmatprep.subr.mxu0 0.0
    %389 = vmatpush1.msra.mxu0 0.0
    %390 = vmatprep.subr.mxu0 0.0
    %391 = vmatpush1.msra.mxu0 0.0
    %392 = vmatprep.subr.mxu0 0.0
    %393 = vmatpush1.msra.mxu0 0.0
    %394 = vmatprep.subr.mxu0 0.0
    %395 = vmatpush1.msra.mxu0 0.0
    %396 = vmatprep.mubr.f32.mxu0 0.0
    %v397 = vand.u32 %v101, 4294901760
    %v398 = vsub.f32 %v101, %v397
    %399 = vmatmul.mubr.f32.gmra.mrb[0].mxu0 %v398
    %v400 = vpop.f32.mrb[0].mxu0
    %v401 = vadd.f32 %v307, %v400
    %v402 = vpop.f32.mrb[0].mxu0
    %403 = vmatprep.mubr.f32.mxu0 0.0
    %v404 = vand.u32 %v104, 4294901760
    %v405 = vsub.f32 %v104, %v404
    %406 = vmatmul.mubr.f32.gmra.mrb[0].mxu0 %v405
    %v407 = vpop.f32.mrb[0].mxu0
    %v408 = vadd.f32 %v313, %v407
    %v409 = vpop.f32.mrb[0].mxu0
    %410 = vdwg.mxu0
    %411 = vmatprep.subr.mxu0 0.0
    %v412 = vand.u32 %v84, 4294901760
    %413 = vmatpush1.msra.mxu0 %v412
    %414 = vmatprep.subr.mxu0 0.0
    %v415 = vand.u32 %v85, 4294901760
    %416 = vmatpush1.msra.mxu0 %v415
    %417 = vmatprep.subr.mxu0 0.0
    %v418 = vand.u32 %v86, 4294901760
    %419 = vmatpush1.msra.mxu0 %v418
    %420 = vmatprep.subr.mxu0 0.0
    %v421 = vand.u32 %v87, 4294901760
    %422 = vmatpush1.msra.mxu0 %v421
    %423 = vmatprep.subr.mxu0 0.0
    %v424 = vand.u32 %v88, 4294901760
    %425 = vmatpush1.msra.mxu0 %v424
    %426 = vmatprep.subr.mxu0 0.0
    %v427 = vand.u32 %v89, 4294901760
    %428 = vmatpush1.msra.mxu0 %v427
    %429 = vmatprep.subr.mxu0 0.0
    %v430 = vand.u32 %v90, 4294901760
    %431 = vmatpush1.msra.mxu0 %v430
    %432 = vmatprep.subr.mxu0 0.0
    %v433 = vand.u32 %v91, 4294901760
    %434 = vmatpush1.msra.mxu0 %v433
    %435 = vmatprep.subr.mxu0 0.0
    %436 = vmatpush1.msra.mxu0 0.0
    %437 = vmatprep.subr.mxu0 0.0
    %438 = vmatpush1.msra.mxu0 0.0
    %439 = vmatprep.subr.mxu0 0.0
    %440 = vmatpush1.msra.mxu0 0.0
    %441 = vmatprep.subr.mxu0 0.0
    %442 = vmatpush1.msra.mxu0 0.0
    %443 = vmatprep.subr.mxu0 0.0
    %444 = vmatpush1.msra.mxu0 0.0
    %445 = vmatprep.subr.mxu0 0.0
    %446 = vmatpush1.msra.mxu0 0.0
    %447 = vmatprep.subr.mxu0 0.0
    %448 = vmatpush1.msra.mxu0 0.0
    %449 = vmatprep.subr.mxu0 0.0
    %450 = vmatpush1.msra.mxu0 0.0
    %451 = vmatprep.subr.mxu0 0.0
    %452 = vmatpush1.msra.mxu0 0.0
    %453 = vmatprep.subr.mxu0 0.0
    %454 = vmatpush1.msra.mxu0 0.0
    %455 = vmatprep.subr.mxu0 0.0
    %456 = vmatpush1.msra.mxu0 0.0
    %457 = vmatprep.subr.mxu0 0.0
    %458 = vmatpush1.msra.mxu0 0.0
    %459 = vmatprep.subr.mxu0 0.0
    %460 = vmatpush1.msra.mxu0 0.0
    %461 = vmatprep.subr.mxu0 0.0
    %462 = vmatpush1.msra.mxu0 0.0
    %463 = vmatprep.subr.mxu0 0.0
    %464 = vmatpush1.msra.mxu0 0.0
    %465 = vmatprep.subr.mxu0 0.0
    %466 = vmatpush1.msra.mxu0 0.0
    %467 = vmatprep.subr.mxu0 0.0
    %468 = vmatpush1.msra.mxu0 0.0
    %469 = vmatprep.subr.mxu0 0.0
    %470 = vmatpush1.msra.mxu0 0.0
    %471 = vmatprep.subr.mxu0 0.0
    %472 = vmatpush1.msra.mxu0 0.0
    %473 = vmatprep.subr.mxu0 0.0
    %474 = vmatpush1.msra.mxu0 0.0
    %475 = vmatprep.subr.mxu0 0.0
    %476 = vmatpush1.msra.mxu0 0.0
    %477 = vmatprep.subr.mxu0 0.0
    %478 = vmatpush1.msra.mxu0 0.0
    %479 = vmatprep.subr.mxu0 0.0
    %480 = vmatpush1.msra.mxu0 0.0
    %481 = vmatprep.subr.mxu0 0.0
    %482 = vmatpush1.msra.mxu0 0.0
    %483 = vmatprep.mubr.f32.mxu0 0.0
    %v484 = vand.u32 %v101, 4294901760
    %v485 = vsub.f32 %v101, %v484
    %v486 = vand.u32 %v485, 4294901760
    %487 = vmatmul.mubr.f32.gmra.mrb[0].mxu0 %v486
    %v488 = vpop.f32.mrb[0].mxu0
    %v489 = vadd.f32 %v401, %v488
    %v490 = vpop.f32.mrb[0].mxu0
    %491 = vmatprep.mubr.f32.mxu0 0.0
    %v492 = vand.u32 %v104, 4294901760
    %v493 = vsub.f32 %v104, %v492
    %v494 = vand.u32 %v493, 4294901760
    %495 = vmatmul.mubr.f32.gmra.mrb[0].mxu0 %v494
    %v496 = vpop.f32.mrb[0].mxu0
    %v497 = vadd.f32 %v408, %v496
    %v498 = vpop.f32.mrb[0].mxu0
    %499 = vdwg.mxu0
    %500 = vmatprep.subr.mxu0 0.0
    %v501 = vand.u32 %v84, 4294901760
    %v502 = vsub.f32 %v84, %v501
    %v503 = vand.u32 %v502, 4294901760
    %504 = vmatpush1.msra.mxu0 %v503
    %505 = vmatprep.subr.mxu0 0.0
    %v506 = vand.u32 %v85, 4294901760
    %v507 = vsub.f32 %v85, %v506
    %v508 = vand.u32 %v507, 4294901760
    %509 = vmatpush1.msra.mxu0 %v508
    %510 = vmatprep.subr.mxu0 0.0
    %v511 = vand.u32 %v86, 4294901760
    %v512 = vsub.f32 %v86, %v511
    %v513 = vand.u32 %v512, 4294901760
    %514 = vmatpush1.msra.mxu0 %v513
    %515 = vmatprep.subr.mxu0 0.0
    %v516 = vand.u32 %v87, 4294901760
    %v517 = vsub.f32 %v87, %v516
    %v518 = vand.u32 %v517, 4294901760
    %519 = vmatpush1.msra.mxu0 %v518
    %520 = vmatprep.subr.mxu0 0.0
    %v521 = vand.u32 %v88, 4294901760
    %v522 = vsub.f32 %v88, %v521
    %v523 = vand.u32 %v522, 4294901760
    %524 = vmatpush1.msra.mxu0 %v523
    %525 = vmatprep.subr.mxu0 0.0
    %v526 = vand.u32 %v89, 4294901760
    %v527 = vsub.f32 %v89, %v526
    %v528 = vand.u32 %v527, 4294901760
    %529 = vmatpush1.msra.mxu0 %v528
    %530 = vmatprep.subr.mxu0 0.0
    %v531 = vand.u32 %v90, 4294901760
    %v532 = vsub.f32 %v90, %v531
    %v533 = vand.u32 %v532, 4294901760
    %534 = vmatpush1.msra.mxu0 %v533
    %535 = vmatprep.subr.mxu0 0.0
    %v536 = vand.u32 %v91, 4294901760
    %v537 = vsub.f32 %v91, %v536
    %v538 = vand.u32 %v537, 4294901760
    %539 = vmatpush1.msra.mxu0 %v538
    %540 = vmatprep.subr.mxu0 0.0
    %541 = vmatpush1.msra.mxu0 0.0
    %542 = vmatprep.subr.mxu0 0.0
    %543 = vmatpush1.msra.mxu0 0.0
    %544 = vmatprep.subr.mxu0 0.0
    %545 = vmatpush1.msra.mxu0 0.0
    %546 = vmatprep.subr.mxu0 0.0
    %547 = vmatpush1.msra.mxu0 0.0
    %548 = vmatprep.subr.mxu0 0.0
    %549 = vmatpush1.msra.mxu0 0.0
    %550 = vmatprep.subr.mxu0 0.0
    %551 = vmatpush1.msra.mxu0 0.0
    %552 = vmatprep.subr.mxu0 0.0
    %553 = vmatpush1.msra.mxu0 0.0
    %554 = vmatprep.subr.mxu0 0.0
    %555 = vmatpush1.msra.mxu0 0.0
    %556 = vmatprep.subr.mxu0 0.0
    %557 = vmatpush1.msra.mxu0 0.0
    %558 = vmatprep.subr.mxu0 0.0
    %559 = vmatpush1.msra.mxu0 0.0
    %560 = vmatprep.subr.mxu0 0.0
    %561 = vmatpush1.msra.mxu0 0.0
    %562 = vmatprep.subr.mxu0 0.0
    %563 = vmatpush1.msra.mxu0 0.0
    %564 = vmatprep.subr.mxu0 0.0
    %565 = vmatpush1.msra.mxu0 0.0
    %566 = vmatprep.subr.mxu0 0.0
    %567 = vmatpush1.msra.mxu0 0.0
    %568 = vmatprep.subr.mxu0 0.0
    %569 = vmatpush1.msra.mxu0 0.0
    %570 = vmatprep.subr.mxu0 0.0
    %571 = vmatpush1.msra.mxu0 0.0
    %572 = vmatprep.subr.mxu0 0.0
    %573 = vmatpush1.msra.mxu0 0.0
    %574 = vmatprep.subr.mxu0 0.0
    %575 = vmatpush1.msra.mxu0 0.0
    %576 = vmatprep.subr.mxu0 0.0
    %577 = vmatpush1.msra.mxu0 0.0
    %578 = vmatprep.subr.mxu0 0.0
    %579 = vmatpush1.msra.mxu0 0.0
    %580 = vmatprep.subr.mxu0 0.0
    %581 = vmatpush1.msra.mxu0 0.0
    %582 = vmatprep.subr.mxu0 0.0
    %583 = vmatpush1.msra.mxu0 0.0
    %584 = vmatprep.subr.mxu0 0.0
    %585 = vmatpush1.msra.mxu0 0.0
    %586 = vmatprep.subr.mxu0 0.0
    %587 = vmatpush1.msra.mxu0 0.0
    %588 = vmatprep.mubr.f32.mxu0 0.0
    %v589 = vand.u32 %v101, 4294901760
    %590 = vmatmul.mubr.f32.gmra.mrb[0].mxu0 %v589
    %v591 = vpop.f32.mrb[0].mxu0
    %v592 = vadd.f32 %v489, %v591
    %v593 = vpop.f32.mrb[0].mxu0
    %594 = vmatprep.mubr.f32.mxu0 0.0
    %v595 = vand.u32 %v104, 4294901760
    %596 = vmatmul.mubr.f32.gmra.mrb[0].mxu0 %v595
    %v597 = vpop.f32.mrb[0].mxu0
    %v598 = vadd.f32 %v497, %v597
    %v599 = vpop.f32.mrb[0].mxu0
    %600 = vdwg.mxu0
    %601 = vmatprep.subr.mxu0 0.0
    %v602 = vand.u32 %v84, 4294901760
    %603 = vmatpush1.msra.mxu0 %v602
    %604 = vmatprep.subr.mxu0 0.0
    %v605 = vand.u32 %v85, 4294901760
    %606 = vmatpush1.msra.mxu0 %v605
    %607 = vmatprep.subr.mxu0 0.0
    %v608 = vand.u32 %v86, 4294901760
    %609 = vmatpush1.msra.mxu0 %v608
    %610 = vmatprep.subr.mxu0 0.0
    %v611 = vand.u32 %v87, 4294901760
    %612 = vmatpush1.msra.mxu0 %v611
    %613 = vmatprep.subr.mxu0 0.0
    %v614 = vand.u32 %v88, 4294901760
    %615 = vmatpush1.msra.mxu0 %v614
    %616 = vmatprep.subr.mxu0 0.0
    %v617 = vand.u32 %v89, 4294901760
    %618 = vmatpush1.msra.mxu0 %v617
    %619 = vmatprep.subr.mxu0 0.0
    %v620 = vand.u32 %v90, 4294901760
    %621 = vmatpush1.msra.mxu0 %v620
    %622 = vmatprep.subr.mxu0 0.0
    %v623 = vand.u32 %v91, 4294901760
    %624 = vmatpush1.msra.mxu0 %v623
    %625 = vmatprep.subr.mxu0 0.0
    %626 = vmatpush1.msra.mxu0 0.0
    %627 = vmatprep.subr.mxu0 0.0
    %628 = vmatpush1.msra.mxu0 0.0
    %629 = vmatprep.subr.mxu0 0.0
    %630 = vmatpush1.msra.mxu0 0.0
    %631 = vmatprep.subr.mxu0 0.0
    %632 = vmatpush1.msra.mxu0 0.0
    %633 = vmatprep.subr.mxu0 0.0
    %634 = vmatpush1.msra.mxu0 0.0
    %635 = vmatprep.subr.mxu0 0.0
    %636 = vmatpush1.msra.mxu0 0.0
    %637 = vmatprep.subr.mxu0 0.0
    %638 = vmatpush1.msra.mxu0 0.0
    %639 = vmatprep.subr.mxu0 0.0
    %640 = vmatpush1.msra.mxu0 0.0
    %641 = vmatprep.subr.mxu0 0.0
    %642 = vmatpush1.msra.mxu0 0.0
    %643 = vmatprep.subr.mxu0 0.0
    %644 = vmatpush1.msra.mxu0 0.0
    %645 = vmatprep.subr.mxu0 0.0
    %646 = vmatpush1.msra.mxu0 0.0
    %647 = vmatprep.subr.mxu0 0.0
    %648 = vmatpush1.msra.mxu0 0.0
    %649 = vmatprep.subr.mxu0 0.0
    %650 = vmatpush1.msra.mxu0 0.0
    %651 = vmatprep.subr.mxu0 0.0
    %652 = vmatpush1.msra.mxu0 0.0
    %653 = vmatprep.subr.mxu0 0.0
    %654 = vmatpush1.msra.mxu0 0.0
    %655 = vmatprep.subr.mxu0 0.0
    %656 = vmatpush1.msra.mxu0 0.0
    %657 = vmatprep.subr.mxu0 0.0
    %658 = vmatpush1.msra.mxu0 0.0
    %659 = vmatprep.subr.mxu0 0.0
    %660 = vmatpush1.msra.mxu0 0.0
    %661 = vmatprep.subr.mxu0 0.0
    %662 = vmatpush1.msra.mxu0 0.0
    %663 = vmatprep.subr.mxu0 0.0
    %664 = vmatpush1.msra.mxu0 0.0
    %665 = vmatprep.subr.mxu0 0.0
    %666 = vmatpush1.msra.mxu0 0.0
    %667 = vmatprep.subr.mxu0 0.0
    %668 = vmatpush1.msra.mxu0 0.0
    %669 = vmatprep.subr.mxu0 0.0
    %670 = vmatpush1.msra.mxu0 0.0
    %671 = vmatprep.subr.mxu0 0.0
    %672 = vmatpush1.msra.mxu0 0.0
    %673 = vmatprep.mubr.f32.mxu0 0.0
    %v674 = vand.u32 %v101, 4294901760
    %675 = vmatmul.mubr.f32.gmra.mrb[0].mxu0 %v674
    %v676 = vpop.f32.mrb[0].mxu0
    %v677 = vadd.f32 %v592, %v676
    %v678 = vpop.f32.mrb[0].mxu0
    %679 = vmatprep.mubr.f32.mxu0 0.0
    %v680 = vand.u32 %v104, 4294901760
    %681 = vmatmul.mubr.f32.gmra.mrb[0].mxu0 %v680
    %v682 = vpop.f32.mrb[0].mxu0
    %v683 = vadd.f32 %v598, %v682
    %v684 = vpop.f32.mrb[0].mxu0
    %685 = vdwg.mxu0
    %v686 = vtanh.pop %v677
    %v687 = vtanh.pop %v683
    %v690 = vunpack.c.l.s4 1966171168
    %v691 = vunpack.c.0.s8 %v690
    %v692 = vlaneseq
    %v693 = vshrl.u32 %v692, 7
    %v694 = vsub.s32 %v691, %v693
    %v695 = vrot.slane %v82, %v694
    %v696 = vcombine.high %v695, %v695
    %v698 = vunpack.c.l.s4 1966171168
    %v699 = vunpack.c.0.s8 %v698
    %v700 = vlaneseq
    %v701 = vshrl.u32 %v700, 7
    %v702 = vsub.s32 %v699, %v701
    %v703 = vrot.slane %v695, %v702
    %v705 = vunpack.c.l.s4 1966171168
    %v706 = vunpack.c.0.s8 %v705
    %v707 = vlaneseq
    %v708 = vshrl.u32 %v707, 7
    %v709 = vsub.s32 %v706, %v708
    %v710 = vrot.slane %v696, %v709
    %v711 = vlaneseq
    %v712 = vshrl.u32 %v711, 7
    %v713 = vsub.s32 0, %v712
    %v714 = vrot.slane %v703, %v713
    %v715 = vlaneseq
    %v716 = vshrl.u32 %v715, 7
    %v717 = vsub.s32 0, %v716
    %v718 = vrot.slane %v710, %v717
    %v721 = vmul.f32 %v686, %v714
    %v722 = vmul.f32 %v687, %v718
    %vm723 = vcmask 261120
    %v724 = vsel %vm723, %v721, 0.0
    %725 = vadd.xlane.f32.xlu0 %v724
    %v726 = vpop.xlane.xlu0 %725
    %v727 = vsel %vm723, %v722, 0.0
    %728 = vadd.xlane.f32.xlu0 %v727
    %v729 = vpop.xlane.xlu0 %728
    %v732 = vlaneseq
    %v733 = vand.u32 %v732, 127
    %v734 = vlaneseq
    %v735 = vshrl.u32 %v734, 7
    %v736 = vsub.s32 %v733, %v735
    %v737 = vrot.slane %v726, %v736
    %v738 = vlaneseq
    %v739 = vshrl.u32 %v738, 7
    %v740 = vsub.s32 %v733, %v739
    %v741 = vrot.slane %v729, %v740
    %vm742 = vcmask 1041409
    %v743 = vsel %vm742, %v741, %v737
    %vm745 = vcmask 58368
    %v746 = vsel %vm745, %v743, -inf
    %747 = vmax.xlane.f32.xlu0 %v746
    %v748 = vpop.xlane.xlu0 %747
    %v750 = vlaneseq
    %v751 = vshrl.u32 %v750, 7
    %v752 = vsub.s32 0, %v751
    %v753 = vrot.slane %v748, %v752
    %v754 = vlaneseq
    %v755 = vshrl.u32 %v754, 7
    %v756 = vsub.s32 1, %v755
    %v757 = vrot.slane %v748, %v756
    %v760 = vsub.f32 %v726, %v753
    %v761 = vsub.f32 %v729, %v757
    %v762 = vmul.f32 %v760, 1.442695
    %v763 = vpow.pop %v762
    %v764 = vmul.f32 %v761, 1.442695
    %v765 = vpow.pop %v764
    %768 = vset.pattern.permute.xlu0 0
    %769 = vperm.xlu0 %768, %v763
    %v770 = vpop.permute.xlu0 %769
    %771 = vset.pattern.permute.xlu0 0
    %772 = vperm.xlu0 %771, %v765
    %v773 = vpop.permute.xlu0 %772
    %v774 = vlaneseq
    %v775 = vshrl.u32 %v774, 7
    %v776 = vsub.s32 %v733, %v775
    %v777 = vrot.slane %v770, %v776
    %v778 = vlaneseq
    %v779 = vshrl.u32 %v778, 7
    %v780 = vsub.s32 %v733, %v779
    %v781 = vrot.slane %v773, %v780
    %v782 = vsel %vm742, %v781, %v777
    %v784 = vsel %vm745, %v782, 0.0
    %785 = vadd.xlane.f32.xlu0 %v784
    %v786 = vpop.xlane.xlu0 %785
    %v788 = vlaneseq
    %v789 = vshrl.u32 %v788, 7
    %v790 = vsub.s32 0, %v789
    %v791 = vrot.slane %v786, %v790
    %v792 = vlaneseq
    %v793 = vshrl.u32 %v792, 7
    %v794 = vsub.s32 1, %v793
    %v795 = vrot.slane %v786, %v794
    %v798 = vrcp.pop %v791
    %v799 = vmul.f32 %v763, %v798
    %v800 = vrcp.pop %v795
    %v801 = vmul.f32 %v765, %v800
    %803 = vset.pattern.permute.xlu0 0
    %804 = vperm.xlu0 %803, %v799
    %v805 = vpop.permute.xlu0 %804
    %808 = vset.pattern.permute.xlu0 0
    %809 = vperm.xlu0 %808, %v801
    %v810 = vpop.permute.xlu0 %809
    %v812 = vmul.f32 %v805, %v80
    %v813 = vmul.f32 %v810, %v81
    %v814 = vsel %vm99, %v812, 0.0
    %v815 = vrot.slane %v814, 4
    %v816 = vadd.f32 %v814, %v815
    %v817 = vrot.slane %v816, 2
    %v818 = vadd.f32 %v816, %v817
    %v819 = vrot.slane %v818, 1
    %v820 = vadd.f32 %v818, %v819
    %v821 = vsel %vm99, %v813, 0.0
    %v822 = vrot.slane %v821, 4
    %v823 = vadd.f32 %v821, %v822
    %v824 = vrot.slane %v823, 2
    %v825 = vadd.f32 %v823, %v824
    %v826 = vrot.slane %v825, 1
    %v827 = vadd.f32 %v825, %v826
    %v828 = vld [vmem:[%s6] sm:$0xff]
    %v829 = vld [vmem:[%s6 + $0x8] sm:$0xff]
    %v830 = vld [vmem:[%s6 + $0x10] sm:$0xff]
    %v831 = vld [vmem:[%s6 + $0x18] sm:$0xff]
    %v832 = vld [vmem:[%s6 + $0x20] sm:$0xff]
    %v833 = vld [vmem:[%s6 + $0x28] sm:$0xff]
    %v834 = vld [vmem:[%s6 + $0x30] sm:$0xff]
    %v835 = vld [vmem:[%s6 + $0x38] sm:$0xff]
    %v836 = vld [vmem:[%s7] sm:$0x1]
    %v838 = vlaneseq
    %v839 = vshrl.u32 %v838, 7
    %v840 = vsub.s32 0, %v839
    %v841 = vrot.slane %v836, %v840
    %v844 = vsel %vm99, %v76, 0
    %v847 = vsel %vm99, %v77, 0
    %v850 = vsel %vm99, %v78, 0
    %v853 = vsel %vm99, %v79, 0
    %855 = vmatprep.subr.mxu0 0.0
    %v856 = vand.u32 %v828, 4294901760
    %857 = vmatpush1.msra.mxu0 %v856
    %858 = vmatprep.subr.mxu0 0.0
    %v859 = vand.u32 %v829, 4294901760
    %860 = vmatpush1.msra.mxu0 %v859
    %861 = vmatprep.subr.mxu0 0.0
    %v862 = vand.u32 %v830, 4294901760
    %863 = vmatpush1.msra.mxu0 %v862
    %864 = vmatprep.subr.mxu0 0.0
    %v865 = vand.u32 %v831, 4294901760
    %866 = vmatpush1.msra.mxu0 %v865
    %867 = vmatprep.subr.mxu0 0.0
    %v868 = vand.u32 %v832, 4294901760
    %869 = vmatpush1.msra.mxu0 %v868
    %870 = vmatprep.subr.mxu0 0.0
    %v871 = vand.u32 %v833, 4294901760
    %872 = vmatpush1.msra.mxu0 %v871
    %873 = vmatprep.subr.mxu0 0.0
    %v874 = vand.u32 %v834, 4294901760
    %875 = vmatpush1.msra.mxu0 %v874
    %876 = vmatprep.subr.mxu0 0.0
    %v877 = vand.u32 %v835, 4294901760
    %878 = vmatpush1.msra.mxu0 %v877
    %879 = vmatprep.subr.mxu0 0.0
    %880 = vmatpush1.msra.mxu0 0.0
    %881 = vmatprep.subr.mxu0 0.0
    %882 = vmatpush1.msra.mxu0 0.0
    %883 = vmatprep.subr.mxu0 0.0
    %884 = vmatpush1.msra.mxu0 0.0
    %885 = vmatprep.subr.mxu0 0.0
    %886 = vmatpush1.msra.mxu0 0.0
    %887 = vmatprep.subr.mxu0 0.0
    %888 = vmatpush1.msra.mxu0 0.0
    %889 = vmatprep.subr.mxu0 0.0
    %890 = vmatpush1.msra.mxu0 0.0
    %891 = vmatprep.subr.mxu0 0.0
    %892 = vmatpush1.msra.mxu0 0.0
    %893 = vmatprep.subr.mxu0 0.0
    %894 = vmatpush1.msra.mxu0 0.0
    %895 = vmatprep.subr.mxu0 0.0
    %896 = vmatpush1.msra.mxu0 0.0
    %897 = vmatprep.subr.mxu0 0.0
    %898 = vmatpush1.msra.mxu0 0.0
    %899 = vmatprep.subr.mxu0 0.0
    %900 = vmatpush1.msra.mxu0 0.0
    %901 = vmatprep.subr.mxu0 0.0
    %902 = vmatpush1.msra.mxu0 0.0
    %903 = vmatprep.subr.mxu0 0.0
    %904 = vmatpush1.msra.mxu0 0.0
    %905 = vmatprep.subr.mxu0 0.0
    %906 = vmatpush1.msra.mxu0 0.0
    %907 = vmatprep.subr.mxu0 0.0
    %908 = vmatpush1.msra.mxu0 0.0
    %909 = vmatprep.subr.mxu0 0.0
    %910 = vmatpush1.msra.mxu0 0.0
    %911 = vmatprep.subr.mxu0 0.0
    %912 = vmatpush1.msra.mxu0 0.0
    %913 = vmatprep.subr.mxu0 0.0
    %914 = vmatpush1.msra.mxu0 0.0
    %915 = vmatprep.subr.mxu0 0.0
    %916 = vmatpush1.msra.mxu0 0.0
    %917 = vmatprep.subr.mxu0 0.0
    %918 = vmatpush1.msra.mxu0 0.0
    %919 = vmatprep.subr.mxu0 0.0
    %920 = vmatpush1.msra.mxu0 0.0
    %921 = vmatprep.subr.mxu0 0.0
    %922 = vmatpush1.msra.mxu0 0.0
    %923 = vmatprep.subr.mxu0 0.0
    %924 = vmatpush1.msra.mxu0 0.0
    %925 = vmatprep.subr.mxu0 0.0
    %926 = vmatpush1.msra.mxu0 0.0
    %927 = vmatprep.mubr.f32.mxu0 0.0
    %v928 = vand.u32 %v844, 4294901760
    %v929 = vsub.f32 %v844, %v928
    %v930 = vand.u32 %v929, 4294901760
    %v931 = vsub.f32 %v929, %v930
    %v932 = vand.u32 %v931, 4294901760
    %933 = vmatmul.mubr.f32.gmra.mrb[0].mxu0 %v932
    %v934 = vpop.f32.mrb[0].mxu0
    %v935 = vadd.f32 %v841, %v934
    %v936 = vpop.f32.mrb[0].mxu0
    %937 = vmatprep.mubr.f32.mxu0 0.0
    %v938 = vand.u32 %v847, 4294901760
    %v939 = vsub.f32 %v847, %v938
    %v940 = vand.u32 %v939, 4294901760
    %v941 = vsub.f32 %v939, %v940
    %v942 = vand.u32 %v941, 4294901760
    %943 = vmatmul.mubr.f32.gmra.mrb[0].mxu0 %v942
    %v944 = vpop.f32.mrb[0].mxu0
    %v945 = vadd.f32 %v841, %v944
    %v946 = vpop.f32.mrb[0].mxu0
    %947 = vmatprep.mubr.f32.mxu0 0.0
    %v948 = vand.u32 %v850, 4294901760
    %v949 = vsub.f32 %v850, %v948
    %v950 = vand.u32 %v949, 4294901760
    %v951 = vsub.f32 %v949, %v950
    %v952 = vand.u32 %v951, 4294901760
    %953 = vmatmul.mubr.f32.gmra.mrb[0].mxu0 %v952
    %v954 = vpop.f32.mrb[0].mxu0
    %v955 = vadd.f32 %v841, %v954
    %v956 = vpop.f32.mrb[0].mxu0
    %957 = vmatprep.mubr.f32.mxu0 0.0
    %v958 = vand.u32 %v853, 4294901760
    %v959 = vsub.f32 %v853, %v958
    %v960 = vand.u32 %v959, 4294901760
    %v961 = vsub.f32 %v959, %v960
    %v962 = vand.u32 %v961, 4294901760
    %963 = vmatmul.mubr.f32.gmra.mrb[0].mxu0 %v962
    %v964 = vpop.f32.mrb[0].mxu0
    %v965 = vadd.f32 %v841, %v964
    %v966 = vpop.f32.mrb[0].mxu0
    %967 = vdwg.mxu0
    %968 = vmatprep.subr.mxu0 0.0
    %v969 = vand.u32 %v828, 4294901760
    %v970 = vsub.f32 %v828, %v969
    %v971 = vand.u32 %v970, 4294901760
    %v972 = vsub.f32 %v970, %v971
    %v973 = vand.u32 %v972, 4294901760
    %974 = vmatpush1.msra.mxu0 %v973
    %975 = vmatprep.subr.mxu0 0.0
    %v976 = vand.u32 %v829, 4294901760
    %v977 = vsub.f32 %v829, %v976
    %v978 = vand.u32 %v977, 4294901760
    %v979 = vsub.f32 %v977, %v978
    %v980 = vand.u32 %v979, 4294901760
    %981 = vmatpush1.msra.mxu0 %v980
    %982 = vmatprep.subr.mxu0 0.0
    %v983 = vand.u32 %v830, 4294901760
    %v984 = vsub.f32 %v830, %v983
    %v985 = vand.u32 %v984, 4294901760
    %v986 = vsub.f32 %v984, %v985
    %v987 = vand.u32 %v986, 4294901760
    %988 = vmatpush1.msra.mxu0 %v987
    %989 = vmatprep.subr.mxu0 0.0
    %v990 = vand.u32 %v831, 4294901760
    %v991 = vsub.f32 %v831, %v990
    %v992 = vand.u32 %v991, 4294901760
    %v993 = vsub.f32 %v991, %v992
    %v994 = vand.u32 %v993, 4294901760
    %995 = vmatpush1.msra.mxu0 %v994
    %996 = vmatprep.subr.mxu0 0.0
    %v997 = vand.u32 %v832, 4294901760
    %v998 = vsub.f32 %v832, %v997
    %v999 = vand.u32 %v998, 4294901760
    %v1000 = vsub.f32 %v998, %v999
    %v1001 = vand.u32 %v1000, 4294901760
    %1002 = vmatpush1.msra.mxu0 %v1001
    %1003 = vmatprep.subr.mxu0 0.0
    %v1004 = vand.u32 %v833, 4294901760
    %v1005 = vsub.f32 %v833, %v1004
    %v1006 = vand.u32 %v1005, 4294901760
    %v1007 = vsub.f32 %v1005, %v1006
    %v1008 = vand.u32 %v1007, 4294901760
    %1009 = vmatpush1.msra.mxu0 %v1008
    %1010 = vmatprep.subr.mxu0 0.0
    %v1011 = vand.u32 %v834, 4294901760
    %v1012 = vsub.f32 %v834, %v1011
    %v1013 = vand.u32 %v1012, 4294901760
    %v1014 = vsub.f32 %v1012, %v1013
    %v1015 = vand.u32 %v1014, 4294901760
    %1016 = vmatpush1.msra.mxu0 %v1015
    %1017 = vmatprep.subr.mxu0 0.0
    %v1018 = vand.u32 %v835, 4294901760
    %v1019 = vsub.f32 %v835, %v1018
    %v1020 = vand.u32 %v1019, 4294901760
    %v1021 = vsub.f32 %v1019, %v1020
    %v1022 = vand.u32 %v1021, 4294901760
    %1023 = vmatpush1.msra.mxu0 %v1022
    %1024 = vmatprep.subr.mxu0 0.0
    %1025 = vmatpush1.msra.mxu0 0.0
    %1026 = vmatprep.subr.mxu0 0.0
    %1027 = vmatpush1.msra.mxu0 0.0
    %1028 = vmatprep.subr.mxu0 0.0
    %1029 = vmatpush1.msra.mxu0 0.0
    %1030 = vmatprep.subr.mxu0 0.0
    %1031 = vmatpush1.msra.mxu0 0.0
    %1032 = vmatprep.subr.mxu0 0.0
    %1033 = vmatpush1.msra.mxu0 0.0
    %1034 = vmatprep.subr.mxu0 0.0
    %1035 = vmatpush1.msra.mxu0 0.0
    %1036 = vmatprep.subr.mxu0 0.0
    %1037 = vmatpush1.msra.mxu0 0.0
    %1038 = vmatprep.subr.mxu0 0.0
    %1039 = vmatpush1.msra.mxu0 0.0
    %1040 = vmatprep.subr.mxu0 0.0
    %1041 = vmatpush1.msra.mxu0 0.0
    %1042 = vmatprep.subr.mxu0 0.0
    %1043 = vmatpush1.msra.mxu0 0.0
    %1044 = vmatprep.subr.mxu0 0.0
    %1045 = vmatpush1.msra.mxu0 0.0
    %1046 = vmatprep.subr.mxu0 0.0
    %1047 = vmatpush1.msra.mxu0 0.0
    %1048 = vmatprep.subr.mxu0 0.0
    %1049 = vmatpush1.msra.mxu0 0.0
    %1050 = vmatprep.subr.mxu0 0.0
    %1051 = vmatpush1.msra.mxu0 0.0
    %1052 = vmatprep.subr.mxu0 0.0
    %1053 = vmatpush1.msra.mxu0 0.0
    %1054 = vmatprep.subr.mxu0 0.0
    %1055 = vmatpush1.msra.mxu0 0.0
    %1056 = vmatprep.subr.mxu0 0.0
    %1057 = vmatpush1.msra.mxu0 0.0
    %1058 = vmatprep.subr.mxu0 0.0
    %1059 = vmatpush1.msra.mxu0 0.0
    %1060 = vmatprep.subr.mxu0 0.0
    %1061 = vmatpush1.msra.mxu0 0.0
    %1062 = vmatprep.subr.mxu0 0.0
    %1063 = vmatpush1.msra.mxu0 0.0
    %1064 = vmatprep.subr.mxu0 0.0
    %1065 = vmatpush1.msra.mxu0 0.0
    %1066 = vmatprep.subr.mxu0 0.0
    %1067 = vmatpush1.msra.mxu0 0.0
    %1068 = vmatprep.subr.mxu0 0.0
    %1069 = vmatpush1.msra.mxu0 0.0
    %1070 = vmatprep.subr.mxu0 0.0
    %1071 = vmatpush1.msra.mxu0 0.0
    %1072 = vmatprep.mubr.f32.mxu0 0.0
    %v1073 = vand.u32 %v844, 4294901760
    %1074 = vmatmul.mubr.f32.gmra.mrb[0].mxu0 %v1073
    %v1075 = vpop.f32.mrb[0].mxu0
    %v1076 = vadd.f32 %v935, %v1075
    %v1077 = vpop.f32.mrb[0].mxu0
    %1078 = vmatprep.mubr.f32.mxu0 0.0
    %v1079 = vand.u32 %v847, 4294901760
    %1080 = vmatmul.mubr.f32.gmra.mrb[0].mxu0 %v1079
    %v1081 = vpop.f32.mrb[0].mxu0
    %v1082 = vadd.f32 %v945, %v1081
    %v1083 = vpop.f32.mrb[0].mxu0
    %1084 = vmatprep.mubr.f32.mxu0 0.0
    %v1085 = vand.u32 %v850, 4294901760
    %1086 = vmatmul.mubr.f32.gmra.mrb[0].mxu0 %v1085
    %v1087 = vpop.f32.mrb[0].mxu0
    %v1088 = vadd.f32 %v955, %v1087
    %v1089 = vpop.f32.mrb[0].mxu0
    %1090 = vmatprep.mubr.f32.mxu0 0.0
    %v1091 = vand.u32 %v853, 4294901760
    %1092 = vmatmul.mubr.f32.gmra.mrb[0].mxu0 %v1091
    %v1093 = vpop.f32.mrb[0].mxu0
    %v1094 = vadd.f32 %v965, %v1093
    %v1095 = vpop.f32.mrb[0].mxu0
    %1096 = vdwg.mxu0
    %1097 = vmatprep.subr.mxu0 0.0
    %v1098 = vand.u32 %v828, 4294901760
    %v1099 = vsub.f32 %v828, %v1098
    %1100 = vmatpush1.msra.mxu0 %v1099
    %1101 = vmatprep.subr.mxu0 0.0
    %v1102 = vand.u32 %v829, 4294901760
    %v1103 = vsub.f32 %v829, %v1102
    %1104 = vmatpush1.msra.mxu0 %v1103
    %1105 = vmatprep.subr.mxu0 0.0
    %v1106 = vand.u32 %v830, 4294901760
    %v1107 = vsub.f32 %v830, %v1106
    %1108 = vmatpush1.msra.mxu0 %v1107
    %1109 = vmatprep.subr.mxu0 0.0
    %v1110 = vand.u32 %v831, 4294901760
    %v1111 = vsub.f32 %v831, %v1110
    %1112 = vmatpush1.msra.mxu0 %v1111
    %1113 = vmatprep.subr.mxu0 0.0
    %v1114 = vand.u32 %v832, 4294901760
    %v1115 = vsub.f32 %v832, %v1114
    %1116 = vmatpush1.msra.mxu0 %v1115
    %1117 = vmatprep.subr.mxu0 0.0
    %v1118 = vand.u32 %v833, 4294901760
    %v1119 = vsub.f32 %v833, %v1118
    %1120 = vmatpush1.msra.mxu0 %v1119
    %1121 = vmatprep.subr.mxu0 0.0
    %v1122 = vand.u32 %v834, 4294901760
    %v1123 = vsub.f32 %v834, %v1122
    %1124 = vmatpush1.msra.mxu0 %v1123
    %1125 = vmatprep.subr.mxu0 0.0
    %v1126 = vand.u32 %v835, 4294901760
    %v1127 = vsub.f32 %v835, %v1126
    %1128 = vmatpush1.msra.mxu0 %v1127
    %1129 = vmatprep.subr.mxu0 0.0
    %1130 = vmatpush1.msra.mxu0 0.0
    %1131 = vmatprep.subr.mxu0 0.0
    %1132 = vmatpush1.msra.mxu0 0.0
    %1133 = vmatprep.subr.mxu0 0.0
    %1134 = vmatpush1.msra.mxu0 0.0
    %1135 = vmatprep.subr.mxu0 0.0
    %1136 = vmatpush1.msra.mxu0 0.0
    %1137 = vmatprep.subr.mxu0 0.0
    %1138 = vmatpush1.msra.mxu0 0.0
    %1139 = vmatprep.subr.mxu0 0.0
    %1140 = vmatpush1.msra.mxu0 0.0
    %1141 = vmatprep.subr.mxu0 0.0
    %1142 = vmatpush1.msra.mxu0 0.0
    %1143 = vmatprep.subr.mxu0 0.0
    %1144 = vmatpush1.msra.mxu0 0.0
    %1145 = vmatprep.subr.mxu0 0.0
    %1146 = vmatpush1.msra.mxu0 0.0
    %1147 = vmatprep.subr.mxu0 0.0
    %1148 = vmatpush1.msra.mxu0 0.0
    %1149 = vmatprep.subr.mxu0 0.0
    %1150 = vmatpush1.msra.mxu0 0.0
    %1151 = vmatprep.subr.mxu0 0.0
    %1152 = vmatpush1.msra.mxu0 0.0
    %1153 = vmatprep.subr.mxu0 0.0
    %1154 = vmatpush1.msra.mxu0 0.0
    %1155 = vmatprep.subr.mxu0 0.0
    %1156 = vmatpush1.msra.mxu0 0.0
    %1157 = vmatprep.subr.mxu0 0.0
    %1158 = vmatpush1.msra.mxu0 0.0
    %1159 = vmatprep.subr.mxu0 0.0
    %1160 = vmatpush1.msra.mxu0 0.0
    %1161 = vmatprep.subr.mxu0 0.0
    %1162 = vmatpush1.msra.mxu0 0.0
    %1163 = vmatprep.subr.mxu0 0.0
    %1164 = vmatpush1.msra.mxu0 0.0
    %1165 = vmatprep.subr.mxu0 0.0
    %1166 = vmatpush1.msra.mxu0 0.0
    %1167 = vmatprep.subr.mxu0 0.0
    %1168 = vmatpush1.msra.mxu0 0.0
    %1169 = vmatprep.subr.mxu0 0.0
    %1170 = vmatpush1.msra.mxu0 0.0
    %1171 = vmatprep.subr.mxu0 0.0
    %1172 = vmatpush1.msra.mxu0 0.0
    %1173 = vmatprep.subr.mxu0 0.0
    %1174 = vmatpush1.msra.mxu0 0.0
    %1175 = vmatprep.subr.mxu0 0.0
    %1176 = vmatpush1.msra.mxu0 0.0
    %1177 = vmatprep.mubr.f32.mxu0 0.0
    %v1178 = vand.u32 %v844, 4294901760
    %v1179 = vsub.f32 %v844, %v1178
    %1180 = vmatmul.mubr.f32.gmra.mrb[0].mxu0 %v1179
    %v1181 = vpop.f32.mrb[0].mxu0
    %v1182 = vadd.f32 %v1076, %v1181
    %v1183 = vpop.f32.mrb[0].mxu0
    %1184 = vmatprep.mubr.f32.mxu0 0.0
    %v1185 = vand.u32 %v847, 4294901760
    %v1186 = vsub.f32 %v847, %v1185
    %1187 = vmatmul.mubr.f32.gmra.mrb[0].mxu0 %v1186
    %v1188 = vpop.f32.mrb[0].mxu0
    %v1189 = vadd.f32 %v1082, %v1188
    %v1190 = vpop.f32.mrb[0].mxu0
    %1191 = vmatprep.mubr.f32.mxu0 0.0
    %v1192 = vand.u32 %v850, 4294901760
    %v1193 = vsub.f32 %v850, %v1192
    %1194 = vmatmul.mubr.f32.gmra.mrb[0].mxu0 %v1193
    %v1195 = vpop.f32.mrb[0].mxu0
    %v1196 = vadd.f32 %v1088, %v1195
    %v1197 = vpop.f32.mrb[0].mxu0
    %1198 = vmatprep.mubr.f32.mxu0 0.0
    %v1199 = vand.u32 %v853, 4294901760
    %v1200 = vsub.f32 %v853, %v1199
    %1201 = vmatmul.mubr.f32.gmra.mrb[0].mxu0 %v1200
    %v1202 = vpop.f32.mrb[0].mxu0
    %v1203 = vadd.f32 %v1094, %v1202
    %v1204 = vpop.f32.mrb[0].mxu0
    %1205 = vdwg.mxu0
    %1206 = vmatprep.subr.mxu0 0.0
    %v1207 = vand.u32 %v828, 4294901760
    %1208 = vmatpush1.msra.mxu0 %v1207
    %1209 = vmatprep.subr.mxu0 0.0
    %v1210 = vand.u32 %v829, 4294901760
    %1211 = vmatpush1.msra.mxu0 %v1210
    %1212 = vmatprep.subr.mxu0 0.0
    %v1213 = vand.u32 %v830, 4294901760
    %1214 = vmatpush1.msra.mxu0 %v1213
    %1215 = vmatprep.subr.mxu0 0.0
    %v1216 = vand.u32 %v831, 4294901760
    %1217 = vmatpush1.msra.mxu0 %v1216
    %1218 = vmatprep.subr.mxu0 0.0
    %v1219 = vand.u32 %v832, 4294901760
    %1220 = vmatpush1.msra.mxu0 %v1219
    %1221 = vmatprep.subr.mxu0 0.0
    %v1222 = vand.u32 %v833, 4294901760
    %1223 = vmatpush1.msra.mxu0 %v1222
    %1224 = vmatprep.subr.mxu0 0.0
    %v1225 = vand.u32 %v834, 4294901760
    %1226 = vmatpush1.msra.mxu0 %v1225
    %1227 = vmatprep.subr.mxu0 0.0
    %v1228 = vand.u32 %v835, 4294901760
    %1229 = vmatpush1.msra.mxu0 %v1228
    %1230 = vmatprep.subr.mxu0 0.0
    %1231 = vmatpush1.msra.mxu0 0.0
    %1232 = vmatprep.subr.mxu0 0.0
    %1233 = vmatpush1.msra.mxu0 0.0
    %1234 = vmatprep.subr.mxu0 0.0
    %1235 = vmatpush1.msra.mxu0 0.0
    %1236 = vmatprep.subr.mxu0 0.0
    %1237 = vmatpush1.msra.mxu0 0.0
    %1238 = vmatprep.subr.mxu0 0.0
    %1239 = vmatpush1.msra.mxu0 0.0
    %1240 = vmatprep.subr.mxu0 0.0
    %1241 = vmatpush1.msra.mxu0 0.0
    %1242 = vmatprep.subr.mxu0 0.0
    %1243 = vmatpush1.msra.mxu0 0.0
    %1244 = vmatprep.subr.mxu0 0.0
    %1245 = vmatpush1.msra.mxu0 0.0
    %1246 = vmatprep.subr.mxu0 0.0
    %1247 = vmatpush1.msra.mxu0 0.0
    %1248 = vmatprep.subr.mxu0 0.0
    %1249 = vmatpush1.msra.mxu0 0.0
    %1250 = vmatprep.subr.mxu0 0.0
    %1251 = vmatpush1.msra.mxu0 0.0
    %1252 = vmatprep.subr.mxu0 0.0
    %1253 = vmatpush1.msra.mxu0 0.0
    %1254 = vmatprep.subr.mxu0 0.0
    %1255 = vmatpush1.msra.mxu0 0.0
    %1256 = vmatprep.subr.mxu0 0.0
    %1257 = vmatpush1.msra.mxu0 0.0
    %1258 = vmatprep.subr.mxu0 0.0
    %1259 = vmatpush1.msra.mxu0 0.0
    %1260 = vmatprep.subr.mxu0 0.0
    %1261 = vmatpush1.msra.mxu0 0.0
    %1262 = vmatprep.subr.mxu0 0.0
    %1263 = vmatpush1.msra.mxu0 0.0
    %1264 = vmatprep.subr.mxu0 0.0
    %1265 = vmatpush1.msra.mxu0 0.0
    %1266 = vmatprep.subr.mxu0 0.0
    %1267 = vmatpush1.msra.mxu0 0.0
    %1268 = vmatprep.subr.mxu0 0.0
    %1269 = vmatpush1.msra.mxu0 0.0
    %1270 = vmatprep.subr.mxu0 0.0
    %1271 = vmatpush1.msra.mxu0 0.0
    %1272 = vmatprep.subr.mxu0 0.0
    %1273 = vmatpush1.msra.mxu0 0.0
    %1274 = vmatprep.subr.mxu0 0.0
    %1275 = vmatpush1.msra.mxu0 0.0
    %1276 = vmatprep.subr.mxu0 0.0
    %1277 = vmatpush1.msra.mxu0 0.0
    %1278 = vmatprep.mubr.f32.mxu0 0.0
    %v1279 = vand.u32 %v844, 4294901760
    %v1280 = vsub.f32 %v844, %v1279
    %v1281 = vand.u32 %v1280, 4294901760
    %1282 = vmatmul.mubr.f32.gmra.mrb[0].mxu0 %v1281
    %v1283 = vpop.f32.mrb[0].mxu0
    %v1284 = vadd.f32 %v1182, %v1283
    %v1285 = vpop.f32.mrb[0].mxu0
    %1286 = vmatprep.mubr.f32.mxu0 0.0
    %v1287 = vand.u32 %v847, 4294901760
    %v1288 = vsub.f32 %v847, %v1287
    %v1289 = vand.u32 %v1288, 4294901760
    %1290 = vmatmul.mubr.f32.gmra.mrb[0].mxu0 %v1289
    %v1291 = vpop.f32.mrb[0].mxu0
    %v1292 = vadd.f32 %v1189, %v1291
    %v1293 = vpop.f32.mrb[0].mxu0
    %1294 = vmatprep.mubr.f32.mxu0 0.0
    %v1295 = vand.u32 %v850, 4294901760
    %v1296 = vsub.f32 %v850, %v1295
    %v1297 = vand.u32 %v1296, 4294901760
    %1298 = vmatmul.mubr.f32.gmra.mrb[0].mxu0 %v1297
    %v1299 = vpop.f32.mrb[0].mxu0
    %v1300 = vadd.f32 %v1196, %v1299
    %v1301 = vpop.f32.mrb[0].mxu0
    %1302 = vmatprep.mubr.f32.mxu0 0.0
    %v1303 = vand.u32 %v853, 4294901760
    %v1304 = vsub.f32 %v853, %v1303
    %v1305 = vand.u32 %v1304, 4294901760
    %1306 = vmatmul.mubr.f32.gmra.mrb[0].mxu0 %v1305
    %v1307 = vpop.f32.mrb[0].mxu0
    %v1308 = vadd.f32 %v1203, %v1307
    %v1309 = vpop.f32.mrb[0].mxu0
    %1310 = vdwg.mxu0
    %1311 = vmatprep.subr.mxu0 0.0
    %v1312 = vand.u32 %v828, 4294901760
    %v1313 = vsub.f32 %v828, %v1312
    %v1314 = vand.u32 %v1313, 4294901760
    %1315 = vmatpush1.msra.mxu0 %v1314
    %1316 = vmatprep.subr.mxu0 0.0
    %v1317 = vand.u32 %v829, 4294901760
    %v1318 = vsub.f32 %v829, %v1317
    %v1319 = vand.u32 %v1318, 4294901760
    %1320 = vmatpush1.msra.mxu0 %v1319
    %1321 = vmatprep.subr.mxu0 0.0
    %v1322 = vand.u32 %v830, 4294901760
    %v1323 = vsub.f32 %v830, %v1322
    %v1324 = vand.u32 %v1323, 4294901760
    %1325 = vmatpush1.msra.mxu0 %v1324
    %1326 = vmatprep.subr.mxu0 0.0
    %v1327 = vand.u32 %v831, 4294901760
    %v1328 = vsub.f32 %v831, %v1327
    %v1329 = vand.u32 %v1328, 4294901760
    %1330 = vmatpush1.msra.mxu0 %v1329
    %1331 = vmatprep.subr.mxu0 0.0
    %v1332 = vand.u32 %v832, 4294901760
    %v1333 = vsub.f32 %v832, %v1332
    %v1334 = vand.u32 %v1333, 4294901760
    %1335 = vmatpush1.msra.mxu0 %v1334
    %1336 = vmatprep.subr.mxu0 0.0
    %v1337 = vand.u32 %v833, 4294901760
    %v1338 = vsub.f32 %v833, %v1337
    %v1339 = vand.u32 %v1338, 4294901760
    %1340 = vmatpush1.msra.mxu0 %v1339
    %1341 = vmatprep.subr.mxu0 0.0
    %v1342 = vand.u32 %v834, 4294901760
    %v1343 = vsub.f32 %v834, %v1342
    %v1344 = vand.u32 %v1343, 4294901760
    %1345 = vmatpush1.msra.mxu0 %v1344
    %1346 = vmatprep.subr.mxu0 0.0
    %v1347 = vand.u32 %v835, 4294901760
    %v1348 = vsub.f32 %v835, %v1347
    %v1349 = vand.u32 %v1348, 4294901760
    %1350 = vmatpush1.msra.mxu0 %v1349
    %1351 = vmatprep.subr.mxu0 0.0
    %1352 = vmatpush1.msra.mxu0 0.0
    %1353 = vmatprep.subr.mxu0 0.0
    %1354 = vmatpush1.msra.mxu0 0.0
    %1355 = vmatprep.subr.mxu0 0.0
    %1356 = vmatpush1.msra.mxu0 0.0
    %1357 = vmatprep.subr.mxu0 0.0
    %1358 = vmatpush1.msra.mxu0 0.0
    %1359 = vmatprep.subr.mxu0 0.0
    %1360 = vmatpush1.msra.mxu0 0.0
    %1361 = vmatprep.subr.mxu0 0.0
    %1362 = vmatpush1.msra.mxu0 0.0
    %1363 = vmatprep.subr.mxu0 0.0
    %1364 = vmatpush1.msra.mxu0 0.0
    %1365 = vmatprep.subr.mxu0 0.0
    %1366 = vmatpush1.msra.mxu0 0.0
    %1367 = vmatprep.subr.mxu0 0.0
    %1368 = vmatpush1.msra.mxu0 0.0
    %1369 = vmatprep.subr.mxu0 0.0
    %1370 = vmatpush1.msra.mxu0 0.0
    %1371 = vmatprep.subr.mxu0 0.0
    %1372 = vmatpush1.msra.mxu0 0.0
    %1373 = vmatprep.subr.mxu0 0.0
    %1374 = vmatpush1.msra.mxu0 0.0
    %1375 = vmatprep.subr.mxu0 0.0
    %1376 = vmatpush1.msra.mxu0 0.0
    %1377 = vmatprep.subr.mxu0 0.0
    %1378 = vmatpush1.msra.mxu0 0.0
    %1379 = vmatprep.subr.mxu0 0.0
    %1380 = vmatpush1.msra.mxu0 0.0
    %1381 = vmatprep.subr.mxu0 0.0
    %1382 = vmatpush1.msra.mxu0 0.0
    %1383 = vmatprep.subr.mxu0 0.0
    %1384 = vmatpush1.msra.mxu0 0.0
    %1385 = vmatprep.subr.mxu0 0.0
    %1386 = vmatpush1.msra.mxu0 0.0
    %1387 = vmatprep.subr.mxu0 0.0
    %1388 = vmatpush1.msra.mxu0 0.0
    %1389 = vmatprep.subr.mxu0 0.0
    %1390 = vmatpush1.msra.mxu0 0.0
    %1391 = vmatprep.subr.mxu0 0.0
    %1392 = vmatpush1.msra.mxu0 0.0
    %1393 = vmatprep.subr.mxu0 0.0
    %1394 = vmatpush1.msra.mxu0 0.0
    %1395 = vmatprep.subr.mxu0 0.0
    %1396 = vmatpush1.msra.mxu0 0.0
    %1397 = vmatprep.subr.mxu0 0.0
    %1398 = vmatpush1.msra.mxu0 0.0
    %1399 = vmatprep.mubr.f32.mxu0 0.0
    %v1400 = vand.u32 %v844, 4294901760
    %1401 = vmatmul.mubr.f32.gmra.mrb[0].mxu0 %v1400
    %v1402 = vpop.f32.mrb[0].mxu0
    %v1403 = vadd.f32 %v1284, %v1402
    %v1404 = vpop.f32.mrb[0].mxu0
    %1405 = vmatprep.mubr.f32.mxu0 0.0
    %v1406 = vand.u32 %v847, 4294901760
    %1407 = vmatmul.mubr.f32.gmra.mrb[0].mxu0 %v1406
    %v1408 = vpop.f32.mrb[0].mxu0
    %v1409 = vadd.f32 %v1292, %v1408
    %v1410 = vpop.f32.mrb[0].mxu0
    %1411 = vmatprep.mubr.f32.mxu0 0.0
    %v1412 = vand.u32 %v850, 4294901760
    %1413 = vmatmul.mubr.f32.gmra.mrb[0].mxu0 %v1412
    %v1414 = vpop.f32.mrb[0].mxu0
    %v1415 = vadd.f32 %v1300, %v1414
    %v1416 = vpop.f32.mrb[0].mxu0
    %1417 = vmatprep.mubr.f32.mxu0 0.0
    %v1418 = vand.u32 %v853, 4294901760
    %1419 = vmatmul.mubr.f32.gmra.mrb[0].mxu0 %v1418
    %v1420 = vpop.f32.mrb[0].mxu0
    %v1421 = vadd.f32 %v1308, %v1420
    %v1422 = vpop.f32.mrb[0].mxu0
    %1423 = vdwg.mxu0
    %1424 = vmatprep.subr.mxu0 0.0
    %v1425 = vand.u32 %v828, 4294901760
    %1426 = vmatpush1.msra.mxu0 %v1425
    %1427 = vmatprep.subr.mxu0 0.0
    %v1428 = vand.u32 %v829, 4294901760
    %1429 = vmatpush1.msra.mxu0 %v1428
    %1430 = vmatprep.subr.mxu0 0.0
    %v1431 = vand.u32 %v830, 4294901760
    %1432 = vmatpush1.msra.mxu0 %v1431
    %1433 = vmatprep.subr.mxu0 0.0
    %v1434 = vand.u32 %v831, 4294901760
    %1435 = vmatpush1.msra.mxu0 %v1434
    %1436 = vmatprep.subr.mxu0 0.0
    %v1437 = vand.u32 %v832, 4294901760
    %1438 = vmatpush1.msra.mxu0 %v1437
    %1439 = vmatprep.subr.mxu0 0.0
    %v1440 = vand.u32 %v833, 4294901760
    %1441 = vmatpush1.msra.mxu0 %v1440
    %1442 = vmatprep.subr.mxu0 0.0
    %v1443 = vand.u32 %v834, 4294901760
    %1444 = vmatpush1.msra.mxu0 %v1443
    %1445 = vmatprep.subr.mxu0 0.0
    %v1446 = vand.u32 %v835, 4294901760
    %1447 = vmatpush1.msra.mxu0 %v1446
    %1448 = vmatprep.subr.mxu0 0.0
    %1449 = vmatpush1.msra.mxu0 0.0
    %1450 = vmatprep.subr.mxu0 0.0
    %1451 = vmatpush1.msra.mxu0 0.0
    %1452 = vmatprep.subr.mxu0 0.0
    %1453 = vmatpush1.msra.mxu0 0.0
    %1454 = vmatprep.subr.mxu0 0.0
    %1455 = vmatpush1.msra.mxu0 0.0
    %1456 = vmatprep.subr.mxu0 0.0
    %1457 = vmatpush1.msra.mxu0 0.0
    %1458 = vmatprep.subr.mxu0 0.0
    %1459 = vmatpush1.msra.mxu0 0.0
    %1460 = vmatprep.subr.mxu0 0.0
    %1461 = vmatpush1.msra.mxu0 0.0
    %1462 = vmatprep.subr.mxu0 0.0
    %1463 = vmatpush1.msra.mxu0 0.0
    %1464 = vmatprep.subr.mxu0 0.0
    %1465 = vmatpush1.msra.mxu0 0.0
    %1466 = vmatprep.subr.mxu0 0.0
    %1467 = vmatpush1.msra.mxu0 0.0
    %1468 = vmatprep.subr.mxu0 0.0
    %1469 = vmatpush1.msra.mxu0 0.0
    %1470 = vmatprep.subr.mxu0 0.0
    %1471 = vmatpush1.msra.mxu0 0.0
    %1472 = vmatprep.subr.mxu0 0.0
    %1473 = vmatpush1.msra.mxu0 0.0
    %1474 = vmatprep.subr.mxu0 0.0
    %1475 = vmatpush1.msra.mxu0 0.0
    %1476 = vmatprep.subr.mxu0 0.0
    %1477 = vmatpush1.msra.mxu0 0.0
    %1478 = vmatprep.subr.mxu0 0.0
    %1479 = vmatpush1.msra.mxu0 0.0
    %1480 = vmatprep.subr.mxu0 0.0
    %1481 = vmatpush1.msra.mxu0 0.0
    %1482 = vmatprep.subr.mxu0 0.0
    %1483 = vmatpush1.msra.mxu0 0.0
    %1484 = vmatprep.subr.mxu0 0.0
    %1485 = vmatpush1.msra.mxu0 0.0
    %1486 = vmatprep.subr.mxu0 0.0
    %1487 = vmatpush1.msra.mxu0 0.0
    %1488 = vmatprep.subr.mxu0 0.0
    %1489 = vmatpush1.msra.mxu0 0.0
    %1490 = vmatprep.subr.mxu0 0.0
    %1491 = vmatpush1.msra.mxu0 0.0
    %1492 = vmatprep.subr.mxu0 0.0
    %1493 = vmatpush1.msra.mxu0 0.0
    %1494 = vmatprep.subr.mxu0 0.0
    %1495 = vmatpush1.msra.mxu0 0.0
    %1496 = vmatprep.mubr.f32.mxu0 0.0
    %v1497 = vand.u32 %v844, 4294901760
    %1498 = vmatmul.mubr.f32.gmra.mrb[0].mxu0 %v1497
    %v1499 = vpop.f32.mrb[0].mxu0
    %v1500 = vadd.f32 %v1403, %v1499
    %v1501 = vpop.f32.mrb[0].mxu0
    %1502 = vmatprep.mubr.f32.mxu0 0.0
    %v1503 = vand.u32 %v847, 4294901760
    %1504 = vmatmul.mubr.f32.gmra.mrb[0].mxu0 %v1503
    %v1505 = vpop.f32.mrb[0].mxu0
    %v1506 = vadd.f32 %v1409, %v1505
    %v1507 = vpop.f32.mrb[0].mxu0
    %1508 = vmatprep.mubr.f32.mxu0 0.0
    %v1509 = vand.u32 %v850, 4294901760
    %1510 = vmatmul.mubr.f32.gmra.mrb[0].mxu0 %v1509
    %v1511 = vpop.f32.mrb[0].mxu0
    %v1512 = vadd.f32 %v1415, %v1511
    %v1513 = vpop.f32.mrb[0].mxu0
    %1514 = vmatprep.mubr.f32.mxu0 0.0
    %v1515 = vand.u32 %v853, 4294901760
    %1516 = vmatmul.mubr.f32.gmra.mrb[0].mxu0 %v1515
    %v1517 = vpop.f32.mrb[0].mxu0
    %v1518 = vadd.f32 %v1421, %v1517
    %v1519 = vpop.f32.mrb[0].mxu0
    %1520 = vdwg.mxu0
    %v1521 = vld [vmem:[%s8] sm:$0xff]
    %v1522 = vld [vmem:[%s8 + $0x8] sm:$0xff]
    %v1523 = vld [vmem:[%s8 + $0x10] sm:$0xff]
    %v1524 = vld [vmem:[%s8 + $0x18] sm:$0xff]
    %v1525 = vld [vmem:[%s8 + $0x20] sm:$0xff]
    %v1526 = vld [vmem:[%s8 + $0x28] sm:$0xff]
    %v1527 = vld [vmem:[%s8 + $0x30] sm:$0xff]
    %v1528 = vld [vmem:[%s8 + $0x38] sm:$0xff]
    %v1529 = vld [vmem:[%s9] sm:$0x1]
    %v1531 = vlaneseq
    %v1532 = vshrl.u32 %v1531, 7
    %v1533 = vsub.s32 0, %v1532
    %v1534 = vrot.slane %v1529, %v1533
    %v1538 = vsel %vm742, %v827, %v820
    %v1539 = vsel %vm99, %v1538, 0
    %1541 = vmatprep.subr.mxu0 0.0
    %v1542 = vand.u32 %v1521, 4294901760
    %1543 = vmatpush1.msra.mxu0 %v1542
    %1544 = vmatprep.subr.mxu0 0.0
    %v1545 = vand.u32 %v1522, 4294901760
    %1546 = vmatpush1.msra.mxu0 %v1545
    %1547 = vmatprep.subr.mxu0 0.0
    %v1548 = vand.u32 %v1523, 4294901760
    %1549 = vmatpush1.msra.mxu0 %v1548
    %1550 = vmatprep.subr.mxu0 0.0
    %v1551 = vand.u32 %v1524, 4294901760
    %1552 = vmatpush1.msra.mxu0 %v1551
    %1553 = vmatprep.subr.mxu0 0.0
    %v1554 = vand.u32 %v1525, 4294901760
    %1555 = vmatpush1.msra.mxu0 %v1554
    %1556 = vmatprep.subr.mxu0 0.0
    %v1557 = vand.u32 %v1526, 4294901760
    %1558 = vmatpush1.msra.mxu0 %v1557
    %1559 = vmatprep.subr.mxu0 0.0
    %v1560 = vand.u32 %v1527, 4294901760
    %1561 = vmatpush1.msra.mxu0 %v1560
    %1562 = vmatprep.subr.mxu0 0.0
    %v1563 = vand.u32 %v1528, 4294901760
    %1564 = vmatpush1.msra.mxu0 %v1563
    %1565 = vmatprep.subr.mxu0 0.0
    %1566 = vmatpush1.msra.mxu0 0.0
    %1567 = vmatprep.subr.mxu0 0.0
    %1568 = vmatpush1.msra.mxu0 0.0
    %1569 = vmatprep.subr.mxu0 0.0
    %1570 = vmatpush1.msra.mxu0 0.0
    %1571 = vmatprep.subr.mxu0 0.0
    %1572 = vmatpush1.msra.mxu0 0.0
    %1573 = vmatprep.subr.mxu0 0.0
    %1574 = vmatpush1.msra.mxu0 0.0
    %1575 = vmatprep.subr.mxu0 0.0
    %1576 = vmatpush1.msra.mxu0 0.0
    %1577 = vmatprep.subr.mxu0 0.0
    %1578 = vmatpush1.msra.mxu0 0.0
    %1579 = vmatprep.subr.mxu0 0.0
    %1580 = vmatpush1.msra.mxu0 0.0
    %1581 = vmatprep.subr.mxu0 0.0
    %1582 = vmatpush1.msra.mxu0 0.0
    %1583 = vmatprep.subr.mxu0 0.0
    %1584 = vmatpush1.msra.mxu0 0.0
    %1585 = vmatprep.subr.mxu0 0.0
    %1586 = vmatpush1.msra.mxu0 0.0
    %1587 = vmatprep.subr.mxu0 0.0
    %1588 = vmatpush1.msra.mxu0 0.0
    %1589 = vmatprep.subr.mxu0 0.0
    %1590 = vmatpush1.msra.mxu0 0.0
    %1591 = vmatprep.subr.mxu0 0.0
    %1592 = vmatpush1.msra.mxu0 0.0
    %1593 = vmatprep.subr.mxu0 0.0
    %1594 = vmatpush1.msra.mxu0 0.0
    %1595 = vmatprep.subr.mxu0 0.0
    %1596 = vmatpush1.msra.mxu0 0.0
    %1597 = vmatprep.subr.mxu0 0.0
    %1598 = vmatpush1.msra.mxu0 0.0
    %1599 = vmatprep.subr.mxu0 0.0
    %1600 = vmatpush1.msra.mxu0 0.0
    %1601 = vmatprep.subr.mxu0 0.0
    %1602 = vmatpush1.msra.mxu0 0.0
    %1603 = vmatprep.subr.mxu0 0.0
    %1604 = vmatpush1.msra.mxu0 0.0
    %1605 = vmatprep.subr.mxu0 0.0
    %1606 = vmatpush1.msra.mxu0 0.0
    %1607 = vmatprep.subr.mxu0 0.0
    %1608 = vmatpush1.msra.mxu0 0.0
    %1609 = vmatprep.subr.mxu0 0.0
    %1610 = vmatpush1.msra.mxu0 0.0
    %1611 = vmatprep.subr.mxu0 0.0
    %1612 = vmatpush1.msra.mxu0 0.0
    %1613 = vmatprep.mubr.f32.mxu0 0.0
    %v1614 = vand.u32 %v1539, 4294901760
    %v1615 = vsub.f32 %v1539, %v1614
    %v1616 = vand.u32 %v1615, 4294901760
    %v1617 = vsub.f32 %v1615, %v1616
    %v1618 = vand.u32 %v1617, 4294901760
    %1619 = vmatmul.mubr.f32.gmra.mrb[0].mxu0 %v1618
    %v1620 = vpop.f32.mrb[0].mxu0
    %v1621 = vadd.f32 %v1534, %v1620
    %v1622 = vpop.f32.mrb[0].mxu0
    %1623 = vdwg.mxu0
    %1624 = vmatprep.subr.mxu0 0.0
    %v1625 = vand.u32 %v1521, 4294901760
    %v1626 = vsub.f32 %v1521, %v1625
    %v1627 = vand.u32 %v1626, 4294901760
    %v1628 = vsub.f32 %v1626, %v1627
    %v1629 = vand.u32 %v1628, 4294901760
    %1630 = vmatpush1.msra.mxu0 %v1629
    %1631 = vmatprep.subr.mxu0 0.0
    %v1632 = vand.u32 %v1522, 4294901760
    %v1633 = vsub.f32 %v1522, %v1632
    %v1634 = vand.u32 %v1633, 4294901760
    %v1635 = vsub.f32 %v1633, %v1634
    %v1636 = vand.u32 %v1635, 4294901760
    %1637 = vmatpush1.msra.mxu0 %v1636
    %1638 = vmatprep.subr.mxu0 0.0
    %v1639 = vand.u32 %v1523, 4294901760
    %v1640 = vsub.f32 %v1523, %v1639
    %v1641 = vand.u32 %v1640, 4294901760
    %v1642 = vsub.f32 %v1640, %v1641
    %v1643 = vand.u32 %v1642, 4294901760
    %1644 = vmatpush1.msra.mxu0 %v1643
    %1645 = vmatprep.subr.mxu0 0.0
    %v1646 = vand.u32 %v1524, 4294901760
    %v1647 = vsub.f32 %v1524, %v1646
    %v1648 = vand.u32 %v1647, 4294901760
    %v1649 = vsub.f32 %v1647, %v1648
    %v1650 = vand.u32 %v1649, 4294901760
    %1651 = vmatpush1.msra.mxu0 %v1650
    %1652 = vmatprep.subr.mxu0 0.0
    %v1653 = vand.u32 %v1525, 4294901760
    %v1654 = vsub.f32 %v1525, %v1653
    %v1655 = vand.u32 %v1654, 4294901760
    %v1656 = vsub.f32 %v1654, %v1655
    %v1657 = vand.u32 %v1656, 4294901760
    %1658 = vmatpush1.msra.mxu0 %v1657
    %1659 = vmatprep.subr.mxu0 0.0
    %v1660 = vand.u32 %v1526, 4294901760
    %v1661 = vsub.f32 %v1526, %v1660
    %v1662 = vand.u32 %v1661, 4294901760
    %v1663 = vsub.f32 %v1661, %v1662
    %v1664 = vand.u32 %v1663, 4294901760
    %1665 = vmatpush1.msra.mxu0 %v1664
    %1666 = vmatprep.subr.mxu0 0.0
    %v1667 = vand.u32 %v1527, 4294901760
    %v1668 = vsub.f32 %v1527, %v1667
    %v1669 = vand.u32 %v1668, 4294901760
    %v1670 = vsub.f32 %v1668, %v1669
    %v1671 = vand.u32 %v1670, 4294901760
    %1672 = vmatpush1.msra.mxu0 %v1671
    %1673 = vmatprep.subr.mxu0 0.0
    %v1674 = vand.u32 %v1528, 4294901760
    %v1675 = vsub.f32 %v1528, %v1674
    %v1676 = vand.u32 %v1675, 4294901760
    %v1677 = vsub.f32 %v1675, %v1676
    %v1678 = vand.u32 %v1677, 4294901760
    %1679 = vmatpush1.msra.mxu0 %v1678
    %1680 = vmatprep.subr.mxu0 0.0
    %1681 = vmatpush1.msra.mxu0 0.0
    %1682 = vmatprep.subr.mxu0 0.0
    %1683 = vmatpush1.msra.mxu0 0.0
    %1684 = vmatprep.subr.mxu0 0.0
    %1685 = vmatpush1.msra.mxu0 0.0
    %1686 = vmatprep.subr.mxu0 0.0
    %1687 = vmatpush1.msra.mxu0 0.0
    %1688 = vmatprep.subr.mxu0 0.0
    %1689 = vmatpush1.msra.mxu0 0.0
    %1690 = vmatprep.subr.mxu0 0.0
    %1691 = vmatpush1.msra.mxu0 0.0
    %1692 = vmatprep.subr.mxu0 0.0
    %1693 = vmatpush1.msra.mxu0 0.0
    %1694 = vmatprep.subr.mxu0 0.0
    %1695 = vmatpush1.msra.mxu0 0.0
    %1696 = vmatprep.subr.mxu0 0.0
    %1697 = vmatpush1.msra.mxu0 0.0
    %1698 = vmatprep.subr.mxu0 0.0
    %1699 = vmatpush1.msra.mxu0 0.0
    %1700 = vmatprep.subr.mxu0 0.0
    %1701 = vmatpush1.msra.mxu0 0.0
    %1702 = vmatprep.subr.mxu0 0.0
    %1703 = vmatpush1.msra.mxu0 0.0
    %1704 = vmatprep.subr.mxu0 0.0
    %1705 = vmatpush1.msra.mxu0 0.0
    %1706 = vmatprep.subr.mxu0 0.0
    %1707 = vmatpush1.msra.mxu0 0.0
    %1708 = vmatprep.subr.mxu0 0.0
    %1709 = vmatpush1.msra.mxu0 0.0
    %1710 = vmatprep.subr.mxu0 0.0
    %1711 = vmatpush1.msra.mxu0 0.0
    %1712 = vmatprep.subr.mxu0 0.0
    %1713 = vmatpush1.msra.mxu0 0.0
    %1714 = vmatprep.subr.mxu0 0.0
    %1715 = vmatpush1.msra.mxu0 0.0
    %1716 = vmatprep.subr.mxu0 0.0
    %1717 = vmatpush1.msra.mxu0 0.0
    %1718 = vmatprep.subr.mxu0 0.0
    %1719 = vmatpush1.msra.mxu0 0.0
    %1720 = vmatprep.subr.mxu0 0.0
    %1721 = vmatpush1.msra.mxu0 0.0
    %1722 = vmatprep.subr.mxu0 0.0
    %1723 = vmatpush1.msra.mxu0 0.0
    %1724 = vmatprep.subr.mxu0 0.0
    %1725 = vmatpush1.msra.mxu0 0.0
    %1726 = vmatprep.subr.mxu0 0.0
    %1727 = vmatpush1.msra.mxu0 0.0
    %1728 = vmatprep.mubr.f32.mxu0 0.0
    %v1729 = vand.u32 %v1539, 4294901760
    %1730 = vmatmul.mubr.f32.gmra.mrb[0].mxu0 %v1729
    %v1731 = vpop.f32.mrb[0].mxu0
    %v1732 = vadd.f32 %v1621, %v1731
    %v1733 = vpop.f32.mrb[0].mxu0
    %1734 = vdwg.mxu0
    %1735 = vmatprep.subr.mxu0 0.0
    %v1736 = vand.u32 %v1521, 4294901760
    %v1737 = vsub.f32 %v1521, %v1736
    %1738 = vmatpush1.msra.mxu0 %v1737
    %1739 = vmatprep.subr.mxu0 0.0
    %v1740 = vand.u32 %v1522, 4294901760
    %v1741 = vsub.f32 %v1522, %v1740
    %1742 = vmatpush1.msra.mxu0 %v1741
    %1743 = vmatprep.subr.mxu0 0.0
    %v1744 = vand.u32 %v1523, 4294901760
    %v1745 = vsub.f32 %v1523, %v1744
    %1746 = vmatpush1.msra.mxu0 %v1745
    %1747 = vmatprep.subr.mxu0 0.0
    %v1748 = vand.u32 %v1524, 4294901760
    %v1749 = vsub.f32 %v1524, %v1748
    %1750 = vmatpush1.msra.mxu0 %v1749
    %1751 = vmatprep.subr.mxu0 0.0
    %v1752 = vand.u32 %v1525, 4294901760
    %v1753 = vsub.f32 %v1525, %v1752
    %1754 = vmatpush1.msra.mxu0 %v1753
    %1755 = vmatprep.subr.mxu0 0.0
    %v1756 = vand.u32 %v1526, 4294901760
    %v1757 = vsub.f32 %v1526, %v1756
    %1758 = vmatpush1.msra.mxu0 %v1757
    %1759 = vmatprep.subr.mxu0 0.0
    %v1760 = vand.u32 %v1527, 4294901760
    %v1761 = vsub.f32 %v1527, %v1760
    %1762 = vmatpush1.msra.mxu0 %v1761
    %1763 = vmatprep.subr.mxu0 0.0
    %v1764 = vand.u32 %v1528, 4294901760
    %v1765 = vsub.f32 %v1528, %v1764
    %1766 = vmatpush1.msra.mxu0 %v1765
    %1767 = vmatprep.subr.mxu0 0.0
    %1768 = vmatpush1.msra.mxu0 0.0
    %1769 = vmatprep.subr.mxu0 0.0
    %1770 = vmatpush1.msra.mxu0 0.0
    %1771 = vmatprep.subr.mxu0 0.0
    %1772 = vmatpush1.msra.mxu0 0.0
    %1773 = vmatprep.subr.mxu0 0.0
    %1774 = vmatpush1.msra.mxu0 0.0
    %1775 = vmatprep.subr.mxu0 0.0
    %1776 = vmatpush1.msra.mxu0 0.0
    %1777 = vmatprep.subr.mxu0 0.0
    %1778 = vmatpush1.msra.mxu0 0.0
    %1779 = vmatprep.subr.mxu0 0.0
    %1780 = vmatpush1.msra.mxu0 0.0
    %1781 = vmatprep.subr.mxu0 0.0
    %1782 = vmatpush1.msra.mxu0 0.0
    %1783 = vmatprep.subr.mxu0 0.0
    %1784 = vmatpush1.msra.mxu0 0.0
    %1785 = vmatprep.subr.mxu0 0.0
    %1786 = vmatpush1.msra.mxu0 0.0
    %1787 = vmatprep.subr.mxu0 0.0
    %1788 = vmatpush1.msra.mxu0 0.0
    %1789 = vmatprep.subr.mxu0 0.0
    %1790 = vmatpush1.msra.mxu0 0.0
    %1791 = vmatprep.subr.mxu0 0.0
    %1792 = vmatpush1.msra.mxu0 0.0
    %1793 = vmatprep.subr.mxu0 0.0
    %1794 = vmatpush1.msra.mxu0 0.0
    %1795 = vmatprep.subr.mxu0 0.0
    %1796 = vmatpush1.msra.mxu0 0.0
    %1797 = vmatprep.subr.mxu0 0.0
    %1798 = vmatpush1.msra.mxu0 0.0
    %1799 = vmatprep.subr.mxu0 0.0
    %1800 = vmatpush1.msra.mxu0 0.0
    %1801 = vmatprep.subr.mxu0 0.0
    %1802 = vmatpush1.msra.mxu0 0.0
    %1803 = vmatprep.subr.mxu0 0.0
    %1804 = vmatpush1.msra.mxu0 0.0
    %1805 = vmatprep.subr.mxu0 0.0
    %1806 = vmatpush1.msra.mxu0 0.0
    %1807 = vmatprep.subr.mxu0 0.0
    %1808 = vmatpush1.msra.mxu0 0.0
    %1809 = vmatprep.subr.mxu0 0.0
    %1810 = vmatpush1.msra.mxu0 0.0
    %1811 = vmatprep.subr.mxu0 0.0
    %1812 = vmatpush1.msra.mxu0 0.0
    %1813 = vmatprep.subr.mxu0 0.0
    %1814 = vmatpush1.msra.mxu0 0.0
    %1815 = vmatprep.mubr.f32.mxu0 0.0
    %v1816 = vand.u32 %v1539, 4294901760
    %v1817 = vsub.f32 %v1539, %v1816
    %1818 = vmatmul.mubr.f32.gmra.mrb[0].mxu0 %v1817
    %v1819 = vpop.f32.mrb[0].mxu0
    %v1820 = vadd.f32 %v1732, %v1819
    %v1821 = vpop.f32.mrb[0].mxu0
    %1822 = vdwg.mxu0
    %1823 = vmatprep.subr.mxu0 0.0
    %v1824 = vand.u32 %v1521, 4294901760
    %1825 = vmatpush1.msra.mxu0 %v1824
    %1826 = vmatprep.subr.mxu0 0.0
    %v1827 = vand.u32 %v1522, 4294901760
    %1828 = vmatpush1.msra.mxu0 %v1827
    %1829 = vmatprep.subr.mxu0 0.0
    %v1830 = vand.u32 %v1523, 4294901760
    %1831 = vmatpush1.msra.mxu0 %v1830
    %1832 = vmatprep.subr.mxu0 0.0
    %v1833 = vand.u32 %v1524, 4294901760
    %1834 = vmatpush1.msra.mxu0 %v1833
    %1835 = vmatprep.subr.mxu0 0.0
    %v1836 = vand.u32 %v1525, 4294901760
    %1837 = vmatpush1.msra.mxu0 %v1836
    %1838 = vmatprep.subr.mxu0 0.0
    %v1839 = vand.u32 %v1526, 4294901760
    %1840 = vmatpush1.msra.mxu0 %v1839
    %1841 = vmatprep.subr.mxu0 0.0
    %v1842 = vand.u32 %v1527, 4294901760
    %1843 = vmatpush1.msra.mxu0 %v1842
    %1844 = vmatprep.subr.mxu0 0.0
    %v1845 = vand.u32 %v1528, 4294901760
    %1846 = vmatpush1.msra.mxu0 %v1845
    %1847 = vmatprep.subr.mxu0 0.0
    %1848 = vmatpush1.msra.mxu0 0.0
    %1849 = vmatprep.subr.mxu0 0.0
    %1850 = vmatpush1.msra.mxu0 0.0
    %1851 = vmatprep.subr.mxu0 0.0
    %1852 = vmatpush1.msra.mxu0 0.0
    %1853 = vmatprep.subr.mxu0 0.0
    %1854 = vmatpush1.msra.mxu0 0.0
    %1855 = vmatprep.subr.mxu0 0.0
    %1856 = vmatpush1.msra.mxu0 0.0
    %1857 = vmatprep.subr.mxu0 0.0
    %1858 = vmatpush1.msra.mxu0 0.0
    %1859 = vmatprep.subr.mxu0 0.0
    %1860 = vmatpush1.msra.mxu0 0.0
    %1861 = vmatprep.subr.mxu0 0.0
    %1862 = vmatpush1.msra.mxu0 0.0
    %1863 = vmatprep.subr.mxu0 0.0
    %1864 = vmatpush1.msra.mxu0 0.0
    %1865 = vmatprep.subr.mxu0 0.0
    %1866 = vmatpush1.msra.mxu0 0.0
    %1867 = vmatprep.subr.mxu0 0.0
    %1868 = vmatpush1.msra.mxu0 0.0
    %1869 = vmatprep.subr.mxu0 0.0
    %1870 = vmatpush1.msra.mxu0 0.0
    %1871 = vmatprep.subr.mxu0 0.0
    %1872 = vmatpush1.msra.mxu0 0.0
    %1873 = vmatprep.subr.mxu0 0.0
    %1874 = vmatpush1.msra.mxu0 0.0
    %1875 = vmatprep.subr.mxu0 0.0
    %1876 = vmatpush1.msra.mxu0 0.0
    %1877 = vmatprep.subr.mxu0 0.0
    %1878 = vmatpush1.msra.mxu0 0.0
    %1879 = vmatprep.subr.mxu0 0.0
    %1880 = vmatpush1.msra.mxu0 0.0
    %1881 = vmatprep.subr.mxu0 0.0
    %1882 = vmatpush1.msra.mxu0 0.0
    %1883 = vmatprep.subr.mxu0 0.0
    %1884 = vmatpush1.msra.mxu0 0.0
    %1885 = vmatprep.subr.mxu0 0.0
    %1886 = vmatpush1.msra.mxu0 0.0
    %1887 = vmatprep.subr.mxu0 0.0
    %1888 = vmatpush1.msra.mxu0 0.0
    %1889 = vmatprep.subr.mxu0 0.0
    %1890 = vmatpush1.msra.mxu0 0.0
    %1891 = vmatprep.subr.mxu0 0.0
    %1892 = vmatpush1.msra.mxu0 0.0
    %1893 = vmatprep.subr.mxu0 0.0
    %1894 = vmatpush1.msra.mxu0 0.0
    %1895 = vmatprep.mubr.f32.mxu0 0.0
    %v1896 = vand.u32 %v1539, 4294901760
    %v1897 = vsub.f32 %v1539, %v1896
    %v1898 = vand.u32 %v1897, 4294901760
    %1899 = vmatmul.mubr.f32.gmra.mrb[0].mxu0 %v1898
    %v1900 = vpop.f32.mrb[0].mxu0
    %v1901 = vadd.f32 %v1820, %v1900
    %v1902 = vpop.f32.mrb[0].mxu0
    %1903 = vdwg.mxu0
    %1904 = vmatprep.subr.mxu0 0.0
    %v1905 = vand.u32 %v1521, 4294901760
    %v1906 = vsub.f32 %v1521, %v1905
    %v1907 = vand.u32 %v1906, 4294901760
    %1908 = vmatpush1.msra.mxu0 %v1907
    %1909 = vmatprep.subr.mxu0 0.0
    %v1910 = vand.u32 %v1522, 4294901760
    %v1911 = vsub.f32 %v1522, %v1910
    %v1912 = vand.u32 %v1911, 4294901760
    %1913 = vmatpush1.msra.mxu0 %v1912
    %1914 = vmatprep.subr.mxu0 0.0
    %v1915 = vand.u32 %v1523, 4294901760
    %v1916 = vsub.f32 %v1523, %v1915
    %v1917 = vand.u32 %v1916, 4294901760
    %1918 = vmatpush1.msra.mxu0 %v1917
    %1919 = vmatprep.subr.mxu0 0.0
    %v1920 = vand.u32 %v1524, 4294901760
    %v1921 = vsub.f32 %v1524, %v1920
    %v1922 = vand.u32 %v1921, 4294901760
    %1923 = vmatpush1.msra.mxu0 %v1922
    %1924 = vmatprep.subr.mxu0 0.0
    %v1925 = vand.u32 %v1525, 4294901760
    %v1926 = vsub.f32 %v1525, %v1925
    %v1927 = vand.u32 %v1926, 4294901760
    %1928 = vmatpush1.msra.mxu0 %v1927
    %1929 = vmatprep.subr.mxu0 0.0
    %v1930 = vand.u32 %v1526, 4294901760
    %v1931 = vsub.f32 %v1526, %v1930
    %v1932 = vand.u32 %v1931, 4294901760
    %1933 = vmatpush1.msra.mxu0 %v1932
    %1934 = vmatprep.subr.mxu0 0.0
    %v1935 = vand.u32 %v1527, 4294901760
    %v1936 = vsub.f32 %v1527, %v1935
    %v1937 = vand.u32 %v1936, 4294901760
    %1938 = vmatpush1.msra.mxu0 %v1937
    %1939 = vmatprep.subr.mxu0 0.0
    %v1940 = vand.u32 %v1528, 4294901760
    %v1941 = vsub.f32 %v1528, %v1940
    %v1942 = vand.u32 %v1941, 4294901760
    %1943 = vmatpush1.msra.mxu0 %v1942
    %1944 = vmatprep.subr.mxu0 0.0
    %1945 = vmatpush1.msra.mxu0 0.0
    %1946 = vmatprep.subr.mxu0 0.0
    %1947 = vmatpush1.msra.mxu0 0.0
    %1948 = vmatprep.subr.mxu0 0.0
    %1949 = vmatpush1.msra.mxu0 0.0
    %1950 = vmatprep.subr.mxu0 0.0
    %1951 = vmatpush1.msra.mxu0 0.0
    %1952 = vmatprep.subr.mxu0 0.0
    %1953 = vmatpush1.msra.mxu0 0.0
    %1954 = vmatprep.subr.mxu0 0.0
    %1955 = vmatpush1.msra.mxu0 0.0
    %1956 = vmatprep.subr.mxu0 0.0
    %1957 = vmatpush1.msra.mxu0 0.0
    %1958 = vmatprep.subr.mxu0 0.0
    %1959 = vmatpush1.msra.mxu0 0.0
    %1960 = vmatprep.subr.mxu0 0.0
    %1961 = vmatpush1.msra.mxu0 0.0
    %1962 = vmatprep.subr.mxu0 0.0
    %1963 = vmatpush1.msra.mxu0 0.0
    %1964 = vmatprep.subr.mxu0 0.0
    %1965 = vmatpush1.msra.mxu0 0.0
    %1966 = vmatprep.subr.mxu0 0.0
    %1967 = vmatpush1.msra.mxu0 0.0
    %1968 = vmatprep.subr.mxu0 0.0
    %1969 = vmatpush1.msra.mxu0 0.0
    %1970 = vmatprep.subr.mxu0 0.0
    %1971 = vmatpush1.msra.mxu0 0.0
    %1972 = vmatprep.subr.mxu0 0.0
    %1973 = vmatpush1.msra.mxu0 0.0
    %1974 = vmatprep.subr.mxu0 0.0
    %1975 = vmatpush1.msra.mxu0 0.0
    %1976 = vmatprep.subr.mxu0 0.0
    %1977 = vmatpush1.msra.mxu0 0.0
    %1978 = vmatprep.subr.mxu0 0.0
    %1979 = vmatpush1.msra.mxu0 0.0
    %1980 = vmatprep.subr.mxu0 0.0
    %1981 = vmatpush1.msra.mxu0 0.0
    %1982 = vmatprep.subr.mxu0 0.0
    %1983 = vmatpush1.msra.mxu0 0.0
    %1984 = vmatprep.subr.mxu0 0.0
    %1985 = vmatpush1.msra.mxu0 0.0
    %1986 = vmatprep.subr.mxu0 0.0
    %1987 = vmatpush1.msra.mxu0 0.0
    %1988 = vmatprep.subr.mxu0 0.0
    %1989 = vmatpush1.msra.mxu0 0.0
    %1990 = vmatprep.subr.mxu0 0.0
    %1991 = vmatpush1.msra.mxu0 0.0
    %1992 = vmatprep.mubr.f32.mxu0 0.0
    %v1993 = vand.u32 %v1539, 4294901760
    %1994 = vmatmul.mubr.f32.gmra.mrb[0].mxu0 %v1993
    %v1995 = vpop.f32.mrb[0].mxu0
    %v1996 = vadd.f32 %v1901, %v1995
    %v1997 = vpop.f32.mrb[0].mxu0
    %1998 = vdwg.mxu0
    %1999 = vmatprep.subr.mxu0 0.0
    %v2000 = vand.u32 %v1521, 4294901760
    %2001 = vmatpush1.msra.mxu0 %v2000
    %2002 = vmatprep.subr.mxu0 0.0
    %v2003 = vand.u32 %v1522, 4294901760
    %2004 = vmatpush1.msra.mxu0 %v2003
    %2005 = vmatprep.subr.mxu0 0.0
    %v2006 = vand.u32 %v1523, 4294901760
    %2007 = vmatpush1.msra.mxu0 %v2006
    %2008 = vmatprep.subr.mxu0 0.0
    %v2009 = vand.u32 %v1524, 4294901760
    %2010 = vmatpush1.msra.mxu0 %v2009
    %2011 = vmatprep.subr.mxu0 0.0
    %v2012 = vand.u32 %v1525, 4294901760
    %2013 = vmatpush1.msra.mxu0 %v2012
    %2014 = vmatprep.subr.mxu0 0.0
    %v2015 = vand.u32 %v1526, 4294901760
    %2016 = vmatpush1.msra.mxu0 %v2015
    %2017 = vmatprep.subr.mxu0 0.0
    %v2018 = vand.u32 %v1527, 4294901760
    %2019 = vmatpush1.msra.mxu0 %v2018
    %2020 = vmatprep.subr.mxu0 0.0
    %v2021 = vand.u32 %v1528, 4294901760
    %2022 = vmatpush1.msra.mxu0 %v2021
    %2023 = vmatprep.subr.mxu0 0.0
    %2024 = vmatpush1.msra.mxu0 0.0
    %2025 = vmatprep.subr.mxu0 0.0
    %2026 = vmatpush1.msra.mxu0 0.0
    %2027 = vmatprep.subr.mxu0 0.0
    %2028 = vmatpush1.msra.mxu0 0.0
    %2029 = vmatprep.subr.mxu0 0.0
    %2030 = vmatpush1.msra.mxu0 0.0
    %2031 = vmatprep.subr.mxu0 0.0
    %2032 = vmatpush1.msra.mxu0 0.0
    %2033 = vmatprep.subr.mxu0 0.0
    %2034 = vmatpush1.msra.mxu0 0.0
    %2035 = vmatprep.subr.mxu0 0.0
    %2036 = vmatpush1.msra.mxu0 0.0
    %2037 = vmatprep.subr.mxu0 0.0
    %2038 = vmatpush1.msra.mxu0 0.0
    %2039 = vmatprep.subr.mxu0 0.0
    %2040 = vmatpush1.msra.mxu0 0.0
    %2041 = vmatprep.subr.mxu0 0.0
    %2042 = vmatpush1.msra.mxu0 0.0
    %2043 = vmatprep.subr.mxu0 0.0
    %2044 = vmatpush1.msra.mxu0 0.0
    %2045 = vmatprep.subr.mxu0 0.0
    %2046 = vmatpush1.msra.mxu0 0.0
    %2047 = vmatprep.subr.mxu0 0.0
    %2048 = vmatpush1.msra.mxu0 0.0
    %2049 = vmatprep.subr.mxu0 0.0
    %2050 = vmatpush1.msra.mxu0 0.0
    %2051 = vmatprep.subr.mxu0 0.0
    %2052 = vmatpush1.msra.mxu0 0.0
    %2053 = vmatprep.subr.mxu0 0.0
    %2054 = vmatpush1.msra.mxu0 0.0
    %2055 = vmatprep.subr.mxu0 0.0
    %2056 = vmatpush1.msra.mxu0 0.0
    %2057 = vmatprep.subr.mxu0 0.0
    %2058 = vmatpush1.msra.mxu0 0.0
    %2059 = vmatprep.subr.mxu0 0.0
    %2060 = vmatpush1.msra.mxu0 0.0
    %2061 = vmatprep.subr.mxu0 0.0
    %2062 = vmatpush1.msra.mxu0 0.0
    %2063 = vmatprep.subr.mxu0 0.0
    %2064 = vmatpush1.msra.mxu0 0.0
    %2065 = vmatprep.subr.mxu0 0.0
    %2066 = vmatpush1.msra.mxu0 0.0
    %2067 = vmatprep.subr.mxu0 0.0
    %2068 = vmatpush1.msra.mxu0 0.0
    %2069 = vmatprep.subr.mxu0 0.0
    %2070 = vmatpush1.msra.mxu0 0.0
    %2071 = vmatprep.mubr.f32.mxu0 0.0
    %v2072 = vand.u32 %v1539, 4294901760
    %2073 = vmatmul.mubr.f32.gmra.mrb[0].mxu0 %v2072
    %v2074 = vpop.f32.mrb[0].mxu0
    %v2075 = vadd.f32 %v1996, %v2074
    %v2076 = vpop.f32.mrb[0].mxu0
    %2077 = vdwg.mxu0
    %v2080 = vunpack.c.l.s4 1966171168
    %v2081 = vunpack.c.0.s8 %v2080
    %v2082 = vlaneseq
    %v2083 = vshrl.u32 %v2082, 7
    %v2084 = vsub.s32 %v2081, %v2083
    %v2085 = vrot.slane %v2075, %v2084
    %v2086 = vcombine.high %v2085, %v2085
    %v2088 = vunpack.c.l.s4 1966171168
    %v2089 = vunpack.c.0.s8 %v2088
    %v2090 = vlaneseq
    %v2091 = vshrl.u32 %v2090, 7
    %v2092 = vsub.s32 %v2089, %v2091
    %v2093 = vrot.slane %v2085, %v2092
    %v2095 = vunpack.c.l.s4 1966171168
    %v2096 = vunpack.c.0.s8 %v2095
    %v2097 = vlaneseq
    %v2098 = vshrl.u32 %v2097, 7
    %v2099 = vsub.s32 %v2096, %v2098
    %v2100 = vrot.slane %v2086, %v2099
    %v2101 = vlaneseq
    %v2102 = vshrl.u32 %v2101, 7
    %v2103 = vsub.s32 0, %v2102
    %v2104 = vrot.slane %v2093, %v2103
    %v2105 = vlaneseq
    %v2106 = vshrl.u32 %v2105, 7
    %v2107 = vsub.s32 0, %v2106
    %v2108 = vrot.slane %v2100, %v2107
    %v2111 = vadd.f32 %v1500, %v2104
    %v2112 = vadd.f32 %v1506, %v2104
    %v2113 = vadd.f32 %v1512, %v2108
    %v2114 = vadd.f32 %v1518, %v2108
    %v2115 = vtanh.pop %v2111
    %v2116 = vtanh.pop %v2112
    %v2117 = vtanh.pop %v2113
    %v2118 = vtanh.pop %v2114
    %v2121 = vunpack.c.l.s4 1966171168
    %v2122 = vunpack.c.0.s8 %v2121
    %v2123 = vlaneseq
    %v2124 = vshrl.u32 %v2123, 7
    %v2125 = vsub.s32 %v2122, %v2124
    %v2126 = vrot.slane %v83, %v2125
    %v2127 = vcombine.high %v2126, %v2126
    %v2129 = vunpack.c.l.s4 1966171168
    %v2130 = vunpack.c.0.s8 %v2129
    %v2131 = vlaneseq
    %v2132 = vshrl.u32 %v2131, 7
    %v2133 = vsub.s32 %v2130, %v2132
    %v2134 = vrot.slane %v2126, %v2133
    %v2136 = vunpack.c.l.s4 1966171168
    %v2137 = vunpack.c.0.s8 %v2136
    %v2138 = vlaneseq
    %v2139 = vshrl.u32 %v2138, 7
    %v2140 = vsub.s32 %v2137, %v2139
    %v2141 = vrot.slane %v2127, %v2140
    %v2142 = vlaneseq
    %v2143 = vshrl.u32 %v2142, 7
    %v2144 = vsub.s32 0, %v2143
    %v2145 = vrot.slane %v2134, %v2144
    %v2146 = vlaneseq
    %v2147 = vshrl.u32 %v2146, 7
    %v2148 = vsub.s32 0, %v2147
    %v2149 = vrot.slane %v2141, %v2148
    %v2152 = vmul.f32 %v2115, %v2145
    %v2153 = vmul.f32 %v2116, %v2145
    %v2154 = vmul.f32 %v2117, %v2149
    %v2155 = vmul.f32 %v2118, %v2149
    %v2156 = vsel %vm723, %v2152, 0.0
    %2157 = vadd.xlane.f32.xlu0 %v2156
    %v2158 = vpop.xlane.xlu0 %2157
    %v2159 = vsel %vm723, %v2153, 0.0
    %2160 = vadd.xlane.f32.xlu0 %v2159
    %v2161 = vpop.xlane.xlu0 %2160
    %v2162 = vsel %vm723, %v2154, 0.0
    %2163 = vadd.xlane.f32.xlu0 %v2162
    %v2164 = vpop.xlane.xlu0 %2163
    %v2165 = vsel %vm723, %v2155, 0.0
    %2166 = vadd.xlane.f32.xlu0 %v2165
    %v2167 = vpop.xlane.xlu0 %2166
    %v2172 = vlaneseq
    %v2173 = vshrl.u32 %v2172, 7
    %v2174 = vsub.s32 %v733, %v2173
    %v2175 = vrot.slane %v2158, %v2174
    %v2176 = vadd.s32 %v733, 4294967288
    %v2177 = vlaneseq
    %v2178 = vshrl.u32 %v2177, 7
    %v2179 = vsub.s32 %v2176, %v2178
    %v2180 = vrot.slane %v2161, %v2179
    %vm2181 = vcmask 130112
    %v2182 = vsel %vm2181, %v2180, %v2175
    %v2183 = vlaneseq
    %v2184 = vshrl.u32 %v2183, 7
    %v2185 = vsub.s32 %v733, %v2184
    %v2186 = vrot.slane %v2164, %v2185
    %v2187 = vlaneseq
    %v2188 = vshrl.u32 %v2187, 7
    %v2189 = vsub.s32 %v2176, %v2188
    %v2190 = vrot.slane %v2167, %v2189
    %v2191 = vsel %vm2181, %v2190, %v2186
    %v2192 = vsel %vm742, %v2191, %v2182
    %vm2194 = vcmask 123904
    %v2195 = vsel %vm2194, %v2192, -inf
    %2196 = vmax.xlane.f32.xlu0 %v2195
    %v2197 = vpop.xlane.xlu0 %2196
    %v2199 = vlaneseq
    %v2200 = vshrl.u32 %v2199, 7
    %v2201 = vsub.s32 0, %v2200
    %v2202 = vrot.slane %v2197, %v2201
    %v2203 = vlaneseq
    %v2204 = vshrl.u32 %v2203, 7
    %v2205 = vsub.s32 1, %v2204
    %v2206 = vrot.slane %v2197, %v2205
    %v2209 = vsub.f32 %v2158, %v2202
    %v2210 = vsub.f32 %v2161, %v2202
    %v2211 = vsub.f32 %v2164, %v2206
    %v2212 = vsub.f32 %v2167, %v2206
    %v2213 = vmul.f32 %v2209, 1.442695
    %v2214 = vpow.pop %v2213
    %v2215 = vmul.f32 %v2210, 1.442695
    %v2216 = vpow.pop %v2215
    %v2217 = vmul.f32 %v2211, 1.442695
    %v2218 = vpow.pop %v2217
    %v2219 = vmul.f32 %v2212, 1.442695
    %v2220 = vpow.pop %v2219
    %2225 = vset.pattern.permute.xlu0 0
    %2226 = vperm.xlu0 %2225, %v2214
    %v2227 = vpop.permute.xlu0 %2226
    %2228 = vset.pattern.permute.xlu0 0
    %2229 = vperm.xlu0 %2228, %v2216
    %v2230 = vpop.permute.xlu0 %2229
    %2231 = vset.pattern.permute.xlu0 0
    %2232 = vperm.xlu0 %2231, %v2218
    %v2233 = vpop.permute.xlu0 %2232
    %2234 = vset.pattern.permute.xlu0 0
    %2235 = vperm.xlu0 %2234, %v2220
    %v2236 = vpop.permute.xlu0 %2235
    %v2237 = vlaneseq
    %v2238 = vshrl.u32 %v2237, 7
    %v2239 = vsub.s32 %v733, %v2238
    %v2240 = vrot.slane %v2227, %v2239
    %v2241 = vlaneseq
    %v2242 = vshrl.u32 %v2241, 7
    %v2243 = vsub.s32 %v2176, %v2242
    %v2244 = vrot.slane %v2230, %v2243
    %v2245 = vsel %vm2181, %v2244, %v2240
    %v2246 = vlaneseq
    %v2247 = vshrl.u32 %v2246, 7
    %v2248 = vsub.s32 %v733, %v2247
    %v2249 = vrot.slane %v2233, %v2248
    %v2250 = vlaneseq
    %v2251 = vshrl.u32 %v2250, 7
    %v2252 = vsub.s32 %v2176, %v2251
    %v2253 = vrot.slane %v2236, %v2252
    %v2254 = vsel %vm2181, %v2253, %v2249
    %v2255 = vsel %vm742, %v2254, %v2245
    %v2257 = vsel %vm2194, %v2255, 0.0
    %2258 = vadd.xlane.f32.xlu0 %v2257
    %v2259 = vpop.xlane.xlu0 %2258
    %v2261 = vlaneseq
    %v2262 = vshrl.u32 %v2261, 7
    %v2263 = vsub.s32 0, %v2262
    %v2264 = vrot.slane %v2259, %v2263
    %v2265 = vlaneseq
    %v2266 = vshrl.u32 %v2265, 7
    %v2267 = vsub.s32 1, %v2266
    %v2268 = vrot.slane %v2259, %v2267
    %v2271 = vrcp.pop %v2264
    %v2272 = vmul.f32 %v2214, %v2271
    %v2273 = vmul.f32 %v2216, %v2271
    %v2274 = vrcp.pop %v2268
    %v2275 = vmul.f32 %v2218, %v2274
    %v2276 = vmul.f32 %v2220, %v2274
    %2278 = vset.pattern.permute.xlu0 0
    %2279 = vperm.xlu0 %2278, %v2272
    %v2280 = vpop.permute.xlu0 %2279
    %2283 = vset.pattern.permute.xlu0 0
    %2284 = vperm.xlu0 %2283, %v2273
    %v2285 = vpop.permute.xlu0 %2284
    %2288 = vset.pattern.permute.xlu0 0
    %2289 = vperm.xlu0 %2288, %v2275
    %v2290 = vpop.permute.xlu0 %2289
    %2293 = vset.pattern.permute.xlu0 0
    %2294 = vperm.xlu0 %2293, %v2276
    %v2295 = vpop.permute.xlu0 %2294
    %v2297 = vmul.f32 %v2280, %v76
    %v2298 = vmul.f32 %v2285, %v77
    %v2299 = vmul.f32 %v2290, %v78
    %v2300 = vmul.f32 %v2295, %v79
    %v2301 = vsel %vm99, %v2297, 0.0
    %v2302 = vsel %vm99, %v2298, 0.0
    %v2303 = vadd.f32 %v2301, %v2302
    %v2304 = vrot.slane %v2303, 4
    %v2305 = vadd.f32 %v2303, %v2304
    %v2306 = vrot.slane %v2305, 2
    %v2307 = vadd.f32 %v2305, %v2306
    %v2308 = vrot.slane %v2307, 1
    %v2309 = vadd.f32 %v2307, %v2308
    %v2310 = vsel %vm99, %v2299, 0.0
    %v2311 = vsel %vm99, %v2300, 0.0
    %v2312 = vadd.f32 %v2310, %v2311
    %v2313 = vrot.slane %v2312, 4
    %v2314 = vadd.f32 %v2312, %v2313
    %v2315 = vrot.slane %v2314, 2
    %v2316 = vadd.f32 %v2314, %v2315
    %v2317 = vrot.slane %v2316, 1
    %v2318 = vadd.f32 %v2316, %v2317
    %v2319 = vld [vmem:[%s10] sm:$0xff]
    %v2320 = vld [vmem:[%s10 + $0x8] sm:$0xff]
    %v2321 = vld [vmem:[%s10 + $0x10] sm:$0xff]
    %v2322 = vld [vmem:[%s10 + $0x18] sm:$0xff]
    %v2323 = vld [vmem:[%s10 + $0x20] sm:$0xff]
    %v2324 = vld [vmem:[%s10 + $0x28] sm:$0xff]
    %v2325 = vld [vmem:[%s10 + $0x30] sm:$0xff]
    %v2326 = vld [vmem:[%s10 + $0x38] sm:$0xff]
    %v2327 = vld [vmem:[%s10 + $0x40] sm:$0xff]
    %v2328 = vld [vmem:[%s10 + $0x48] sm:$0xff]
    %v2329 = vld [vmem:[%s10 + $0x50] sm:$0xff]
    %v2330 = vld [vmem:[%s10 + $0x58] sm:$0xff]
    %v2331 = vld [vmem:[%s10 + $0x60] sm:$0xff]
    %v2332 = vld [vmem:[%s10 + $0x68] sm:$0xff]
    %v2333 = vld [vmem:[%s10 + $0x70] sm:$0xff]
    %v2334 = vld [vmem:[%s10 + $0x78] sm:$0xff]
    %v2335 = vld [vmem:[%s12] sm:$0x3]
    %v2337 = vlaneseq
    %v2338 = vshrl.u32 %v2337, 7
    %v2339 = vsub.s32 0, %v2338
    %v2340 = vrot.slane %v2335, %v2339
    %v2341 = vlaneseq
    %v2342 = vshrl.u32 %v2341, 7
    %v2343 = vsub.s32 1, %v2342
    %v2344 = vrot.slane %v2335, %v2343
    %v2347 = vand.u32 %v2320, 4294901760
    %2348 = vmatprep.subr.mxu0 %v2347
    %v2349 = vand.u32 %v2319, 4294901760
    %2350 = vmatpush1.msra.mxu0 %v2349
    %v2351 = vand.u32 %v2322, 4294901760
    %2352 = vmatprep.subr.mxu0 %v2351
    %v2353 = vand.u32 %v2321, 4294901760
    %2354 = vmatpush1.msra.mxu0 %v2353
    %v2355 = vand.u32 %v2324, 4294901760
    %2356 = vmatprep.subr.mxu0 %v2355
    %v2357 = vand.u32 %v2323, 4294901760
    %2358 = vmatpush1.msra.mxu0 %v2357
    %v2359 = vand.u32 %v2326, 4294901760
    %2360 = vmatprep.subr.mxu0 %v2359
    %v2361 = vand.u32 %v2325, 4294901760
    %2362 = vmatpush1.msra.mxu0 %v2361
    %v2363 = vand.u32 %v2328, 4294901760
    %2364 = vmatprep.subr.mxu0 %v2363
    %v2365 = vand.u32 %v2327, 4294901760
    %2366 = vmatpush1.msra.mxu0 %v2365
    %v2367 = vand.u32 %v2330, 4294901760
    %2368 = vmatprep.subr.mxu0 %v2367
    %v2369 = vand.u32 %v2329, 4294901760
    %2370 = vmatpush1.msra.mxu0 %v2369
    %v2371 = vand.u32 %v2332, 4294901760
    %2372 = vmatprep.subr.mxu0 %v2371
    %v2373 = vand.u32 %v2331, 4294901760
    %2374 = vmatpush1.msra.mxu0 %v2373
    %v2375 = vand.u32 %v2334, 4294901760
    %2376 = vmatprep.subr.mxu0 %v2375
    %v2377 = vand.u32 %v2333, 4294901760
    %2378 = vmatpush1.msra.mxu0 %v2377
    %2379 = vmatprep.subr.mxu0 0.0
    %2380 = vmatpush1.msra.mxu0 0.0
    %2381 = vmatprep.subr.mxu0 0.0
    %2382 = vmatpush1.msra.mxu0 0.0
    %2383 = vmatprep.subr.mxu0 0.0
    %2384 = vmatpush1.msra.mxu0 0.0
    %2385 = vmatprep.subr.mxu0 0.0
    %2386 = vmatpush1.msra.mxu0 0.0
    %2387 = vmatprep.subr.mxu0 0.0
    %2388 = vmatpush1.msra.mxu0 0.0
    %2389 = vmatprep.subr.mxu0 0.0
    %2390 = vmatpush1.msra.mxu0 0.0
    %2391 = vmatprep.subr.mxu0 0.0
    %2392 = vmatpush1.msra.mxu0 0.0
    %2393 = vmatprep.subr.mxu0 0.0
    %2394 = vmatpush1.msra.mxu0 0.0
    %2395 = vmatprep.subr.mxu0 0.0
    %2396 = vmatpush1.msra.mxu0 0.0
    %2397 = vmatprep.subr.mxu0 0.0
    %2398 = vmatpush1.msra.mxu0 0.0
    %2399 = vmatprep.subr.mxu0 0.0
    %2400 = vmatpush1.msra.mxu0 0.0
    %2401 = vmatprep.subr.mxu0 0.0
    %2402 = vmatpush1.msra.mxu0 0.0
    %2403 = vmatprep.subr.mxu0 0.0
    %2404 = vmatpush1.msra.mxu0 0.0
    %2405 = vmatprep.subr.mxu0 0.0
    %2406 = vmatpush1.msra.mxu0 0.0
    %2407 = vmatprep.subr.mxu0 0.0
    %2408 = vmatpush1.msra.mxu0 0.0
    %2409 = vmatprep.subr.mxu0 0.0
    %2410 = vmatpush1.msra.mxu0 0.0
    %2411 = vmatprep.subr.mxu0 0.0
    %2412 = vmatpush1.msra.mxu0 0.0
    %2413 = vmatprep.subr.mxu0 0.0
    %2414 = vmatpush1.msra.mxu0 0.0
    %2415 = vmatprep.subr.mxu0 0.0
    %2416 = vmatpush1.msra.mxu0 0.0
    %2417 = vmatprep.subr.mxu0 0.0
    %2418 = vmatpush1.msra.mxu0 0.0
    %2419 = vmatprep.subr.mxu0 0.0
    %2420 = vmatpush1.msra.mxu0 0.0
    %2421 = vmatprep.subr.mxu0 0.0
    %2422 = vmatpush1.msra.mxu0 0.0
    %2423 = vmatprep.subr.mxu0 0.0
    %2424 = vmatpush1.msra.mxu0 0.0
    %2425 = vmatprep.subr.mxu0 0.0
    %2426 = vmatpush1.msra.mxu0 0.0
    %2427 = vmatprep.mubr.f32.mxu0 0.0
    %v2428 = vand.u32 %v1539, 4294901760
    %v2429 = vsub.f32 %v1539, %v2428
    %v2430 = vand.u32 %v2429, 4294901760
    %v2431 = vsub.f32 %v2429, %v2430
    %v2432 = vand.u32 %v2431, 4294901760
    %2433 = vmatmul.mubr.f32.gmra.mrb[0].mxu0 %v2432
    %v2434 = vpop.f32.mrb[0].mxu0
    %v2435 = vadd.f32 %v2340, %v2434
    %v2436 = vpop.f32.mrb[0].mxu0
    %v2437 = vadd.f32 %v2344, %v2436
    %2438 = vdwg.mxu0
    %v2439 = vand.u32 %v2320, 4294901760
    %v2440 = vsub.f32 %v2320, %v2439
    %v2441 = vand.u32 %v2440, 4294901760
    %v2442 = vsub.f32 %v2440, %v2441
    %v2443 = vand.u32 %v2442, 4294901760
    %2444 = vmatprep.subr.mxu0 %v2443
    %v2445 = vand.u32 %v2319, 4294901760
    %v2446 = vsub.f32 %v2319, %v2445
    %v2447 = vand.u32 %v2446, 4294901760
    %v2448 = vsub.f32 %v2446, %v2447
    %v2449 = vand.u32 %v2448, 4294901760
    %2450 = vmatpush1.msra.mxu0 %v2449
    %v2451 = vand.u32 %v2322, 4294901760
    %v2452 = vsub.f32 %v2322, %v2451
    %v2453 = vand.u32 %v2452, 4294901760
    %v2454 = vsub.f32 %v2452, %v2453
    %v2455 = vand.u32 %v2454, 4294901760
    %2456 = vmatprep.subr.mxu0 %v2455
    %v2457 = vand.u32 %v2321, 4294901760
    %v2458 = vsub.f32 %v2321, %v2457
    %v2459 = vand.u32 %v2458, 4294901760
    %v2460 = vsub.f32 %v2458, %v2459
    %v2461 = vand.u32 %v2460, 4294901760
    %2462 = vmatpush1.msra.mxu0 %v2461
    %v2463 = vand.u32 %v2324, 4294901760
    %v2464 = vsub.f32 %v2324, %v2463
    %v2465 = vand.u32 %v2464, 4294901760
    %v2466 = vsub.f32 %v2464, %v2465
    %v2467 = vand.u32 %v2466, 4294901760
    %2468 = vmatprep.subr.mxu0 %v2467
    %v2469 = vand.u32 %v2323, 4294901760
    %v2470 = vsub.f32 %v2323, %v2469
    %v2471 = vand.u32 %v2470, 4294901760
    %v2472 = vsub.f32 %v2470, %v2471
    %v2473 = vand.u32 %v2472, 4294901760
    %2474 = vmatpush1.msra.mxu0 %v2473
    %v2475 = vand.u32 %v2326, 4294901760
    %v2476 = vsub.f32 %v2326, %v2475
    %v2477 = vand.u32 %v2476, 4294901760
    %v2478 = vsub.f32 %v2476, %v2477
    %v2479 = vand.u32 %v2478, 4294901760
    %2480 = vmatprep.subr.mxu0 %v2479
    %v2481 = vand.u32 %v2325, 4294901760
    %v2482 = vsub.f32 %v2325, %v2481
    %v2483 = vand.u32 %v2482, 4294901760
    %v2484 = vsub.f32 %v2482, %v2483
    %v2485 = vand.u32 %v2484, 4294901760
    %2486 = vmatpush1.msra.mxu0 %v2485
    %v2487 = vand.u32 %v2328, 4294901760
    %v2488 = vsub.f32 %v2328, %v2487
    %v2489 = vand.u32 %v2488, 4294901760
    %v2490 = vsub.f32 %v2488, %v2489
    %v2491 = vand.u32 %v2490, 4294901760
    %2492 = vmatprep.subr.mxu0 %v2491
    %v2493 = vand.u32 %v2327, 4294901760
    %v2494 = vsub.f32 %v2327, %v2493
    %v2495 = vand.u32 %v2494, 4294901760
    %v2496 = vsub.f32 %v2494, %v2495
    %v2497 = vand.u32 %v2496, 4294901760
    %2498 = vmatpush1.msra.mxu0 %v2497
    %v2499 = vand.u32 %v2330, 4294901760
    %v2500 = vsub.f32 %v2330, %v2499
    %v2501 = vand.u32 %v2500, 4294901760
    %v2502 = vsub.f32 %v2500, %v2501
    %v2503 = vand.u32 %v2502, 4294901760
    %2504 = vmatprep.subr.mxu0 %v2503
    %v2505 = vand.u32 %v2329, 4294901760
    %v2506 = vsub.f32 %v2329, %v2505
    %v2507 = vand.u32 %v2506, 4294901760
    %v2508 = vsub.f32 %v2506, %v2507
    %v2509 = vand.u32 %v2508, 4294901760
    %2510 = vmatpush1.msra.mxu0 %v2509
    %v2511 = vand.u32 %v2332, 4294901760
    %v2512 = vsub.f32 %v2332, %v2511
    %v2513 = vand.u32 %v2512, 4294901760
    %v2514 = vsub.f32 %v2512, %v2513
    %v2515 = vand.u32 %v2514, 4294901760
    %2516 = vmatprep.subr.mxu0 %v2515
    %v2517 = vand.u32 %v2331, 4294901760
    %v2518 = vsub.f32 %v2331, %v2517
    %v2519 = vand.u32 %v2518, 4294901760
    %v2520 = vsub.f32 %v2518, %v2519
    %v2521 = vand.u32 %v2520, 4294901760
    %2522 = vmatpush1.msra.mxu0 %v2521
    %v2523 = vand.u32 %v2334, 4294901760
    %v2524 = vsub.f32 %v2334, %v2523
    %v2525 = vand.u32 %v2524, 4294901760
    %v2526 = vsub.f32 %v2524, %v2525
    %v2527 = vand.u32 %v2526, 4294901760
    %2528 = vmatprep.subr.mxu0 %v2527
    %v2529 = vand.u32 %v2333, 4294901760
    %v2530 = vsub.f32 %v2333, %v2529
    %v2531 = vand.u32 %v2530, 4294901760
    %v2532 = vsub.f32 %v2530, %v2531
    %v2533 = vand.u32 %v2532, 4294901760
    %2534 = vmatpush1.msra.mxu0 %v2533
    %2535 = vmatprep.subr.mxu0 0.0
    %2536 = vmatpush1.msra.mxu0 0.0
    %2537 = vmatprep.subr.mxu0 0.0
    %2538 = vmatpush1.msra.mxu0 0.0
    %2539 = vmatprep.subr.mxu0 0.0
    %2540 = vmatpush1.msra.mxu0 0.0
    %2541 = vmatprep.subr.mxu0 0.0
    %2542 = vmatpush1.msra.mxu0 0.0
    %2543 = vmatprep.subr.mxu0 0.0
    %2544 = vmatpush1.msra.mxu0 0.0
    %2545 = vmatprep.subr.mxu0 0.0
    %2546 = vmatpush1.msra.mxu0 0.0
    %2547 = vmatprep.subr.mxu0 0.0
    %2548 = vmatpush1.msra.mxu0 0.0
    %2549 = vmatprep.subr.mxu0 0.0
    %2550 = vmatpush1.msra.mxu0 0.0
    %2551 = vmatprep.subr.mxu0 0.0
    %2552 = vmatpush1.msra.mxu0 0.0
    %2553 = vmatprep.subr.mxu0 0.0
    %2554 = vmatpush1.msra.mxu0 0.0
    %2555 = vmatprep.subr.mxu0 0.0
    %2556 = vmatpush1.msra.mxu0 0.0
    %2557 = vmatprep.subr.mxu0 0.0
    %2558 = vmatpush1.msra.mxu0 0.0
    %2559 = vmatprep.subr.mxu0 0.0
    %2560 = vmatpush1.msra.mxu0 0.0
    %2561 = vmatprep.subr.mxu0 0.0
    %2562 = vmatpush1.msra.mxu0 0.0
    %2563 = vmatprep.subr.mxu0 0.0
    %2564 = vmatpush1.msra.mxu0 0.0
    %2565 = vmatprep.subr.mxu0 0.0
    %2566 = vmatpush1.msra.mxu0 0.0
    %2567 = vmatprep.subr.mxu0 0.0
    %2568 = vmatpush1.msra.mxu0 0.0
    %2569 = vmatprep.subr.mxu0 0.0
    %2570 = vmatpush1.msra.mxu0 0.0
    %2571 = vmatprep.subr.mxu0 0.0
    %2572 = vmatpush1.msra.mxu0 0.0
    %2573 = vmatprep.subr.mxu0 0.0
    %2574 = vmatpush1.msra.mxu0 0.0
    %2575 = vmatprep.subr.mxu0 0.0
    %2576 = vmatpush1.msra.mxu0 0.0
    %2577 = vmatprep.subr.mxu0 0.0
    %2578 = vmatpush1.msra.mxu0 0.0
    %2579 = vmatprep.subr.mxu0 0.0
    %2580 = vmatpush1.msra.mxu0 0.0
    %2581 = vmatprep.subr.mxu0 0.0
    %2582 = vmatpush1.msra.mxu0 0.0
    %2583 = vmatprep.mubr.f32.mxu0 0.0
    %v2584 = vand.u32 %v1539, 4294901760
    %2585 = vmatmul.mubr.f32.gmra.mrb[0].mxu0 %v2584
    %v2586 = vpop.f32.mrb[0].mxu0
    %v2587 = vadd.f32 %v2435, %v2586
    %v2588 = vpop.f32.mrb[0].mxu0
    %v2589 = vadd.f32 %v2437, %v2588
    %2590 = vdwg.mxu0
    %v2591 = vand.u32 %v2320, 4294901760
    %v2592 = vsub.f32 %v2320, %v2591
    %2593 = vmatprep.subr.mxu0 %v2592
    %v2594 = vand.u32 %v2319, 4294901760
    %v2595 = vsub.f32 %v2319, %v2594
    %2596 = vmatpush1.msra.mxu0 %v2595
    %v2597 = vand.u32 %v2322, 4294901760
    %v2598 = vsub.f32 %v2322, %v2597
    %2599 = vmatprep.subr.mxu0 %v2598
    %v2600 = vand.u32 %v2321, 4294901760
    %v2601 = vsub.f32 %v2321, %v2600
    %2602 = vmatpush1.msra.mxu0 %v2601
    %v2603 = vand.u32 %v2324, 4294901760
    %v2604 = vsub.f32 %v2324, %v2603
    %2605 = vmatprep.subr.mxu0 %v2604
    %v2606 = vand.u32 %v2323, 4294901760
    %v2607 = vsub.f32 %v2323, %v2606
    %2608 = vmatpush1.msra.mxu0 %v2607
    %v2609 = vand.u32 %v2326, 4294901760
    %v2610 = vsub.f32 %v2326, %v2609
    %2611 = vmatprep.subr.mxu0 %v2610
    %v2612 = vand.u32 %v2325, 4294901760
    %v2613 = vsub.f32 %v2325, %v2612
    %2614 = vmatpush1.msra.mxu0 %v2613
    %v2615 = vand.u32 %v2328, 4294901760
    %v2616 = vsub.f32 %v2328, %v2615
    %2617 = vmatprep.subr.mxu0 %v2616
    %v2618 = vand.u32 %v2327, 4294901760
    %v2619 = vsub.f32 %v2327, %v2618
    %2620 = vmatpush1.msra.mxu0 %v2619
    %v2621 = vand.u32 %v2330, 4294901760
    %v2622 = vsub.f32 %v2330, %v2621
    %2623 = vmatprep.subr.mxu0 %v2622
    %v2624 = vand.u32 %v2329, 4294901760
    %v2625 = vsub.f32 %v2329, %v2624
    %2626 = vmatpush1.msra.mxu0 %v2625
    %v2627 = vand.u32 %v2332, 4294901760
    %v2628 = vsub.f32 %v2332, %v2627
    %2629 = vmatprep.subr.mxu0 %v2628
    %v2630 = vand.u32 %v2331, 4294901760
    %v2631 = vsub.f32 %v2331, %v2630
    %2632 = vmatpush1.msra.mxu0 %v2631
    %v2633 = vand.u32 %v2334, 4294901760
    %v2634 = vsub.f32 %v2334, %v2633
    %2635 = vmatprep.subr.mxu0 %v2634
    %v2636 = vand.u32 %v2333, 4294901760
    %v2637 = vsub.f32 %v2333, %v2636
    %2638 = vmatpush1.msra.mxu0 %v2637
    %2639 = vmatprep.subr.mxu0 0.0
    %2640 = vmatpush1.msra.mxu0 0.0
    %2641 = vmatprep.subr.mxu0 0.0
    %2642 = vmatpush1.msra.mxu0 0.0
    %2643 = vmatprep.subr.mxu0 0.0
    %2644 = vmatpush1.msra.mxu0 0.0
    %2645 = vmatprep.subr.mxu0 0.0
    %2646 = vmatpush1.msra.mxu0 0.0
    %2647 = vmatprep.subr.mxu0 0.0
    %2648 = vmatpush1.msra.mxu0 0.0
    %2649 = vmatprep.subr.mxu0 0.0
    %2650 = vmatpush1.msra.mxu0 0.0
    %2651 = vmatprep.subr.mxu0 0.0
    %2652 = vmatpush1.msra.mxu0 0.0
    %2653 = vmatprep.subr.mxu0 0.0
    %2654 = vmatpush1.msra.mxu0 0.0
    %2655 = vmatprep.subr.mxu0 0.0
    %2656 = vmatpush1.msra.mxu0 0.0
    %2657 = vmatprep.subr.mxu0 0.0
    %2658 = vmatpush1.msra.mxu0 0.0
    %2659 = vmatprep.subr.mxu0 0.0
    %2660 = vmatpush1.msra.mxu0 0.0
    %2661 = vmatprep.subr.mxu0 0.0
    %2662 = vmatpush1.msra.mxu0 0.0
    %2663 = vmatprep.subr.mxu0 0.0
    %2664 = vmatpush1.msra.mxu0 0.0
    %2665 = vmatprep.subr.mxu0 0.0
    %2666 = vmatpush1.msra.mxu0 0.0
    %2667 = vmatprep.subr.mxu0 0.0
    %2668 = vmatpush1.msra.mxu0 0.0
    %2669 = vmatprep.subr.mxu0 0.0
    %2670 = vmatpush1.msra.mxu0 0.0
    %2671 = vmatprep.subr.mxu0 0.0
    %2672 = vmatpush1.msra.mxu0 0.0
    %2673 = vmatprep.subr.mxu0 0.0
    %2674 = vmatpush1.msra.mxu0 0.0
    %2675 = vmatprep.subr.mxu0 0.0
    %2676 = vmatpush1.msra.mxu0 0.0
    %2677 = vmatprep.subr.mxu0 0.0
    %2678 = vmatpush1.msra.mxu0 0.0
    %2679 = vmatprep.subr.mxu0 0.0
    %2680 = vmatpush1.msra.mxu0 0.0
    %2681 = vmatprep.subr.mxu0 0.0
    %2682 = vmatpush1.msra.mxu0 0.0
    %2683 = vmatprep.subr.mxu0 0.0
    %2684 = vmatpush1.msra.mxu0 0.0
    %2685 = vmatprep.subr.mxu0 0.0
    %2686 = vmatpush1.msra.mxu0 0.0
    %2687 = vmatprep.mubr.f32.mxu0 0.0
    %v2688 = vand.u32 %v1539, 4294901760
    %v2689 = vsub.f32 %v1539, %v2688
    %2690 = vmatmul.mubr.f32.gmra.mrb[0].mxu0 %v2689
    %v2691 = vpop.f32.mrb[0].mxu0
    %v2692 = vadd.f32 %v2587, %v2691
    %v2693 = vpop.f32.mrb[0].mxu0
    %v2694 = vadd.f32 %v2589, %v2693
    %2695 = vdwg.mxu0
    %v2696 = vand.u32 %v2320, 4294901760
    %2697 = vmatprep.subr.mxu0 %v2696
    %v2698 = vand.u32 %v2319, 4294901760
    %2699 = vmatpush1.msra.mxu0 %v2698
    %v2700 = vand.u32 %v2322, 4294901760
    %2701 = vmatprep.subr.mxu0 %v2700
    %v2702 = vand.u32 %v2321, 4294901760
    %2703 = vmatpush1.msra.mxu0 %v2702
    %v2704 = vand.u32 %v2324, 4294901760
    %2705 = vmatprep.subr.mxu0 %v2704
    %v2706 = vand.u32 %v2323, 4294901760
    %2707 = vmatpush1.msra.mxu0 %v2706
    %v2708 = vand.u32 %v2326, 4294901760
    %2709 = vmatprep.subr.mxu0 %v2708
    %v2710 = vand.u32 %v2325, 4294901760
    %2711 = vmatpush1.msra.mxu0 %v2710
    %v2712 = vand.u32 %v2328, 4294901760
    %2713 = vmatprep.subr.mxu0 %v2712
    %v2714 = vand.u32 %v2327, 4294901760
    %2715 = vmatpush1.msra.mxu0 %v2714
    %v2716 = vand.u32 %v2330, 4294901760
    %2717 = vmatprep.subr.mxu0 %v2716
    %v2718 = vand.u32 %v2329, 4294901760
    %2719 = vmatpush1.msra.mxu0 %v2718
    %v2720 = vand.u32 %v2332, 4294901760
    %2721 = vmatprep.subr.mxu0 %v2720
    %v2722 = vand.u32 %v2331, 4294901760
    %2723 = vmatpush1.msra.mxu0 %v2722
    %v2724 = vand.u32 %v2334, 4294901760
    %2725 = vmatprep.subr.mxu0 %v2724
    %v2726 = vand.u32 %v2333, 4294901760
    %2727 = vmatpush1.msra.mxu0 %v2726
    %2728 = vmatprep.subr.mxu0 0.0
    %2729 = vmatpush1.msra.mxu0 0.0
    %2730 = vmatprep.subr.mxu0 0.0
    %2731 = vmatpush1.msra.mxu0 0.0
    %2732 = vmatprep.subr.mxu0 0.0
    %2733 = vmatpush1.msra.mxu0 0.0
    %2734 = vmatprep.subr.mxu0 0.0
    %2735 = vmatpush1.msra.mxu0 0.0
    %2736 = vmatprep.subr.mxu0 0.0
    %2737 = vmatpush1.msra.mxu0 0.0
    %2738 = vmatprep.subr.mxu0 0.0
    %2739 = vmatpush1.msra.mxu0 0.0
    %2740 = vmatprep.subr.mxu0 0.0
    %2741 = vmatpush1.msra.mxu0 0.0
    %2742 = vmatprep.subr.mxu0 0.0
    %2743 = vmatpush1.msra.mxu0 0.0
    %2744 = vmatprep.subr.mxu0 0.0
    %2745 = vmatpush1.msra.mxu0 0.0
    %2746 = vmatprep.subr.mxu0 0.0
    %2747 = vmatpush1.msra.mxu0 0.0
    %2748 = vmatprep.subr.mxu0 0.0
    %2749 = vmatpush1.msra.mxu0 0.0
    %2750 = vmatprep.subr.mxu0 0.0
    %2751 = vmatpush1.msra.mxu0 0.0
    %2752 = vmatprep.subr.mxu0 0.0
    %2753 = vmatpush1.msra.mxu0 0.0
    %2754 = vmatprep.subr.mxu0 0.0
    %2755 = vmatpush1.msra.mxu0 0.0
    %2756 = vmatprep.subr.mxu0 0.0
    %2757 = vmatpush1.msra.mxu0 0.0
    %2758 = vmatprep.subr.mxu0 0.0
    %2759 = vmatpush1.msra.mxu0 0.0
    %2760 = vmatprep.subr.mxu0 0.0
    %2761 = vmatpush1.msra.mxu0 0.0
    %2762 = vmatprep.subr.mxu0 0.0
    %2763 = vmatpush1.msra.mxu0 0.0
    %2764 = vmatprep.subr.mxu0 0.0
    %2765 = vmatpush1.msra.mxu0 0.0
    %2766 = vmatprep.subr.mxu0 0.0
    %2767 = vmatpush1.msra.mxu0 0.0
    %2768 = vmatprep.subr.mxu0 0.0
    %2769 = vmatpush1.msra.mxu0 0.0
    %2770 = vmatprep.subr.mxu0 0.0
    %2771 = vmatpush1.msra.mxu0 0.0
    %2772 = vmatprep.subr.mxu0 0.0
    %2773 = vmatpush1.msra.mxu0 0.0
    %2774 = vmatprep.subr.mxu0 0.0
    %2775 = vmatpush1.msra.mxu0 0.0
    %2776 = vmatprep.mubr.f32.mxu0 0.0
    %v2777 = vand.u32 %v1539, 4294901760
    %v2778 = vsub.f32 %v1539, %v2777
    %v2779 = vand.u32 %v2778, 4294901760
    %2780 = vmatmul.mubr.f32.gmra.mrb[0].mxu0 %v2779
    %v2781 = vpop.f32.mrb[0].mxu0
    %v2782 = vadd.f32 %v2692, %v2781
    %v2783 = vpop.f32.mrb[0].mxu0
    %v2784 = vadd.f32 %v2694, %v2783
    %2785 = vdwg.mxu0
    %v2786 = vand.u32 %v2320, 4294901760
    %v2787 = vsub.f32 %v2320, %v2786
    %v2788 = vand.u32 %v2787, 4294901760
    %2789 = vmatprep.subr.mxu0 %v2788
    %v2790 = vand.u32 %v2319, 4294901760
    %v2791 = vsub.f32 %v2319, %v2790
    %v2792 = vand.u32 %v2791, 4294901760
    %2793 = vmatpush1.msra.mxu0 %v2792
    %v2794 = vand.u32 %v2322, 4294901760
    %v2795 = vsub.f32 %v2322, %v2794
    %v2796 = vand.u32 %v2795, 4294901760
    %2797 = vmatprep.subr.mxu0 %v2796
    %v2798 = vand.u32 %v2321, 4294901760
    %v2799 = vsub.f32 %v2321, %v2798
    %v2800 = vand.u32 %v2799, 4294901760
    %2801 = vmatpush1.msra.mxu0 %v2800
    %v2802 = vand.u32 %v2324, 4294901760
    %v2803 = vsub.f32 %v2324, %v2802
    %v2804 = vand.u32 %v2803, 4294901760
    %2805 = vmatprep.subr.mxu0 %v2804
    %v2806 = vand.u32 %v2323, 4294901760
    %v2807 = vsub.f32 %v2323, %v2806
    %v2808 = vand.u32 %v2807, 4294901760
    %2809 = vmatpush1.msra.mxu0 %v2808
    %v2810 = vand.u32 %v2326, 4294901760
    %v2811 = vsub.f32 %v2326, %v2810
    %v2812 = vand.u32 %v2811, 4294901760
    %2813 = vmatprep.subr.mxu0 %v2812
    %v2814 = vand.u32 %v2325, 4294901760
    %v2815 = vsub.f32 %v2325, %v2814
    %v2816 = vand.u32 %v2815, 4294901760
    %2817 = vmatpush1.msra.mxu0 %v2816
    %v2818 = vand.u32 %v2328, 4294901760
    %v2819 = vsub.f32 %v2328, %v2818
    %v2820 = vand.u32 %v2819, 4294901760
    %2821 = vmatprep.subr.mxu0 %v2820
    %v2822 = vand.u32 %v2327, 4294901760
    %v2823 = vsub.f32 %v2327, %v2822
    %v2824 = vand.u32 %v2823, 4294901760
    %2825 = vmatpush1.msra.mxu0 %v2824
    %v2826 = vand.u32 %v2330, 4294901760
    %v2827 = vsub.f32 %v2330, %v2826
    %v2828 = vand.u32 %v2827, 4294901760
    %2829 = vmatprep.subr.mxu0 %v2828
    %v2830 = vand.u32 %v2329, 4294901760
    %v2831 = vsub.f32 %v2329, %v2830
    %v2832 = vand.u32 %v2831, 4294901760
    %2833 = vmatpush1.msra.mxu0 %v2832
    %v2834 = vand.u32 %v2332, 4294901760
    %v2835 = vsub.f32 %v2332, %v2834
    %v2836 = vand.u32 %v2835, 4294901760
    %2837 = vmatprep.subr.mxu0 %v2836
    %v2838 = vand.u32 %v2331, 4294901760
    %v2839 = vsub.f32 %v2331, %v2838
    %v2840 = vand.u32 %v2839, 4294901760
    %2841 = vmatpush1.msra.mxu0 %v2840
    %v2842 = vand.u32 %v2334, 4294901760
    %v2843 = vsub.f32 %v2334, %v2842
    %v2844 = vand.u32 %v2843, 4294901760
    %2845 = vmatprep.subr.mxu0 %v2844
    %v2846 = vand.u32 %v2333, 4294901760
    %v2847 = vsub.f32 %v2333, %v2846
    %v2848 = vand.u32 %v2847, 4294901760
    %2849 = vmatpush1.msra.mxu0 %v2848
    %2850 = vmatprep.subr.mxu0 0.0
    %2851 = vmatpush1.msra.mxu0 0.0
    %2852 = vmatprep.subr.mxu0 0.0
    %2853 = vmatpush1.msra.mxu0 0.0
    %2854 = vmatprep.subr.mxu0 0.0
    %2855 = vmatpush1.msra.mxu0 0.0
    %2856 = vmatprep.subr.mxu0 0.0
    %2857 = vmatpush1.msra.mxu0 0.0
    %2858 = vmatprep.subr.mxu0 0.0
    %2859 = vmatpush1.msra.mxu0 0.0
    %2860 = vmatprep.subr.mxu0 0.0
    %2861 = vmatpush1.msra.mxu0 0.0
    %2862 = vmatprep.subr.mxu0 0.0
    %2863 = vmatpush1.msra.mxu0 0.0
    %2864 = vmatprep.subr.mxu0 0.0
    %2865 = vmatpush1.msra.mxu0 0.0
    %2866 = vmatprep.subr.mxu0 0.0
    %2867 = vmatpush1.msra.mxu0 0.0
    %2868 = vmatprep.subr.mxu0 0.0
    %2869 = vmatpush1.msra.mxu0 0.0
    %2870 = vmatprep.subr.mxu0 0.0
    %2871 = vmatpush1.msra.mxu0 0.0
    %2872 = vmatprep.subr.mxu0 0.0
    %2873 = vmatpush1.msra.mxu0 0.0
    %2874 = vmatprep.subr.mxu0 0.0
    %2875 = vmatpush1.msra.mxu0 0.0
    %2876 = vmatprep.subr.mxu0 0.0
    %2877 = vmatpush1.msra.mxu0 0.0
    %2878 = vmatprep.subr.mxu0 0.0
    %2879 = vmatpush1.msra.mxu0 0.0
    %2880 = vmatprep.subr.mxu0 0.0
    %2881 = vmatpush1.msra.mxu0 0.0
    %2882 = vmatprep.subr.mxu0 0.0
    %2883 = vmatpush1.msra.mxu0 0.0
    %2884 = vmatprep.subr.mxu0 0.0
    %2885 = vmatpush1.msra.mxu0 0.0
    %2886 = vmatprep.subr.mxu0 0.0
    %2887 = vmatpush1.msra.mxu0 0.0
    %2888 = vmatprep.subr.mxu0 0.0
    %2889 = vmatpush1.msra.mxu0 0.0
    %2890 = vmatprep.subr.mxu0 0.0
    %2891 = vmatpush1.msra.mxu0 0.0
    %2892 = vmatprep.subr.mxu0 0.0
    %2893 = vmatpush1.msra.mxu0 0.0
    %2894 = vmatprep.subr.mxu0 0.0
    %2895 = vmatpush1.msra.mxu0 0.0
    %2896 = vmatprep.subr.mxu0 0.0
    %2897 = vmatpush1.msra.mxu0 0.0
    %2898 = vmatprep.mubr.f32.mxu0 0.0
    %v2899 = vand.u32 %v1539, 4294901760
    %2900 = vmatmul.mubr.f32.gmra.mrb[0].mxu0 %v2899
    %v2901 = vpop.f32.mrb[0].mxu0
    %v2902 = vadd.f32 %v2782, %v2901
    %v2903 = vpop.f32.mrb[0].mxu0
    %v2904 = vadd.f32 %v2784, %v2903
    %2905 = vdwg.mxu0
    %v2906 = vand.u32 %v2320, 4294901760
    %2907 = vmatprep.subr.mxu0 %v2906
    %v2908 = vand.u32 %v2319, 4294901760
    %2909 = vmatpush1.msra.mxu0 %v2908
    %v2910 = vand.u32 %v2322, 4294901760
    %2911 = vmatprep.subr.mxu0 %v2910
    %v2912 = vand.u32 %v2321, 4294901760
    %2913 = vmatpush1.msra.mxu0 %v2912
    %v2914 = vand.u32 %v2324, 4294901760
    %2915 = vmatprep.subr.mxu0 %v2914
    %v2916 = vand.u32 %v2323, 4294901760
    %2917 = vmatpush1.msra.mxu0 %v2916
    %v2918 = vand.u32 %v2326, 4294901760
    %2919 = vmatprep.subr.mxu0 %v2918
    %v2920 = vand.u32 %v2325, 4294901760
    %2921 = vmatpush1.msra.mxu0 %v2920
    %v2922 = vand.u32 %v2328, 4294901760
    %2923 = vmatprep.subr.mxu0 %v2922
    %v2924 = vand.u32 %v2327, 4294901760
    %2925 = vmatpush1.msra.mxu0 %v2924
    %v2926 = vand.u32 %v2330, 4294901760
    %2927 = vmatprep.subr.mxu0 %v2926
    %v2928 = vand.u32 %v2329, 4294901760
    %2929 = vmatpush1.msra.mxu0 %v2928
    %v2930 = vand.u32 %v2332, 4294901760
    %2931 = vmatprep.subr.mxu0 %v2930
    %v2932 = vand.u32 %v2331, 4294901760
    %2933 = vmatpush1.msra.mxu0 %v2932
    %v2934 = vand.u32 %v2334, 4294901760
    %2935 = vmatprep.subr.mxu0 %v2934
    %v2936 = vand.u32 %v2333, 4294901760
    %2937 = vmatpush1.msra.mxu0 %v2936
    %2938 = vmatprep.subr.mxu0 0.0
    %2939 = vmatpush1.msra.mxu0 0.0
    %2940 = vmatprep.subr.mxu0 0.0
    %2941 = vmatpush1.msra.mxu0 0.0
    %2942 = vmatprep.subr.mxu0 0.0
    %2943 = vmatpush1.msra.mxu0 0.0
    %2944 = vmatprep.subr.mxu0 0.0
    %2945 = vmatpush1.msra.mxu0 0.0
    %2946 = vmatprep.subr.mxu0 0.0
    %2947 = vmatpush1.msra.mxu0 0.0
    %2948 = vmatprep.subr.mxu0 0.0
    %2949 = vmatpush1.msra.mxu0 0.0
    %2950 = vmatprep.subr.mxu0 0.0
    %2951 = vmatpush1.msra.mxu0 0.0
    %2952 = vmatprep.subr.mxu0 0.0
    %2953 = vmatpush1.msra.mxu0 0.0
    %2954 = vmatprep.subr.mxu0 0.0
    %2955 = vmatpush1.msra.mxu0 0.0
    %2956 = vmatprep.subr.mxu0 0.0
    %2957 = vmatpush1.msra.mxu0 0.0
    %2958 = vmatprep.subr.mxu0 0.0
    %2959 = vmatpush1.msra.mxu0 0.0
    %2960 = vmatprep.subr.mxu0 0.0
    %2961 = vmatpush1.msra.mxu0 0.0
    %2962 = vmatprep.subr.mxu0 0.0
    %2963 = vmatpush1.msra.mxu0 0.0
    %2964 = vmatprep.subr.mxu0 0.0
    %2965 = vmatpush1.msra.mxu0 0.0
    %2966 = vmatprep.subr.mxu0 0.0
    %2967 = vmatpush1.msra.mxu0 0.0
    %2968 = vmatprep.subr.mxu0 0.0
    %2969 = vmatpush1.msra.mxu0 0.0
    %2970 = vmatprep.subr.mxu0 0.0
    %2971 = vmatpush1.msra.mxu0 0.0
    %2972 = vmatprep.subr.mxu0 0.0
    %2973 = vmatpush1.msra.mxu0 0.0
    %2974 = vmatprep.subr.mxu0 0.0
    %2975 = vmatpush1.msra.mxu0 0.0
    %2976 = vmatprep.subr.mxu0 0.0
    %2977 = vmatpush1.msra.mxu0 0.0
    %2978 = vmatprep.subr.mxu0 0.0
    %2979 = vmatpush1.msra.mxu0 0.0
    %2980 = vmatprep.subr.mxu0 0.0
    %2981 = vmatpush1.msra.mxu0 0.0
    %2982 = vmatprep.subr.mxu0 0.0
    %2983 = vmatpush1.msra.mxu0 0.0
    %2984 = vmatprep.subr.mxu0 0.0
    %2985 = vmatpush1.msra.mxu0 0.0
    %2986 = vmatprep.mubr.f32.mxu0 0.0
    %v2987 = vand.u32 %v1539, 4294901760
    %2988 = vmatmul.mubr.f32.gmra.mrb[0].mxu0 %v2987
    %v2989 = vpop.f32.mrb[0].mxu0
    %v2990 = vadd.f32 %v2902, %v2989
    %v2991 = vpop.f32.mrb[0].mxu0
    %v2992 = vadd.f32 %v2904, %v2991
    %2993 = vdwg.mxu0
    %v2994 = vld [vmem:[%s11] sm:$0xff]
    %v2995 = vld [vmem:[%s11 + $0x8] sm:$0xff]
    %v2996 = vld [vmem:[%s11 + $0x10] sm:$0xff]
    %v2997 = vld [vmem:[%s11 + $0x18] sm:$0xff]
    %v2998 = vld [vmem:[%s11 + $0x20] sm:$0xff]
    %v2999 = vld [vmem:[%s11 + $0x28] sm:$0xff]
    %v3000 = vld [vmem:[%s11 + $0x30] sm:$0xff]
    %v3001 = vld [vmem:[%s11 + $0x38] sm:$0xff]
    %v3002 = vld [vmem:[%s11 + $0x40] sm:$0xff]
    %v3003 = vld [vmem:[%s11 + $0x48] sm:$0xff]
    %v3004 = vld [vmem:[%s11 + $0x50] sm:$0xff]
    %v3005 = vld [vmem:[%s11 + $0x58] sm:$0xff]
    %v3006 = vld [vmem:[%s11 + $0x60] sm:$0xff]
    %v3007 = vld [vmem:[%s11 + $0x68] sm:$0xff]
    %v3008 = vld [vmem:[%s11 + $0x70] sm:$0xff]
    %v3009 = vld [vmem:[%s11 + $0x78] sm:$0xff]
    %v3010 = vld [vmem:[%s13] sm:$0x3]
    %v3012 = vlaneseq
    %v3013 = vshrl.u32 %v3012, 7
    %v3014 = vsub.s32 0, %v3013
    %v3015 = vrot.slane %v3010, %v3014
    %v3016 = vlaneseq
    %v3017 = vshrl.u32 %v3016, 7
    %v3018 = vsub.s32 1, %v3017
    %v3019 = vrot.slane %v3010, %v3018
    %v3024 = vsel %vm742, %v2318, %v2309
    %v3025 = vsel %vm99, %v3024, 0
    %v3027 = vand.u32 %v2995, 4294901760
    %3028 = vmatprep.subr.mxu0 %v3027
    %v3029 = vand.u32 %v2994, 4294901760
    %3030 = vmatpush1.msra.mxu0 %v3029
    %v3031 = vand.u32 %v2997, 4294901760
    %3032 = vmatprep.subr.mxu0 %v3031
    %v3033 = vand.u32 %v2996, 4294901760
    %3034 = vmatpush1.msra.mxu0 %v3033
    %v3035 = vand.u32 %v2999, 4294901760
    %3036 = vmatprep.subr.mxu0 %v3035
    %v3037 = vand.u32 %v2998, 4294901760
    %3038 = vmatpush1.msra.mxu0 %v3037
    %v3039 = vand.u32 %v3001, 4294901760
    %3040 = vmatprep.subr.mxu0 %v3039
    %v3041 = vand.u32 %v3000, 4294901760
    %3042 = vmatpush1.msra.mxu0 %v3041
    %v3043 = vand.u32 %v3003, 4294901760
    %3044 = vmatprep.subr.mxu0 %v3043
    %v3045 = vand.u32 %v3002, 4294901760
    %3046 = vmatpush1.msra.mxu0 %v3045
    %v3047 = vand.u32 %v3005, 4294901760
    %3048 = vmatprep.subr.mxu0 %v3047
    %v3049 = vand.u32 %v3004, 4294901760
    %3050 = vmatpush1.msra.mxu0 %v3049
    %v3051 = vand.u32 %v3007, 4294901760
    %3052 = vmatprep.subr.mxu0 %v3051
    %v3053 = vand.u32 %v3006, 4294901760
    %3054 = vmatpush1.msra.mxu0 %v3053
    %v3055 = vand.u32 %v3009, 4294901760
    %3056 = vmatprep.subr.mxu0 %v3055
    %v3057 = vand.u32 %v3008, 4294901760
    %3058 = vmatpush1.msra.mxu0 %v3057
    %3059 = vmatprep.subr.mxu0 0.0
    %3060 = vmatpush1.msra.mxu0 0.0
    %3061 = vmatprep.subr.mxu0 0.0
    %3062 = vmatpush1.msra.mxu0 0.0
    %3063 = vmatprep.subr.mxu0 0.0
    %3064 = vmatpush1.msra.mxu0 0.0
    %3065 = vmatprep.subr.mxu0 0.0
    %3066 = vmatpush1.msra.mxu0 0.0
    %3067 = vmatprep.subr.mxu0 0.0
    %3068 = vmatpush1.msra.mxu0 0.0
    %3069 = vmatprep.subr.mxu0 0.0
    %3070 = vmatpush1.msra.mxu0 0.0
    %3071 = vmatprep.subr.mxu0 0.0
    %3072 = vmatpush1.msra.mxu0 0.0
    %3073 = vmatprep.subr.mxu0 0.0
    %3074 = vmatpush1.msra.mxu0 0.0
    %3075 = vmatprep.subr.mxu0 0.0
    %3076 = vmatpush1.msra.mxu0 0.0
    %3077 = vmatprep.subr.mxu0 0.0
    %3078 = vmatpush1.msra.mxu0 0.0
    %3079 = vmatprep.subr.mxu0 0.0
    %3080 = vmatpush1.msra.mxu0 0.0
    %3081 = vmatprep.subr.mxu0 0.0
    %3082 = vmatpush1.msra.mxu0 0.0
    %3083 = vmatprep.subr.mxu0 0.0
    %3084 = vmatpush1.msra.mxu0 0.0
    %3085 = vmatprep.subr.mxu0 0.0
    %3086 = vmatpush1.msra.mxu0 0.0
    %3087 = vmatprep.subr.mxu0 0.0
    %3088 = vmatpush1.msra.mxu0 0.0
    %3089 = vmatprep.subr.mxu0 0.0
    %3090 = vmatpush1.msra.mxu0 0.0
    %3091 = vmatprep.subr.mxu0 0.0
    %3092 = vmatpush1.msra.mxu0 0.0
    %3093 = vmatprep.subr.mxu0 0.0
    %3094 = vmatpush1.msra.mxu0 0.0
    %3095 = vmatprep.subr.mxu0 0.0
    %3096 = vmatpush1.msra.mxu0 0.0
    %3097 = vmatprep.subr.mxu0 0.0
    %3098 = vmatpush1.msra.mxu0 0.0
    %3099 = vmatprep.subr.mxu0 0.0
    %3100 = vmatpush1.msra.mxu0 0.0
    %3101 = vmatprep.subr.mxu0 0.0
    %3102 = vmatpush1.msra.mxu0 0.0
    %3103 = vmatprep.subr.mxu0 0.0
    %3104 = vmatpush1.msra.mxu0 0.0
    %3105 = vmatprep.subr.mxu0 0.0
    %3106 = vmatpush1.msra.mxu0 0.0
    %3107 = vmatprep.mubr.f32.mxu0 0.0
    %v3108 = vand.u32 %v3025, 4294901760
    %v3109 = vsub.f32 %v3025, %v3108
    %v3110 = vand.u32 %v3109, 4294901760
    %v3111 = vsub.f32 %v3109, %v3110
    %v3112 = vand.u32 %v3111, 4294901760
    %3113 = vmatmul.mubr.f32.gmra.mrb[0].mxu0 %v3112
    %v3114 = vpop.f32.mrb[0].mxu0
    %v3115 = vadd.f32 %v3015, %v3114
    %v3116 = vpop.f32.mrb[0].mxu0
    %v3117 = vadd.f32 %v3019, %v3116
    %3118 = vdwg.mxu0
    %v3119 = vand.u32 %v2995, 4294901760
    %v3120 = vsub.f32 %v2995, %v3119
    %v3121 = vand.u32 %v3120, 4294901760
    %v3122 = vsub.f32 %v3120, %v3121
    %v3123 = vand.u32 %v3122, 4294901760
    %3124 = vmatprep.subr.mxu0 %v3123
    %v3125 = vand.u32 %v2994, 4294901760
    %v3126 = vsub.f32 %v2994, %v3125
    %v3127 = vand.u32 %v3126, 4294901760
    %v3128 = vsub.f32 %v3126, %v3127
    %v3129 = vand.u32 %v3128, 4294901760
    %3130 = vmatpush1.msra.mxu0 %v3129
    %v3131 = vand.u32 %v2997, 4294901760
    %v3132 = vsub.f32 %v2997, %v3131
    %v3133 = vand.u32 %v3132, 4294901760
    %v3134 = vsub.f32 %v3132, %v3133
    %v3135 = vand.u32 %v3134, 4294901760
    %3136 = vmatprep.subr.mxu0 %v3135
    %v3137 = vand.u32 %v2996, 4294901760
    %v3138 = vsub.f32 %v2996, %v3137
    %v3139 = vand.u32 %v3138, 4294901760
    %v3140 = vsub.f32 %v3138, %v3139
    %v3141 = vand.u32 %v3140, 4294901760
    %3142 = vmatpush1.msra.mxu0 %v3141
    %v3143 = vand.u32 %v2999, 4294901760
    %v3144 = vsub.f32 %v2999, %v3143
    %v3145 = vand.u32 %v3144, 4294901760
    %v3146 = vsub.f32 %v3144, %v3145
    %v3147 = vand.u32 %v3146, 4294901760
    %3148 = vmatprep.subr.mxu0 %v3147
    %v3149 = vand.u32 %v2998, 4294901760
    %v3150 = vsub.f32 %v2998, %v3149
    %v3151 = vand.u32 %v3150, 4294901760
    %v3152 = vsub.f32 %v3150, %v3151
    %v3153 = vand.u32 %v3152, 4294901760
    %3154 = vmatpush1.msra.mxu0 %v3153
    %v3155 = vand.u32 %v3001, 4294901760
    %v3156 = vsub.f32 %v3001, %v3155
    %v3157 = vand.u32 %v3156, 4294901760
    %v3158 = vsub.f32 %v3156, %v3157
    %v3159 = vand.u32 %v3158, 4294901760
    %3160 = vmatprep.subr.mxu0 %v3159
    %v3161 = vand.u32 %v3000, 4294901760
    %v3162 = vsub.f32 %v3000, %v3161
    %v3163 = vand.u32 %v3162, 4294901760
    %v3164 = vsub.f32 %v3162, %v3163
    %v3165 = vand.u32 %v3164, 4294901760
    %3166 = vmatpush1.msra.mxu0 %v3165
    %v3167 = vand.u32 %v3003, 4294901760
    %v3168 = vsub.f32 %v3003, %v3167
    %v3169 = vand.u32 %v3168, 4294901760
    %v3170 = vsub.f32 %v3168, %v3169
    %v3171 = vand.u32 %v3170, 4294901760
    %3172 = vmatprep.subr.mxu0 %v3171
    %v3173 = vand.u32 %v3002, 4294901760
    %v3174 = vsub.f32 %v3002, %v3173
    %v3175 = vand.u32 %v3174, 4294901760
    %v3176 = vsub.f32 %v3174, %v3175
    %v3177 = vand.u32 %v3176, 4294901760
    %3178 = vmatpush1.msra.mxu0 %v3177
    %v3179 = vand.u32 %v3005, 4294901760
    %v3180 = vsub.f32 %v3005, %v3179
    %v3181 = vand.u32 %v3180, 4294901760
    %v3182 = vsub.f32 %v3180, %v3181
    %v3183 = vand.u32 %v3182, 4294901760
    %3184 = vmatprep.subr.mxu0 %v3183
    %v3185 = vand.u32 %v3004, 4294901760
    %v3186 = vsub.f32 %v3004, %v3185
    %v3187 = vand.u32 %v3186, 4294901760
    %v3188 = vsub.f32 %v3186, %v3187
    %v3189 = vand.u32 %v3188, 4294901760
    %3190 = vmatpush1.msra.mxu0 %v3189
    %v3191 = vand.u32 %v3007, 4294901760
    %v3192 = vsub.f32 %v3007, %v3191
    %v3193 = vand.u32 %v3192, 4294901760
    %v3194 = vsub.f32 %v3192, %v3193
    %v3195 = vand.u32 %v3194, 4294901760
    %3196 = vmatprep.subr.mxu0 %v3195
    %v3197 = vand.u32 %v3006, 4294901760
    %v3198 = vsub.f32 %v3006, %v3197
    %v3199 = vand.u32 %v3198, 4294901760
    %v3200 = vsub.f32 %v3198, %v3199
    %v3201 = vand.u32 %v3200, 4294901760
    %3202 = vmatpush1.msra.mxu0 %v3201
    %v3203 = vand.u32 %v3009, 4294901760
    %v3204 = vsub.f32 %v3009, %v3203
    %v3205 = vand.u32 %v3204, 4294901760
    %v3206 = vsub.f32 %v3204, %v3205
    %v3207 = vand.u32 %v3206, 4294901760
    %3208 = vmatprep.subr.mxu0 %v3207
    %v3209 = vand.u32 %v3008, 4294901760
    %v3210 = vsub.f32 %v3008, %v3209
    %v3211 = vand.u32 %v3210, 4294901760
    %v3212 = vsub.f32 %v3210, %v3211
    %v3213 = vand.u32 %v3212, 4294901760
    %3214 = vmatpush1.msra.mxu0 %v3213
    %3215 = vmatprep.subr.mxu0 0.0
    %3216 = vmatpush1.msra.mxu0 0.0
    %3217 = vmatprep.subr.mxu0 0.0
    %3218 = vmatpush1.msra.mxu0 0.0
    %3219 = vmatprep.subr.mxu0 0.0
    %3220 = vmatpush1.msra.mxu0 0.0
    %3221 = vmatprep.subr.mxu0 0.0
    %3222 = vmatpush1.msra.mxu0 0.0
    %3223 = vmatprep.subr.mxu0 0.0
    %3224 = vmatpush1.msra.mxu0 0.0
    %3225 = vmatprep.subr.mxu0 0.0
    %3226 = vmatpush1.msra.mxu0 0.0
    %3227 = vmatprep.subr.mxu0 0.0
    %3228 = vmatpush1.msra.mxu0 0.0
    %3229 = vmatprep.subr.mxu0 0.0
    %3230 = vmatpush1.msra.mxu0 0.0
    %3231 = vmatprep.subr.mxu0 0.0
    %3232 = vmatpush1.msra.mxu0 0.0
    %3233 = vmatprep.subr.mxu0 0.0
    %3234 = vmatpush1.msra.mxu0 0.0
    %3235 = vmatprep.subr.mxu0 0.0
    %3236 = vmatpush1.msra.mxu0 0.0
    %3237 = vmatprep.subr.mxu0 0.0
    %3238 = vmatpush1.msra.mxu0 0.0
    %3239 = vmatprep.subr.mxu0 0.0
    %3240 = vmatpush1.msra.mxu0 0.0
    %3241 = vmatprep.subr.mxu0 0.0
    %3242 = vmatpush1.msra.mxu0 0.0
    %3243 = vmatprep.subr.mxu0 0.0
    %3244 = vmatpush1.msra.mxu0 0.0
    %3245 = vmatprep.subr.mxu0 0.0
    %3246 = vmatpush1.msra.mxu0 0.0
    %3247 = vmatprep.subr.mxu0 0.0
    %3248 = vmatpush1.msra.mxu0 0.0
    %3249 = vmatprep.subr.mxu0 0.0
    %3250 = vmatpush1.msra.mxu0 0.0
    %3251 = vmatprep.subr.mxu0 0.0
    %3252 = vmatpush1.msra.mxu0 0.0
    %3253 = vmatprep.subr.mxu0 0.0
    %3254 = vmatpush1.msra.mxu0 0.0
    %3255 = vmatprep.subr.mxu0 0.0
    %3256 = vmatpush1.msra.mxu0 0.0
    %3257 = vmatprep.subr.mxu0 0.0
    %3258 = vmatpush1.msra.mxu0 0.0
    %3259 = vmatprep.subr.mxu0 0.0
    %3260 = vmatpush1.msra.mxu0 0.0
    %3261 = vmatprep.subr.mxu0 0.0
    %3262 = vmatpush1.msra.mxu0 0.0
    %3263 = vmatprep.mubr.f32.mxu0 0.0
    %v3264 = vand.u32 %v3025, 4294901760
    %3265 = vmatmul.mubr.f32.gmra.mrb[0].mxu0 %v3264
    %v3266 = vpop.f32.mrb[0].mxu0
    %v3267 = vadd.f32 %v3115, %v3266
    %v3268 = vpop.f32.mrb[0].mxu0
    %v3269 = vadd.f32 %v3117, %v3268
    %3270 = vdwg.mxu0
    %v3271 = vand.u32 %v2995, 4294901760
    %v3272 = vsub.f32 %v2995, %v3271
    %3273 = vmatprep.subr.mxu0 %v3272
    %v3274 = vand.u32 %v2994, 4294901760
    %v3275 = vsub.f32 %v2994, %v3274
    %3276 = vmatpush1.msra.mxu0 %v3275
    %v3277 = vand.u32 %v2997, 4294901760
    %v3278 = vsub.f32 %v2997, %v3277
    %3279 = vmatprep.subr.mxu0 %v3278
    %v3280 = vand.u32 %v2996, 4294901760
    %v3281 = vsub.f32 %v2996, %v3280
    %3282 = vmatpush1.msra.mxu0 %v3281
    %v3283 = vand.u32 %v2999, 4294901760
    %v3284 = vsub.f32 %v2999, %v3283
    %3285 = vmatprep.subr.mxu0 %v3284
    %v3286 = vand.u32 %v2998, 4294901760
    %v3287 = vsub.f32 %v2998, %v3286
    %3288 = vmatpush1.msra.mxu0 %v3287
    %v3289 = vand.u32 %v3001, 4294901760
    %v3290 = vsub.f32 %v3001, %v3289
    %3291 = vmatprep.subr.mxu0 %v3290
    %v3292 = vand.u32 %v3000, 4294901760
    %v3293 = vsub.f32 %v3000, %v3292
    %3294 = vmatpush1.msra.mxu0 %v3293
    %v3295 = vand.u32 %v3003, 4294901760
    %v3296 = vsub.f32 %v3003, %v3295
    %3297 = vmatprep.subr.mxu0 %v3296
    %v3298 = vand.u32 %v3002, 4294901760
    %v3299 = vsub.f32 %v3002, %v3298
    %3300 = vmatpush1.msra.mxu0 %v3299
    %v3301 = vand.u32 %v3005, 4294901760
    %v3302 = vsub.f32 %v3005, %v3301
    %3303 = vmatprep.subr.mxu0 %v3302
    %v3304 = vand.u32 %v3004, 4294901760
    %v3305 = vsub.f32 %v3004, %v3304
    %3306 = vmatpush1.msra.mxu0 %v3305
    %v3307 = vand.u32 %v3007, 4294901760
    %v3308 = vsub.f32 %v3007, %v3307
    %3309 = vmatprep.subr.mxu0 %v3308
    %v3310 = vand.u32 %v3006, 4294901760
    %v3311 = vsub.f32 %v3006, %v3310
    %3312 = vmatpush1.msra.mxu0 %v3311
    %v3313 = vand.u32 %v3009, 4294901760
    %v3314 = vsub.f32 %v3009, %v3313
    %3315 = vmatprep.subr.mxu0 %v3314
    %v3316 = vand.u32 %v3008, 4294901760
    %v3317 = vsub.f32 %v3008, %v3316
    %3318 = vmatpush1.msra.mxu0 %v3317
    %3319 = vmatprep.subr.mxu0 0.0
    %3320 = vmatpush1.msra.mxu0 0.0
    %3321 = vmatprep.subr.mxu0 0.0
    %3322 = vmatpush1.msra.mxu0 0.0
    %3323 = vmatprep.subr.mxu0 0.0
    %3324 = vmatpush1.msra.mxu0 0.0
    %3325 = vmatprep.subr.mxu0 0.0
    %3326 = vmatpush1.msra.mxu0 0.0
    %3327 = vmatprep.subr.mxu0 0.0
    %3328 = vmatpush1.msra.mxu0 0.0
    %3329 = vmatprep.subr.mxu0 0.0
    %3330 = vmatpush1.msra.mxu0 0.0
    %3331 = vmatprep.subr.mxu0 0.0
    %3332 = vmatpush1.msra.mxu0 0.0
    %3333 = vmatprep.subr.mxu0 0.0
    %3334 = vmatpush1.msra.mxu0 0.0
    %3335 = vmatprep.subr.mxu0 0.0
    %3336 = vmatpush1.msra.mxu0 0.0
    %3337 = vmatprep.subr.mxu0 0.0
    %3338 = vmatpush1.msra.mxu0 0.0
    %3339 = vmatprep.subr.mxu0 0.0
    %3340 = vmatpush1.msra.mxu0 0.0
    %3341 = vmatprep.subr.mxu0 0.0
    %3342 = vmatpush1.msra.mxu0 0.0
    %3343 = vmatprep.subr.mxu0 0.0
    %3344 = vmatpush1.msra.mxu0 0.0
    %3345 = vmatprep.subr.mxu0 0.0
    %3346 = vmatpush1.msra.mxu0 0.0
    %3347 = vmatprep.subr.mxu0 0.0
    %3348 = vmatpush1.msra.mxu0 0.0
    %3349 = vmatprep.subr.mxu0 0.0
    %3350 = vmatpush1.msra.mxu0 0.0
    %3351 = vmatprep.subr.mxu0 0.0
    %3352 = vmatpush1.msra.mxu0 0.0
    %3353 = vmatprep.subr.mxu0 0.0
    %3354 = vmatpush1.msra.mxu0 0.0
    %3355 = vmatprep.subr.mxu0 0.0
    %3356 = vmatpush1.msra.mxu0 0.0
    %3357 = vmatprep.subr.mxu0 0.0
    %3358 = vmatpush1.msra.mxu0 0.0
    %3359 = vmatprep.subr.mxu0 0.0
    %3360 = vmatpush1.msra.mxu0 0.0
    %3361 = vmatprep.subr.mxu0 0.0
    %3362 = vmatpush1.msra.mxu0 0.0
    %3363 = vmatprep.subr.mxu0 0.0
    %3364 = vmatpush1.msra.mxu0 0.0
    %3365 = vmatprep.subr.mxu0 0.0
    %3366 = vmatpush1.msra.mxu0 0.0
    %3367 = vmatprep.mubr.f32.mxu0 0.0
    %v3368 = vand.u32 %v3025, 4294901760
    %v3369 = vsub.f32 %v3025, %v3368
    %3370 = vmatmul.mubr.f32.gmra.mrb[0].mxu0 %v3369
    %v3371 = vpop.f32.mrb[0].mxu0
    %v3372 = vadd.f32 %v3267, %v3371
    %v3373 = vpop.f32.mrb[0].mxu0
    %v3374 = vadd.f32 %v3269, %v3373
    %3375 = vdwg.mxu0
    %v3376 = vand.u32 %v2995, 4294901760
    %3377 = vmatprep.subr.mxu0 %v3376
    %v3378 = vand.u32 %v2994, 4294901760
    %3379 = vmatpush1.msra.mxu0 %v3378
    %v3380 = vand.u32 %v2997, 4294901760
    %3381 = vmatprep.subr.mxu0 %v3380
    %v3382 = vand.u32 %v2996, 4294901760
    %3383 = vmatpush1.msra.mxu0 %v3382
    %v3384 = vand.u32 %v2999, 4294901760
    %3385 = vmatprep.subr.mxu0 %v3384
    %v3386 = vand.u32 %v2998, 4294901760
    %3387 = vmatpush1.msra.mxu0 %v3386
    %v3388 = vand.u32 %v3001, 4294901760
    %3389 = vmatprep.subr.mxu0 %v3388
    %v3390 = vand.u32 %v3000, 4294901760
    %3391 = vmatpush1.msra.mxu0 %v3390
    %v3392 = vand.u32 %v3003, 4294901760
    %3393 = vmatprep.subr.mxu0 %v3392
    %v3394 = vand.u32 %v3002, 4294901760
    %3395 = vmatpush1.msra.mxu0 %v3394
    %v3396 = vand.u32 %v3005, 4294901760
    %3397 = vmatprep.subr.mxu0 %v3396
    %v3398 = vand.u32 %v3004, 4294901760
    %3399 = vmatpush1.msra.mxu0 %v3398
    %v3400 = vand.u32 %v3007, 4294901760
    %3401 = vmatprep.subr.mxu0 %v3400
    %v3402 = vand.u32 %v3006, 4294901760
    %3403 = vmatpush1.msra.mxu0 %v3402
    %v3404 = vand.u32 %v3009, 4294901760
    %3405 = vmatprep.subr.mxu0 %v3404
    %v3406 = vand.u32 %v3008, 4294901760
    %3407 = vmatpush1.msra.mxu0 %v3406
    %3408 = vmatprep.subr.mxu0 0.0
    %3409 = vmatpush1.msra.mxu0 0.0
    %3410 = vmatprep.subr.mxu0 0.0
    %3411 = vmatpush1.msra.mxu0 0.0
    %3412 = vmatprep.subr.mxu0 0.0
    %3413 = vmatpush1.msra.mxu0 0.0
    %3414 = vmatprep.subr.mxu0 0.0
    %3415 = vmatpush1.msra.mxu0 0.0
    %3416 = vmatprep.subr.mxu0 0.0
    %3417 = vmatpush1.msra.mxu0 0.0
    %3418 = vmatprep.subr.mxu0 0.0
    %3419 = vmatpush1.msra.mxu0 0.0
    %3420 = vmatprep.subr.mxu0 0.0
    %3421 = vmatpush1.msra.mxu0 0.0
    %3422 = vmatprep.subr.mxu0 0.0
    %3423 = vmatpush1.msra.mxu0 0.0
    %3424 = vmatprep.subr.mxu0 0.0
    %3425 = vmatpush1.msra.mxu0 0.0
    %3426 = vmatprep.subr.mxu0 0.0
    %3427 = vmatpush1.msra.mxu0 0.0
    %3428 = vmatprep.subr.mxu0 0.0
    %3429 = vmatpush1.msra.mxu0 0.0
    %3430 = vmatprep.subr.mxu0 0.0
    %3431 = vmatpush1.msra.mxu0 0.0
    %3432 = vmatprep.subr.mxu0 0.0
    %3433 = vmatpush1.msra.mxu0 0.0
    %3434 = vmatprep.subr.mxu0 0.0
    %3435 = vmatpush1.msra.mxu0 0.0
    %3436 = vmatprep.subr.mxu0 0.0
    %3437 = vmatpush1.msra.mxu0 0.0
    %3438 = vmatprep.subr.mxu0 0.0
    %3439 = vmatpush1.msra.mxu0 0.0
    %3440 = vmatprep.subr.mxu0 0.0
    %3441 = vmatpush1.msra.mxu0 0.0
    %3442 = vmatprep.subr.mxu0 0.0
    %3443 = vmatpush1.msra.mxu0 0.0
    %3444 = vmatprep.subr.mxu0 0.0
    %3445 = vmatpush1.msra.mxu0 0.0
    %3446 = vmatprep.subr.mxu0 0.0
    %3447 = vmatpush1.msra.mxu0 0.0
    %3448 = vmatprep.subr.mxu0 0.0
    %3449 = vmatpush1.msra.mxu0 0.0
    %3450 = vmatprep.subr.mxu0 0.0
    %3451 = vmatpush1.msra.mxu0 0.0
    %3452 = vmatprep.subr.mxu0 0.0
    %3453 = vmatpush1.msra.mxu0 0.0
    %3454 = vmatprep.subr.mxu0 0.0
    %3455 = vmatpush1.msra.mxu0 0.0
    %3456 = vmatprep.mubr.f32.mxu0 0.0
    %v3457 = vand.u32 %v3025, 4294901760
    %v3458 = vsub.f32 %v3025, %v3457
    %v3459 = vand.u32 %v3458, 4294901760
    %3460 = vmatmul.mubr.f32.gmra.mrb[0].mxu0 %v3459
    %v3461 = vpop.f32.mrb[0].mxu0
    %v3462 = vadd.f32 %v3372, %v3461
    %v3463 = vpop.f32.mrb[0].mxu0
    %v3464 = vadd.f32 %v3374, %v3463
    %3465 = vdwg.mxu0
    %v3466 = vand.u32 %v2995, 4294901760
    %v3467 = vsub.f32 %v2995, %v3466
    %v3468 = vand.u32 %v3467, 4294901760
    %3469 = vmatprep.subr.mxu0 %v3468
    %v3470 = vand.u32 %v2994, 4294901760
    %v3471 = vsub.f32 %v2994, %v3470
    %v3472 = vand.u32 %v3471, 4294901760
    %3473 = vmatpush1.msra.mxu0 %v3472
    %v3474 = vand.u32 %v2997, 4294901760
    %v3475 = vsub.f32 %v2997, %v3474
    %v3476 = vand.u32 %v3475, 4294901760
    %3477 = vmatprep.subr.mxu0 %v3476
    %v3478 = vand.u32 %v2996, 4294901760
    %v3479 = vsub.f32 %v2996, %v3478
    %v3480 = vand.u32 %v3479, 4294901760
    %3481 = vmatpush1.msra.mxu0 %v3480
    %v3482 = vand.u32 %v2999, 4294901760
    %v3483 = vsub.f32 %v2999, %v3482
    %v3484 = vand.u32 %v3483, 4294901760
    %3485 = vmatprep.subr.mxu0 %v3484
    %v3486 = vand.u32 %v2998, 4294901760
    %v3487 = vsub.f32 %v2998, %v3486
    %v3488 = vand.u32 %v3487, 4294901760
    %3489 = vmatpush1.msra.mxu0 %v3488
    %v3490 = vand.u32 %v3001, 4294901760
    %v3491 = vsub.f32 %v3001, %v3490
    %v3492 = vand.u32 %v3491, 4294901760
    %3493 = vmatprep.subr.mxu0 %v3492
    %v3494 = vand.u32 %v3000, 4294901760
    %v3495 = vsub.f32 %v3000, %v3494
    %v3496 = vand.u32 %v3495, 4294901760
    %3497 = vmatpush1.msra.mxu0 %v3496
    %v3498 = vand.u32 %v3003, 4294901760
    %v3499 = vsub.f32 %v3003, %v3498
    %v3500 = vand.u32 %v3499, 4294901760
    %3501 = vmatprep.subr.mxu0 %v3500
    %v3502 = vand.u32 %v3002, 4294901760
    %v3503 = vsub.f32 %v3002, %v3502
    %v3504 = vand.u32 %v3503, 4294901760
    %3505 = vmatpush1.msra.mxu0 %v3504
    %v3506 = vand.u32 %v3005, 4294901760
    %v3507 = vsub.f32 %v3005, %v3506
    %v3508 = vand.u32 %v3507, 4294901760
    %3509 = vmatprep.subr.mxu0 %v3508
    %v3510 = vand.u32 %v3004, 4294901760
    %v3511 = vsub.f32 %v3004, %v3510
    %v3512 = vand.u32 %v3511, 4294901760
    %3513 = vmatpush1.msra.mxu0 %v3512
    %v3514 = vand.u32 %v3007, 4294901760
    %v3515 = vsub.f32 %v3007, %v3514
    %v3516 = vand.u32 %v3515, 4294901760
    %3517 = vmatprep.subr.mxu0 %v3516
    %v3518 = vand.u32 %v3006, 4294901760
    %v3519 = vsub.f32 %v3006, %v3518
    %v3520 = vand.u32 %v3519, 4294901760
    %3521 = vmatpush1.msra.mxu0 %v3520
    %v3522 = vand.u32 %v3009, 4294901760
    %v3523 = vsub.f32 %v3009, %v3522
    %v3524 = vand.u32 %v3523, 4294901760
    %3525 = vmatprep.subr.mxu0 %v3524
    %v3526 = vand.u32 %v3008, 4294901760
    %v3527 = vsub.f32 %v3008, %v3526
    %v3528 = vand.u32 %v3527, 4294901760
    %3529 = vmatpush1.msra.mxu0 %v3528
    %3530 = vmatprep.subr.mxu0 0.0
    %3531 = vmatpush1.msra.mxu0 0.0
    %3532 = vmatprep.subr.mxu0 0.0
    %3533 = vmatpush1.msra.mxu0 0.0
    %3534 = vmatprep.subr.mxu0 0.0
    %3535 = vmatpush1.msra.mxu0 0.0
    %3536 = vmatprep.subr.mxu0 0.0
    %3537 = vmatpush1.msra.mxu0 0.0
    %3538 = vmatprep.subr.mxu0 0.0
    %3539 = vmatpush1.msra.mxu0 0.0
    %3540 = vmatprep.subr.mxu0 0.0
    %3541 = vmatpush1.msra.mxu0 0.0
    %3542 = vmatprep.subr.mxu0 0.0
    %3543 = vmatpush1.msra.mxu0 0.0
    %3544 = vmatprep.subr.mxu0 0.0
    %3545 = vmatpush1.msra.mxu0 0.0
    %3546 = vmatprep.subr.mxu0 0.0
    %3547 = vmatpush1.msra.mxu0 0.0
    %3548 = vmatprep.subr.mxu0 0.0
    %3549 = vmatpush1.msra.mxu0 0.0
    %3550 = vmatprep.subr.mxu0 0.0
    %3551 = vmatpush1.msra.mxu0 0.0
    %3552 = vmatprep.subr.mxu0 0.0
    %3553 = vmatpush1.msra.mxu0 0.0
    %3554 = vmatprep.subr.mxu0 0.0
    %3555 = vmatpush1.msra.mxu0 0.0
    %3556 = vmatprep.subr.mxu0 0.0
    %3557 = vmatpush1.msra.mxu0 0.0
    %3558 = vmatprep.subr.mxu0 0.0
    %3559 = vmatpush1.msra.mxu0 0.0
    %3560 = vmatprep.subr.mxu0 0.0
    %3561 = vmatpush1.msra.mxu0 0.0
    %3562 = vmatprep.subr.mxu0 0.0
    %3563 = vmatpush1.msra.mxu0 0.0
    %3564 = vmatprep.subr.mxu0 0.0
    %3565 = vmatpush1.msra.mxu0 0.0
    %3566 = vmatprep.subr.mxu0 0.0
    %3567 = vmatpush1.msra.mxu0 0.0
    %3568 = vmatprep.subr.mxu0 0.0
    %3569 = vmatpush1.msra.mxu0 0.0
    %3570 = vmatprep.subr.mxu0 0.0
    %3571 = vmatpush1.msra.mxu0 0.0
    %3572 = vmatprep.subr.mxu0 0.0
    %3573 = vmatpush1.msra.mxu0 0.0
    %3574 = vmatprep.subr.mxu0 0.0
    %3575 = vmatpush1.msra.mxu0 0.0
    %3576 = vmatprep.subr.mxu0 0.0
    %3577 = vmatpush1.msra.mxu0 0.0
    %3578 = vmatprep.mubr.f32.mxu0 0.0
    %v3579 = vand.u32 %v3025, 4294901760
    %3580 = vmatmul.mubr.f32.gmra.mrb[0].mxu0 %v3579
    %v3581 = vpop.f32.mrb[0].mxu0
    %v3582 = vadd.f32 %v3462, %v3581
    %v3583 = vpop.f32.mrb[0].mxu0
    %v3584 = vadd.f32 %v3464, %v3583
    %3585 = vdwg.mxu0
    %v3586 = vand.u32 %v2995, 4294901760
    %3587 = vmatprep.subr.mxu0 %v3586
    %v3588 = vand.u32 %v2994, 4294901760
    %3589 = vmatpush1.msra.mxu0 %v3588
    %v3590 = vand.u32 %v2997, 4294901760
    %3591 = vmatprep.subr.mxu0 %v3590
    %v3592 = vand.u32 %v2996, 4294901760
    %3593 = vmatpush1.msra.mxu0 %v3592
    %v3594 = vand.u32 %v2999, 4294901760
    %3595 = vmatprep.subr.mxu0 %v3594
    %v3596 = vand.u32 %v2998, 4294901760
    %3597 = vmatpush1.msra.mxu0 %v3596
    %v3598 = vand.u32 %v3001, 4294901760
    %3599 = vmatprep.subr.mxu0 %v3598
    %v3600 = vand.u32 %v3000, 4294901760
    %3601 = vmatpush1.msra.mxu0 %v3600
    %v3602 = vand.u32 %v3003, 4294901760
    %3603 = vmatprep.subr.mxu0 %v3602
    %v3604 = vand.u32 %v3002, 4294901760
    %3605 = vmatpush1.msra.mxu0 %v3604
    %v3606 = vand.u32 %v3005, 4294901760
    %3607 = vmatprep.subr.mxu0 %v3606
    %v3608 = vand.u32 %v3004, 4294901760
    %3609 = vmatpush1.msra.mxu0 %v3608
    %v3610 = vand.u32 %v3007, 4294901760
    %3611 = vmatprep.subr.mxu0 %v3610
    %v3612 = vand.u32 %v3006, 4294901760
    %3613 = vmatpush1.msra.mxu0 %v3612
    %v3614 = vand.u32 %v3009, 4294901760
    %3615 = vmatprep.subr.mxu0 %v3614
    %v3616 = vand.u32 %v3008, 4294901760
    %3617 = vmatpush1.msra.mxu0 %v3616
    %3618 = vmatprep.subr.mxu0 0.0
    %3619 = vmatpush1.msra.mxu0 0.0
    %3620 = vmatprep.subr.mxu0 0.0
    %3621 = vmatpush1.msra.mxu0 0.0
    %3622 = vmatprep.subr.mxu0 0.0
    %3623 = vmatpush1.msra.mxu0 0.0
    %3624 = vmatprep.subr.mxu0 0.0
    %3625 = vmatpush1.msra.mxu0 0.0
    %3626 = vmatprep.subr.mxu0 0.0
    %3627 = vmatpush1.msra.mxu0 0.0
    %3628 = vmatprep.subr.mxu0 0.0
    %3629 = vmatpush1.msra.mxu0 0.0
    %3630 = vmatprep.subr.mxu0 0.0
    %3631 = vmatpush1.msra.mxu0 0.0
    %3632 = vmatprep.subr.mxu0 0.0
    %3633 = vmatpush1.msra.mxu0 0.0
    %3634 = vmatprep.subr.mxu0 0.0
    %3635 = vmatpush1.msra.mxu0 0.0
    %3636 = vmatprep.subr.mxu0 0.0
    %3637 = vmatpush1.msra.mxu0 0.0
    %3638 = vmatprep.subr.mxu0 0.0
    %3639 = vmatpush1.msra.mxu0 0.0
    %3640 = vmatprep.subr.mxu0 0.0
    %3641 = vmatpush1.msra.mxu0 0.0
    %3642 = vmatprep.subr.mxu0 0.0
    %3643 = vmatpush1.msra.mxu0 0.0
    %3644 = vmatprep.subr.mxu0 0.0
    %3645 = vmatpush1.msra.mxu0 0.0
    %3646 = vmatprep.subr.mxu0 0.0
    %3647 = vmatpush1.msra.mxu0 0.0
    %3648 = vmatprep.subr.mxu0 0.0
    %3649 = vmatpush1.msra.mxu0 0.0
    %3650 = vmatprep.subr.mxu0 0.0
    %3651 = vmatpush1.msra.mxu0 0.0
    %3652 = vmatprep.subr.mxu0 0.0
    %3653 = vmatpush1.msra.mxu0 0.0
    %3654 = vmatprep.subr.mxu0 0.0
    %3655 = vmatpush1.msra.mxu0 0.0
    %3656 = vmatprep.subr.mxu0 0.0
    %3657 = vmatpush1.msra.mxu0 0.0
    %3658 = vmatprep.subr.mxu0 0.0
    %3659 = vmatpush1.msra.mxu0 0.0
    %3660 = vmatprep.subr.mxu0 0.0
    %3661 = vmatpush1.msra.mxu0 0.0
    %3662 = vmatprep.subr.mxu0 0.0
    %3663 = vmatpush1.msra.mxu0 0.0
    %3664 = vmatprep.subr.mxu0 0.0
    %3665 = vmatpush1.msra.mxu0 0.0
    %3666 = vmatprep.mubr.f32.mxu0 0.0
    %v3667 = vand.u32 %v3025, 4294901760
    %3668 = vmatmul.mubr.f32.gmra.mrb[0].mxu0 %v3667
    %v3669 = vpop.f32.mrb[0].mxu0
    %v3670 = vadd.f32 %v3582, %v3669
    %v3671 = vpop.f32.mrb[0].mxu0
    %v3672 = vadd.f32 %v3584, %v3671
    %3673 = vdwg.mxu0
    %v3674 = vadd.f32 %v2990, %v3670
    %v3675 = vxor.u32 %v3674, 2147483648
    %v3676 = vmul.f32 %v3675, 1.442695
    %v3677 = vpow.pop %v3676
    %v3678 = vadd.f32 %v3677, 1.0
    %v3679 = vrcp.pop %v3678
    %v3680 = vmul.f32 1.0, %v3679
    %v3681 = vmul.f32 %v3680, %v3672
    %v3682 = vadd.f32 %v2992, %v3681
    %v3683 = vtanh.pop %v3682
    %v3684 = vsub.f32 1.0, %v3680
    %3686 = vrot.lane.b32.xlu0 %v3683, 64
    %v3687 = vpop.permute.xlu0 %3686
    %v3689 = vmul.f32 %v3684, %v3687
    %3690 = vrot.lane.b32.xlu0 %v3024, 64
    %v3691 = vpop.permute.xlu0 %3690
    %v3693 = vmul.f32 %v3680, %v3691
    %v3694 = vadd.f32 %v3689, %v3693
    %3696 = vrot.lane.b32.xlu0 %v3694, 64
    %v3697 = vpop.permute.xlu0 %3696
    %v3698 = vsel %vm99, %v3697, 0
    %3700 = vmatprep.subr.mxu0 0.0
    %v3701 = vand.u32 %v1521, 4294901760
    %3702 = vmatpush1.msra.mxu0 %v3701
    %3703 = vmatprep.subr.mxu0 0.0
    %v3704 = vand.u32 %v1522, 4294901760
    %3705 = vmatpush1.msra.mxu0 %v3704
    %3706 = vmatprep.subr.mxu0 0.0
    %v3707 = vand.u32 %v1523, 4294901760
    %3708 = vmatpush1.msra.mxu0 %v3707
    %3709 = vmatprep.subr.mxu0 0.0
    %v3710 = vand.u32 %v1524, 4294901760
    %3711 = vmatpush1.msra.mxu0 %v3710
    %3712 = vmatprep.subr.mxu0 0.0
    %v3713 = vand.u32 %v1525, 4294901760
    %3714 = vmatpush1.msra.mxu0 %v3713
    %3715 = vmatprep.subr.mxu0 0.0
    %v3716 = vand.u32 %v1526, 4294901760
    %3717 = vmatpush1.msra.mxu0 %v3716
    %3718 = vmatprep.subr.mxu0 0.0
    %v3719 = vand.u32 %v1527, 4294901760
    %3720 = vmatpush1.msra.mxu0 %v3719
    %3721 = vmatprep.subr.mxu0 0.0
    %v3722 = vand.u32 %v1528, 4294901760
    %3723 = vmatpush1.msra.mxu0 %v3722
    %3724 = vmatprep.subr.mxu0 0.0
    %3725 = vmatpush1.msra.mxu0 0.0
    %3726 = vmatprep.subr.mxu0 0.0
    %3727 = vmatpush1.msra.mxu0 0.0
    %3728 = vmatprep.subr.mxu0 0.0
    %3729 = vmatpush1.msra.mxu0 0.0
    %3730 = vmatprep.subr.mxu0 0.0
    %3731 = vmatpush1.msra.mxu0 0.0
    %3732 = vmatprep.subr.mxu0 0.0
    %3733 = vmatpush1.msra.mxu0 0.0
    %3734 = vmatprep.subr.mxu0 0.0
    %3735 = vmatpush1.msra.mxu0 0.0
    %3736 = vmatprep.subr.mxu0 0.0
    %3737 = vmatpush1.msra.mxu0 0.0
    %3738 = vmatprep.subr.mxu0 0.0
    %3739 = vmatpush1.msra.mxu0 0.0
    %3740 = vmatprep.subr.mxu0 0.0
    %3741 = vmatpush1.msra.mxu0 0.0
    %3742 = vmatprep.subr.mxu0 0.0
    %3743 = vmatpush1.msra.mxu0 0.0
    %3744 = vmatprep.subr.mxu0 0.0
    %3745 = vmatpush1.msra.mxu0 0.0
    %3746 = vmatprep.subr.mxu0 0.0
    %3747 = vmatpush1.msra.mxu0 0.0
    %3748 = vmatprep.subr.mxu0 0.0
    %3749 = vmatpush1.msra.mxu0 0.0
    %3750 = vmatprep.subr.mxu0 0.0
    %3751 = vmatpush1.msra.mxu0 0.0
    %3752 = vmatprep.subr.mxu0 0.0
    %3753 = vmatpush1.msra.mxu0 0.0
    %3754 = vmatprep.subr.mxu0 0.0
    %3755 = vmatpush1.msra.mxu0 0.0
    %3756 = vmatprep.subr.mxu0 0.0
    %3757 = vmatpush1.msra.mxu0 0.0
    %3758 = vmatprep.subr.mxu0 0.0
    %3759 = vmatpush1.msra.mxu0 0.0
    %3760 = vmatprep.subr.mxu0 0.0
    %3761 = vmatpush1.msra.mxu0 0.0
    %3762 = vmatprep.subr.mxu0 0.0
    %3763 = vmatpush1.msra.mxu0 0.0
    %3764 = vmatprep.subr.mxu0 0.0
    %3765 = vmatpush1.msra.mxu0 0.0
    %3766 = vmatprep.subr.mxu0 0.0
    %3767 = vmatpush1.msra.mxu0 0.0
    %3768 = vmatprep.subr.mxu0 0.0
    %3769 = vmatpush1.msra.mxu0 0.0
    %3770 = vmatprep.subr.mxu0 0.0
    %3771 = vmatpush1.msra.mxu0 0.0
    %3772 = vmatprep.mubr.f32.mxu0 0.0
    %v3773 = vand.u32 %v3698, 4294901760
    %v3774 = vsub.f32 %v3698, %v3773
    %v3775 = vand.u32 %v3774, 4294901760
    %v3776 = vsub.f32 %v3774, %v3775
    %v3777 = vand.u32 %v3776, 4294901760
    %3778 = vmatmul.mubr.f32.gmra.mrb[0].mxu0 %v3777
    %v3779 = vpop.f32.mrb[0].mxu0
    %v3780 = vadd.f32 %v1534, %v3779
    %v3781 = vpop.f32.mrb[0].mxu0
    %3782 = vdwg.mxu0
    %3783 = vmatprep.subr.mxu0 0.0
    %v3784 = vand.u32 %v1521, 4294901760
    %v3785 = vsub.f32 %v1521, %v3784
    %v3786 = vand.u32 %v3785, 4294901760
    %v3787 = vsub.f32 %v3785, %v3786
    %v3788 = vand.u32 %v3787, 4294901760
    %3789 = vmatpush1.msra.mxu0 %v3788
    %3790 = vmatprep.subr.mxu0 0.0
    %v3791 = vand.u32 %v1522, 4294901760
    %v3792 = vsub.f32 %v1522, %v3791
    %v3793 = vand.u32 %v3792, 4294901760
    %v3794 = vsub.f32 %v3792, %v3793
    %v3795 = vand.u32 %v3794, 4294901760
    %3796 = vmatpush1.msra.mxu0 %v3795
    %3797 = vmatprep.subr.mxu0 0.0
    %v3798 = vand.u32 %v1523, 4294901760
    %v3799 = vsub.f32 %v1523, %v3798
    %v3800 = vand.u32 %v3799, 4294901760
    %v3801 = vsub.f32 %v3799, %v3800
    %v3802 = vand.u32 %v3801, 4294901760
    %3803 = vmatpush1.msra.mxu0 %v3802
    %3804 = vmatprep.subr.mxu0 0.0
    %v3805 = vand.u32 %v1524, 4294901760
    %v3806 = vsub.f32 %v1524, %v3805
    %v3807 = vand.u32 %v3806, 4294901760
    %v3808 = vsub.f32 %v3806, %v3807
    %v3809 = vand.u32 %v3808, 4294901760
    %3810 = vmatpush1.msra.mxu0 %v3809
    %3811 = vmatprep.subr.mxu0 0.0
    %v3812 = vand.u32 %v1525, 4294901760
    %v3813 = vsub.f32 %v1525, %v3812
    %v3814 = vand.u32 %v3813, 4294901760
    %v3815 = vsub.f32 %v3813, %v3814
    %v3816 = vand.u32 %v3815, 4294901760
    %3817 = vmatpush1.msra.mxu0 %v3816
    %3818 = vmatprep.subr.mxu0 0.0
    %v3819 = vand.u32 %v1526, 4294901760
    %v3820 = vsub.f32 %v1526, %v3819
    %v3821 = vand.u32 %v3820, 4294901760
    %v3822 = vsub.f32 %v3820, %v3821
    %v3823 = vand.u32 %v3822, 4294901760
    %3824 = vmatpush1.msra.mxu0 %v3823
    %3825 = vmatprep.subr.mxu0 0.0
    %v3826 = vand.u32 %v1527, 4294901760
    %v3827 = vsub.f32 %v1527, %v3826
    %v3828 = vand.u32 %v3827, 4294901760
    %v3829 = vsub.f32 %v3827, %v3828
    %v3830 = vand.u32 %v3829, 4294901760
    %3831 = vmatpush1.msra.mxu0 %v3830
    %3832 = vmatprep.subr.mxu0 0.0
    %v3833 = vand.u32 %v1528, 4294901760
    %v3834 = vsub.f32 %v1528, %v3833
    %v3835 = vand.u32 %v3834, 4294901760
    %v3836 = vsub.f32 %v3834, %v3835
    %v3837 = vand.u32 %v3836, 4294901760
    %3838 = vmatpush1.msra.mxu0 %v3837
    %3839 = vmatprep.subr.mxu0 0.0
    %3840 = vmatpush1.msra.mxu0 0.0
    %3841 = vmatprep.subr.mxu0 0.0
    %3842 = vmatpush1.msra.mxu0 0.0
    %3843 = vmatprep.subr.mxu0 0.0
    %3844 = vmatpush1.msra.mxu0 0.0
    %3845 = vmatprep.subr.mxu0 0.0
    %3846 = vmatpush1.msra.mxu0 0.0
    %3847 = vmatprep.subr.mxu0 0.0
    %3848 = vmatpush1.msra.mxu0 0.0
    %3849 = vmatprep.subr.mxu0 0.0
    %3850 = vmatpush1.msra.mxu0 0.0
    %3851 = vmatprep.subr.mxu0 0.0
    %3852 = vmatpush1.msra.mxu0 0.0
    %3853 = vmatprep.subr.mxu0 0.0
    %3854 = vmatpush1.msra.mxu0 0.0
    %3855 = vmatprep.subr.mxu0 0.0
    %3856 = vmatpush1.msra.mxu0 0.0
    %3857 = vmatprep.subr.mxu0 0.0
    %3858 = vmatpush1.msra.mxu0 0.0
    %3859 = vmatprep.subr.mxu0 0.0
    %3860 = vmatpush1.msra.mxu0 0.0
    %3861 = vmatprep.subr.mxu0 0.0
    %3862 = vmatpush1.msra.mxu0 0.0
    %3863 = vmatprep.subr.mxu0 0.0
    %3864 = vmatpush1.msra.mxu0 0.0
    %3865 = vmatprep.subr.mxu0 0.0
    %3866 = vmatpush1.msra.mxu0 0.0
    %3867 = vmatprep.subr.mxu0 0.0
    %3868 = vmatpush1.msra.mxu0 0.0
    %3869 = vmatprep.subr.mxu0 0.0
    %3870 = vmatpush1.msra.mxu0 0.0
    %3871 = vmatprep.subr.mxu0 0.0
    %3872 = vmatpush1.msra.mxu0 0.0
    %3873 = vmatprep.subr.mxu0 0.0
    %3874 = vmatpush1.msra.mxu0 0.0
    %3875 = vmatprep.subr.mxu0 0.0
    %3876 = vmatpush1.msra.mxu0 0.0
    %3877 = vmatprep.subr.mxu0 0.0
    %3878 = vmatpush1.msra.mxu0 0.0
    %3879 = vmatprep.subr.mxu0 0.0
    %3880 = vmatpush1.msra.mxu0 0.0
    %3881 = vmatprep.subr.mxu0 0.0
    %3882 = vmatpush1.msra.mxu0 0.0
    %3883 = vmatprep.subr.mxu0 0.0
    %3884 = vmatpush1.msra.mxu0 0.0
    %3885 = vmatprep.subr.mxu0 0.0
    %3886 = vmatpush1.msra.mxu0 0.0
    %3887 = vmatprep.mubr.f32.mxu0 0.0
    %v3888 = vand.u32 %v3698, 4294901760
    %3889 = vmatmul.mubr.f32.gmra.mrb[0].mxu0 %v3888
    %v3890 = vpop.f32.mrb[0].mxu0
    %v3891 = vadd.f32 %v3780, %v3890
    %v3892 = vpop.f32.mrb[0].mxu0
    %3893 = vdwg.mxu0
    %3894 = vmatprep.subr.mxu0 0.0
    %v3895 = vand.u32 %v1521, 4294901760
    %v3896 = vsub.f32 %v1521, %v3895
    %3897 = vmatpush1.msra.mxu0 %v3896
    %3898 = vmatprep.subr.mxu0 0.0
    %v3899 = vand.u32 %v1522, 4294901760
    %v3900 = vsub.f32 %v1522, %v3899
    %3901 = vmatpush1.msra.mxu0 %v3900
    %3902 = vmatprep.subr.mxu0 0.0
    %v3903 = vand.u32 %v1523, 4294901760
    %v3904 = vsub.f32 %v1523, %v3903
    %3905 = vmatpush1.msra.mxu0 %v3904
    %3906 = vmatprep.subr.mxu0 0.0
    %v3907 = vand.u32 %v1524, 4294901760
    %v3908 = vsub.f32 %v1524, %v3907
    %3909 = vmatpush1.msra.mxu0 %v3908
    %3910 = vmatprep.subr.mxu0 0.0
    %v3911 = vand.u32 %v1525, 4294901760
    %v3912 = vsub.f32 %v1525, %v3911
    %3913 = vmatpush1.msra.mxu0 %v3912
    %3914 = vmatprep.subr.mxu0 0.0
    %v3915 = vand.u32 %v1526, 4294901760
    %v3916 = vsub.f32 %v1526, %v3915
    %3917 = vmatpush1.msra.mxu0 %v3916
    %3918 = vmatprep.subr.mxu0 0.0
    %v3919 = vand.u32 %v1527, 4294901760
    %v3920 = vsub.f32 %v1527, %v3919
    %3921 = vmatpush1.msra.mxu0 %v3920
    %3922 = vmatprep.subr.mxu0 0.0
    %v3923 = vand.u32 %v1528, 4294901760
    %v3924 = vsub.f32 %v1528, %v3923
    %3925 = vmatpush1.msra.mxu0 %v3924
    %3926 = vmatprep.subr.mxu0 0.0
    %3927 = vmatpush1.msra.mxu0 0.0
    %3928 = vmatprep.subr.mxu0 0.0
    %3929 = vmatpush1.msra.mxu0 0.0
    %3930 = vmatprep.subr.mxu0 0.0
    %3931 = vmatpush1.msra.mxu0 0.0
    %3932 = vmatprep.subr.mxu0 0.0
    %3933 = vmatpush1.msra.mxu0 0.0
    %3934 = vmatprep.subr.mxu0 0.0
    %3935 = vmatpush1.msra.mxu0 0.0
    %3936 = vmatprep.subr.mxu0 0.0
    %3937 = vmatpush1.msra.mxu0 0.0
    %3938 = vmatprep.subr.mxu0 0.0
    %3939 = vmatpush1.msra.mxu0 0.0
    %3940 = vmatprep.subr.mxu0 0.0
    %3941 = vmatpush1.msra.mxu0 0.0
    %3942 = vmatprep.subr.mxu0 0.0
    %3943 = vmatpush1.msra.mxu0 0.0
    %3944 = vmatprep.subr.mxu0 0.0
    %3945 = vmatpush1.msra.mxu0 0.0
    %3946 = vmatprep.subr.mxu0 0.0
    %3947 = vmatpush1.msra.mxu0 0.0
    %3948 = vmatprep.subr.mxu0 0.0
    %3949 = vmatpush1.msra.mxu0 0.0
    %3950 = vmatprep.subr.mxu0 0.0
    %3951 = vmatpush1.msra.mxu0 0.0
    %3952 = vmatprep.subr.mxu0 0.0
    %3953 = vmatpush1.msra.mxu0 0.0
    %3954 = vmatprep.subr.mxu0 0.0
    %3955 = vmatpush1.msra.mxu0 0.0
    %3956 = vmatprep.subr.mxu0 0.0
    %3957 = vmatpush1.msra.mxu0 0.0
    %3958 = vmatprep.subr.mxu0 0.0
    %3959 = vmatpush1.msra.mxu0 0.0
    %3960 = vmatprep.subr.mxu0 0.0
    %3961 = vmatpush1.msra.mxu0 0.0
    %3962 = vmatprep.subr.mxu0 0.0
    %3963 = vmatpush1.msra.mxu0 0.0
    %3964 = vmatprep.subr.mxu0 0.0
    %3965 = vmatpush1.msra.mxu0 0.0
    %3966 = vmatprep.subr.mxu0 0.0
    %3967 = vmatpush1.msra.mxu0 0.0
    %3968 = vmatprep.subr.mxu0 0.0
    %3969 = vmatpush1.msra.mxu0 0.0
    %3970 = vmatprep.subr.mxu0 0.0
    %3971 = vmatpush1.msra.mxu0 0.0
    %3972 = vmatprep.subr.mxu0 0.0
    %3973 = vmatpush1.msra.mxu0 0.0
    %3974 = vmatprep.mubr.f32.mxu0 0.0
    %v3975 = vand.u32 %v3698, 4294901760
    %v3976 = vsub.f32 %v3698, %v3975
    %3977 = vmatmul.mubr.f32.gmra.mrb[0].mxu0 %v3976
    %v3978 = vpop.f32.mrb[0].mxu0
    %v3979 = vadd.f32 %v3891, %v3978
    %v3980 = vpop.f32.mrb[0].mxu0
    %3981 = vdwg.mxu0
    %3982 = vmatprep.subr.mxu0 0.0
    %v3983 = vand.u32 %v1521, 4294901760
    %3984 = vmatpush1.msra.mxu0 %v3983
    %3985 = vmatprep.subr.mxu0 0.0
    %v3986 = vand.u32 %v1522, 4294901760
    %3987 = vmatpush1.msra.mxu0 %v3986
    %3988 = vmatprep.subr.mxu0 0.0
    %v3989 = vand.u32 %v1523, 4294901760
    %3990 = vmatpush1.msra.mxu0 %v3989
    %3991 = vmatprep.subr.mxu0 0.0
    %v3992 = vand.u32 %v1524, 4294901760
    %3993 = vmatpush1.msra.mxu0 %v3992
    %3994 = vmatprep.subr.mxu0 0.0
    %v3995 = vand.u32 %v1525, 4294901760
    %3996 = vmatpush1.msra.mxu0 %v3995
    %3997 = vmatprep.subr.mxu0 0.0
    %v3998 = vand.u32 %v1526, 4294901760
    %3999 = vmatpush1.msra.mxu0 %v3998
    %4000 = vmatprep.subr.mxu0 0.0
    %v4001 = vand.u32 %v1527, 4294901760
    %4002 = vmatpush1.msra.mxu0 %v4001
    %4003 = vmatprep.subr.mxu0 0.0
    %v4004 = vand.u32 %v1528, 4294901760
    %4005 = vmatpush1.msra.mxu0 %v4004
    %4006 = vmatprep.subr.mxu0 0.0
    %4007 = vmatpush1.msra.mxu0 0.0
    %4008 = vmatprep.subr.mxu0 0.0
    %4009 = vmatpush1.msra.mxu0 0.0
    %4010 = vmatprep.subr.mxu0 0.0
    %4011 = vmatpush1.msra.mxu0 0.0
    %4012 = vmatprep.subr.mxu0 0.0
    %4013 = vmatpush1.msra.mxu0 0.0
    %4014 = vmatprep.subr.mxu0 0.0
    %4015 = vmatpush1.msra.mxu0 0.0
    %4016 = vmatprep.subr.mxu0 0.0
    %4017 = vmatpush1.msra.mxu0 0.0
    %4018 = vmatprep.subr.mxu0 0.0
    %4019 = vmatpush1.msra.mxu0 0.0
    %4020 = vmatprep.subr.mxu0 0.0
    %4021 = vmatpush1.msra.mxu0 0.0
    %4022 = vmatprep.subr.mxu0 0.0
    %4023 = vmatpush1.msra.mxu0 0.0
    %4024 = vmatprep.subr.mxu0 0.0
    %4025 = vmatpush1.msra.mxu0 0.0
    %4026 = vmatprep.subr.mxu0 0.0
    %4027 = vmatpush1.msra.mxu0 0.0
    %4028 = vmatprep.subr.mxu0 0.0
    %4029 = vmatpush1.msra.mxu0 0.0
    %4030 = vmatprep.subr.mxu0 0.0
    %4031 = vmatpush1.msra.mxu0 0.0
    %4032 = vmatprep.subr.mxu0 0.0
    %4033 = vmatpush1.msra.mxu0 0.0
    %4034 = vmatprep.subr.mxu0 0.0
    %4035 = vmatpush1.msra.mxu0 0.0
    %4036 = vmatprep.subr.mxu0 0.0
    %4037 = vmatpush1.msra.mxu0 0.0
    %4038 = vmatprep.subr.mxu0 0.0
    %4039 = vmatpush1.msra.mxu0 0.0
    %4040 = vmatprep.subr.mxu0 0.0
    %4041 = vmatpush1.msra.mxu0 0.0
    %4042 = vmatprep.subr.mxu0 0.0
    %4043 = vmatpush1.msra.mxu0 0.0
    %4044 = vmatprep.subr.mxu0 0.0
    %4045 = vmatpush1.msra.mxu0 0.0
    %4046 = vmatprep.subr.mxu0 0.0
    %4047 = vmatpush1.msra.mxu0 0.0
    %4048 = vmatprep.subr.mxu0 0.0
    %4049 = vmatpush1.msra.mxu0 0.0
    %4050 = vmatprep.subr.mxu0 0.0
    %4051 = vmatpush1.msra.mxu0 0.0
    %4052 = vmatprep.subr.mxu0 0.0
    %4053 = vmatpush1.msra.mxu0 0.0
    %4054 = vmatprep.mubr.f32.mxu0 0.0
    %v4055 = vand.u32 %v3698, 4294901760
    %v4056 = vsub.f32 %v3698, %v4055
    %v4057 = vand.u32 %v4056, 4294901760
    %4058 = vmatmul.mubr.f32.gmra.mrb[0].mxu0 %v4057
    %v4059 = vpop.f32.mrb[0].mxu0
    %v4060 = vadd.f32 %v3979, %v4059
    %v4061 = vpop.f32.mrb[0].mxu0
    %4062 = vdwg.mxu0
    %4063 = vmatprep.subr.mxu0 0.0
    %v4064 = vand.u32 %v1521, 4294901760
    %v4065 = vsub.f32 %v1521, %v4064
    %v4066 = vand.u32 %v4065, 4294901760
    %4067 = vmatpush1.msra.mxu0 %v4066
    %4068 = vmatprep.subr.mxu0 0.0
    %v4069 = vand.u32 %v1522, 4294901760
    %v4070 = vsub.f32 %v1522, %v4069
    %v4071 = vand.u32 %v4070, 4294901760
    %4072 = vmatpush1.msra.mxu0 %v4071
    %4073 = vmatprep.subr.mxu0 0.0
    %v4074 = vand.u32 %v1523, 4294901760
    %v4075 = vsub.f32 %v1523, %v4074
    %v4076 = vand.u32 %v4075, 4294901760
    %4077 = vmatpush1.msra.mxu0 %v4076
    %4078 = vmatprep.subr.mxu0 0.0
    %v4079 = vand.u32 %v1524, 4294901760
    %v4080 = vsub.f32 %v1524, %v4079
    %v4081 = vand.u32 %v4080, 4294901760
    %4082 = vmatpush1.msra.mxu0 %v4081
    %4083 = vmatprep.subr.mxu0 0.0
    %v4084 = vand.u32 %v1525, 4294901760
    %v4085 = vsub.f32 %v1525, %v4084
    %v4086 = vand.u32 %v4085, 4294901760
    %4087 = vmatpush1.msra.mxu0 %v4086
    %4088 = vmatprep.subr.mxu0 0.0
    %v4089 = vand.u32 %v1526, 4294901760
    %v4090 = vsub.f32 %v1526, %v4089
    %v4091 = vand.u32 %v4090, 4294901760
    %4092 = vmatpush1.msra.mxu0 %v4091
    %4093 = vmatprep.subr.mxu0 0.0
    %v4094 = vand.u32 %v1527, 4294901760
    %v4095 = vsub.f32 %v1527, %v4094
    %v4096 = vand.u32 %v4095, 4294901760
    %4097 = vmatpush1.msra.mxu0 %v4096
    %4098 = vmatprep.subr.mxu0 0.0
    %v4099 = vand.u32 %v1528, 4294901760
    %v4100 = vsub.f32 %v1528, %v4099
    %v4101 = vand.u32 %v4100, 4294901760
    %4102 = vmatpush1.msra.mxu0 %v4101
    %4103 = vmatprep.subr.mxu0 0.0
    %4104 = vmatpush1.msra.mxu0 0.0
    %4105 = vmatprep.subr.mxu0 0.0
    %4106 = vmatpush1.msra.mxu0 0.0
    %4107 = vmatprep.subr.mxu0 0.0
    %4108 = vmatpush1.msra.mxu0 0.0
    %4109 = vmatprep.subr.mxu0 0.0
    %4110 = vmatpush1.msra.mxu0 0.0
    %4111 = vmatprep.subr.mxu0 0.0
    %4112 = vmatpush1.msra.mxu0 0.0
    %4113 = vmatprep.subr.mxu0 0.0
    %4114 = vmatpush1.msra.mxu0 0.0
    %4115 = vmatprep.subr.mxu0 0.0
    %4116 = vmatpush1.msra.mxu0 0.0
    %4117 = vmatprep.subr.mxu0 0.0
    %4118 = vmatpush1.msra.mxu0 0.0
    %4119 = vmatprep.subr.mxu0 0.0
    %4120 = vmatpush1.msra.mxu0 0.0
    %4121 = vmatprep.subr.mxu0 0.0
    %4122 = vmatpush1.msra.mxu0 0.0
    %4123 = vmatprep.subr.mxu0 0.0
    %4124 = vmatpush1.msra.mxu0 0.0
    %4125 = vmatprep.subr.mxu0 0.0
    %4126 = vmatpush1.msra.mxu0 0.0
    %4127 = vmatprep.subr.mxu0 0.0
    %4128 = vmatpush1.msra.mxu0 0.0
    %4129 = vmatprep.subr.mxu0 0.0
    %4130 = vmatpush1.msra.mxu0 0.0
    %4131 = vmatprep.subr.mxu0 0.0
    %4132 = vmatpush1.msra.mxu0 0.0
    %4133 = vmatprep.subr.mxu0 0.0
    %4134 = vmatpush1.msra.mxu0 0.0
    %4135 = vmatprep.subr.mxu0 0.0
    %4136 = vmatpush1.msra.mxu0 0.0
    %4137 = vmatprep.subr.mxu0 0.0
    %4138 = vmatpush1.msra.mxu0 0.0
    %4139 = vmatprep.subr.mxu0 0.0
    %4140 = vmatpush1.msra.mxu0 0.0
    %4141 = vmatprep.subr.mxu0 0.0
    %4142 = vmatpush1.msra.mxu0 0.0
    %4143 = vmatprep.subr.mxu0 0.0
    %4144 = vmatpush1.msra.mxu0 0.0
    %4145 = vmatprep.subr.mxu0 0.0
    %4146 = vmatpush1.msra.mxu0 0.0
    %4147 = vmatprep.subr.mxu0 0.0
    %4148 = vmatpush1.msra.mxu0 0.0
    %4149 = vmatprep.subr.mxu0 0.0
    %4150 = vmatpush1.msra.mxu0 0.0
    %4151 = vmatprep.mubr.f32.mxu0 0.0
    %v4152 = vand.u32 %v3698, 4294901760
    %4153 = vmatmul.mubr.f32.gmra.mrb[0].mxu0 %v4152
    %v4154 = vpop.f32.mrb[0].mxu0
    %v4155 = vadd.f32 %v4060, %v4154
    %v4156 = vpop.f32.mrb[0].mxu0
    %4157 = vdwg.mxu0
    %4158 = vmatprep.subr.mxu0 0.0
    %v4159 = vand.u32 %v1521, 4294901760
    %4160 = vmatpush1.msra.mxu0 %v4159
    %4161 = vmatprep.subr.mxu0 0.0
    %v4162 = vand.u32 %v1522, 4294901760
    %4163 = vmatpush1.msra.mxu0 %v4162
    %4164 = vmatprep.subr.mxu0 0.0
    %v4165 = vand.u32 %v1523, 4294901760
    %4166 = vmatpush1.msra.mxu0 %v4165
    %4167 = vmatprep.subr.mxu0 0.0
    %v4168 = vand.u32 %v1524, 4294901760
    %4169 = vmatpush1.msra.mxu0 %v4168
    %4170 = vmatprep.subr.mxu0 0.0
    %v4171 = vand.u32 %v1525, 4294901760
    %4172 = vmatpush1.msra.mxu0 %v4171
    %4173 = vmatprep.subr.mxu0 0.0
    %v4174 = vand.u32 %v1526, 4294901760
    %4175 = vmatpush1.msra.mxu0 %v4174
    %4176 = vmatprep.subr.mxu0 0.0
    %v4177 = vand.u32 %v1527, 4294901760
    %4178 = vmatpush1.msra.mxu0 %v4177
    %4179 = vmatprep.subr.mxu0 0.0
    %v4180 = vand.u32 %v1528, 4294901760
    %4181 = vmatpush1.msra.mxu0 %v4180
    %4182 = vmatprep.subr.mxu0 0.0
    %4183 = vmatpush1.msra.mxu0 0.0
    %4184 = vmatprep.subr.mxu0 0.0
    %4185 = vmatpush1.msra.mxu0 0.0
    %4186 = vmatprep.subr.mxu0 0.0
    %4187 = vmatpush1.msra.mxu0 0.0
    %4188 = vmatprep.subr.mxu0 0.0
    %4189 = vmatpush1.msra.mxu0 0.0
    %4190 = vmatprep.subr.mxu0 0.0
    %4191 = vmatpush1.msra.mxu0 0.0
    %4192 = vmatprep.subr.mxu0 0.0
    %4193 = vmatpush1.msra.mxu0 0.0
    %4194 = vmatprep.subr.mxu0 0.0
    %4195 = vmatpush1.msra.mxu0 0.0
    %4196 = vmatprep.subr.mxu0 0.0
    %4197 = vmatpush1.msra.mxu0 0.0
    %4198 = vmatprep.subr.mxu0 0.0
    %4199 = vmatpush1.msra.mxu0 0.0
    %4200 = vmatprep.subr.mxu0 0.0
    %4201 = vmatpush1.msra.mxu0 0.0
    %4202 = vmatprep.subr.mxu0 0.0
    %4203 = vmatpush1.msra.mxu0 0.0
    %4204 = vmatprep.subr.mxu0 0.0
    %4205 = vmatpush1.msra.mxu0 0.0
    %4206 = vmatprep.subr.mxu0 0.0
    %4207 = vmatpush1.msra.mxu0 0.0
    %4208 = vmatprep.subr.mxu0 0.0
    %4209 = vmatpush1.msra.mxu0 0.0
    %4210 = vmatprep.subr.mxu0 0.0
    %4211 = vmatpush1.msra.mxu0 0.0
    %4212 = vmatprep.subr.mxu0 0.0
    %4213 = vmatpush1.msra.mxu0 0.0
    %4214 = vmatprep.subr.mxu0 0.0
    %4215 = vmatpush1.msra.mxu0 0.0
    %4216 = vmatprep.subr.mxu0 0.0
    %4217 = vmatpush1.msra.mxu0 0.0
    %4218 = vmatprep.subr.mxu0 0.0
    %4219 = vmatpush1.msra.mxu0 0.0
    %4220 = vmatprep.subr.mxu0 0.0
    %4221 = vmatpush1.msra.mxu0 0.0
    %4222 = vmatprep.subr.mxu0 0.0
    %4223 = vmatpush1.msra.mxu0 0.0
    %4224 = vmatprep.subr.mxu0 0.0
    %4225 = vmatpush1.msra.mxu0 0.0
    %4226 = vmatprep.subr.mxu0 0.0
    %4227 = vmatpush1.msra.mxu0 0.0
    %4228 = vmatprep.subr.mxu0 0.0
    %4229 = vmatpush1.msra.mxu0 0.0
    %4230 = vmatprep.mubr.f32.mxu0 0.0
    %v4231 = vand.u32 %v3698, 4294901760
    %4232 = vmatmul.mubr.f32.gmra.mrb[0].mxu0 %v4231
    %v4233 = vpop.f32.mrb[0].mxu0
    %v4234 = vadd.f32 %v4155, %v4233
    %v4235 = vpop.f32.mrb[0].mxu0
    %4236 = vdwg.mxu0
    %v4239 = vunpack.c.l.s4 1966171168
    %v4240 = vunpack.c.0.s8 %v4239
    %v4241 = vlaneseq
    %v4242 = vshrl.u32 %v4241, 7
    %v4243 = vsub.s32 %v4240, %v4242
    %v4244 = vrot.slane %v4234, %v4243
    %v4245 = vcombine.high %v4244, %v4244
    %v4247 = vunpack.c.l.s4 1966171168
    %v4248 = vunpack.c.0.s8 %v4247
    %v4249 = vlaneseq
    %v4250 = vshrl.u32 %v4249, 7
    %v4251 = vsub.s32 %v4248, %v4250
    %v4252 = vrot.slane %v4244, %v4251
    %v4254 = vunpack.c.l.s4 1966171168
    %v4255 = vunpack.c.0.s8 %v4254
    %v4256 = vlaneseq
    %v4257 = vshrl.u32 %v4256, 7
    %v4258 = vsub.s32 %v4255, %v4257
    %v4259 = vrot.slane %v4245, %v4258
    %v4260 = vlaneseq
    %v4261 = vshrl.u32 %v4260, 7
    %v4262 = vsub.s32 0, %v4261
    %v4263 = vrot.slane %v4252, %v4262
    %v4264 = vlaneseq
    %v4265 = vshrl.u32 %v4264, 7
    %v4266 = vsub.s32 0, %v4265
    %v4267 = vrot.slane %v4259, %v4266
    %v4270 = vadd.f32 %v1500, %v4263
    %v4271 = vadd.f32 %v1506, %v4263
    %v4272 = vadd.f32 %v1512, %v4267
    %v4273 = vadd.f32 %v1518, %v4267
    %v4274 = vtanh.pop %v4270
    %v4275 = vtanh.pop %v4271
    %v4276 = vtanh.pop %v4272
    %v4277 = vtanh.pop %v4273
    %v4278 = vmul.f32 %v4274, %v2145
    %v4279 = vmul.f32 %v4275, %v2145
    %v4280 = vmul.f32 %v4276, %v2149
    %v4281 = vmul.f32 %v4277, %v2149
    %v4282 = vsel %vm723, %v4278, 0.0
    %4283 = vadd.xlane.f32.xlu0 %v4282
    %v4284 = vpop.xlane.xlu0 %4283
    %v4285 = vsel %vm723, %v4279, 0.0
    %4286 = vadd.xlane.f32.xlu0 %v4285
    %v4287 = vpop.xlane.xlu0 %4286
    %v4288 = vsel %vm723, %v4280, 0.0
    %4289 = vadd.xlane.f32.xlu0 %v4288
    %v4290 = vpop.xlane.xlu0 %4289
    %v4291 = vsel %vm723, %v4281, 0.0
    %4292 = vadd.xlane.f32.xlu0 %v4291
    %v4293 = vpop.xlane.xlu0 %4292
    %v4298 = vlaneseq
    %v4299 = vshrl.u32 %v4298, 7
    %v4300 = vsub.s32 %v733, %v4299
    %v4301 = vrot.slane %v4284, %v4300
    %v4302 = vlaneseq
    %v4303 = vshrl.u32 %v4302, 7
    %v4304 = vsub.s32 %v2176, %v4303
    %v4305 = vrot.slane %v4287, %v4304
    %v4306 = vsel %vm2181, %v4305, %v4301
    %v4307 = vlaneseq
    %v4308 = vshrl.u32 %v4307, 7
    %v4309 = vsub.s32 %v733, %v4308
    %v4310 = vrot.slane %v4290, %v4309
    %v4311 = vlaneseq
    %v4312 = vshrl.u32 %v4311, 7
    %v4313 = vsub.s32 %v2176, %v4312
    %v4314 = vrot.slane %v4293, %v4313
    %v4315 = vsel %vm2181, %v4314, %v4310
    %v4316 = vsel %vm742, %v4315, %v4306
    %v4318 = vsel %vm2194, %v4316, -inf
    %4319 = vmax.xlane.f32.xlu0 %v4318
    %v4320 = vpop.xlane.xlu0 %4319
    %v4322 = vlaneseq
    %v4323 = vshrl.u32 %v4322, 7
    %v4324 = vsub.s32 0, %v4323
    %v4325 = vrot.slane %v4320, %v4324
    %v4326 = vlaneseq
    %v4327 = vshrl.u32 %v4326, 7
    %v4328 = vsub.s32 1, %v4327
    %v4329 = vrot.slane %v4320, %v4328
    %v4332 = vsub.f32 %v4284, %v4325
    %v4333 = vsub.f32 %v4287, %v4325
    %v4334 = vsub.f32 %v4290, %v4329
    %v4335 = vsub.f32 %v4293, %v4329
    %v4336 = vmul.f32 %v4332, 1.442695
    %v4337 = vpow.pop %v4336
    %v4338 = vmul.f32 %v4333, 1.442695
    %v4339 = vpow.pop %v4338
    %v4340 = vmul.f32 %v4334, 1.442695
    %v4341 = vpow.pop %v4340
    %v4342 = vmul.f32 %v4335, 1.442695
    %v4343 = vpow.pop %v4342
    %4348 = vset.pattern.permute.xlu0 0
    %4349 = vperm.xlu0 %4348, %v4337
    %v4350 = vpop.permute.xlu0 %4349
    %4351 = vset.pattern.permute.xlu0 0
    %4352 = vperm.xlu0 %4351, %v4339
    %v4353 = vpop.permute.xlu0 %4352
    %4354 = vset.pattern.permute.xlu0 0
    %4355 = vperm.xlu0 %4354, %v4341
    %v4356 = vpop.permute.xlu0 %4355
    %4357 = vset.pattern.permute.xlu0 0
    %4358 = vperm.xlu0 %4357, %v4343
    %v4359 = vpop.permute.xlu0 %4358
    %v4360 = vlaneseq
    %v4361 = vshrl.u32 %v4360, 7
    %v4362 = vsub.s32 %v733, %v4361
    %v4363 = vrot.slane %v4350, %v4362
    %v4364 = vlaneseq
    %v4365 = vshrl.u32 %v4364, 7
    %v4366 = vsub.s32 %v2176, %v4365
    %v4367 = vrot.slane %v4353, %v4366
    %v4368 = vsel %vm2181, %v4367, %v4363
    %v4369 = vlaneseq
    %v4370 = vshrl.u32 %v4369, 7
    %v4371 = vsub.s32 %v733, %v4370
    %v4372 = vrot.slane %v4356, %v4371
    %v4373 = vlaneseq
    %v4374 = vshrl.u32 %v4373, 7
    %v4375 = vsub.s32 %v2176, %v4374
    %v4376 = vrot.slane %v4359, %v4375
    %v4377 = vsel %vm2181, %v4376, %v4372
    %v4378 = vsel %vm742, %v4377, %v4368
    %v4380 = vsel %vm2194, %v4378, 0.0
    %4381 = vadd.xlane.f32.xlu0 %v4380
    %v4382 = vpop.xlane.xlu0 %4381
    %v4384 = vlaneseq
    %v4385 = vshrl.u32 %v4384, 7
    %v4386 = vsub.s32 0, %v4385
    %v4387 = vrot.slane %v4382, %v4386
    %v4388 = vlaneseq
    %v4389 = vshrl.u32 %v4388, 7
    %v4390 = vsub.s32 1, %v4389
    %v4391 = vrot.slane %v4382, %v4390
    %v4394 = vrcp.pop %v4387
    %v4395 = vmul.f32 %v4337, %v4394
    %v4396 = vmul.f32 %v4339, %v4394
    %v4397 = vrcp.pop %v4391
    %v4398 = vmul.f32 %v4341, %v4397
    %v4399 = vmul.f32 %v4343, %v4397
    %v4400 = vlaneseq
    %v4401 = vshrl.u32 %v4400, 7
    %v4402 = vsub.s32 %v733, %v4401
    %v4403 = vrot.slane %v2280, %v4402
    %v4404 = vlaneseq
    %v4405 = vshrl.u32 %v4404, 7
    %v4406 = vsub.s32 %v2176, %v4405
    %v4407 = vrot.slane %v2285, %v4406
    %v4408 = vsel %vm2181, %v4407, %v4403
    %v4409 = vlaneseq
    %v4410 = vshrl.u32 %v4409, 7
    %v4411 = vsub.s32 %v733, %v4410
    %v4412 = vrot.slane %v2290, %v4411
    %v4413 = vlaneseq
    %v4414 = vshrl.u32 %v4413, 7
    %v4415 = vsub.s32 %v2176, %v4414
    %v4416 = vrot.slane %v2295, %v4415
    %v4417 = vsel %vm2181, %v4416, %v4412
    %v4418 = vsel %vm742, %v4417, %v4408
    %4424 = vset.pattern.permute.xlu0 0
    %4425 = vperm.xlu0 %4424, %v4395
    %v4426 = vpop.permute.xlu0 %4425
    %4427 = vset.pattern.permute.xlu0 0
    %4428 = vperm.xlu0 %4427, %v4396
    %v4429 = vpop.permute.xlu0 %4428
    %4430 = vset.pattern.permute.xlu0 0
    %4431 = vperm.xlu0 %4430, %v4398
    %v4432 = vpop.permute.xlu0 %4431
    %4433 = vset.pattern.permute.xlu0 0
    %4434 = vperm.xlu0 %4433, %v4399
    %v4435 = vpop.permute.xlu0 %4434
    %v4436 = vadd.s32 %v733, 4294967280
    %v4437 = vlaneseq
    %v4438 = vshrl.u32 %v4437, 7
    %v4439 = vsub.s32 %v4436, %v4438
    %v4440 = vrot.slane %v4426, %v4439
    %v4441 = vadd.s32 %v733, 4294967272
    %v4442 = vlaneseq
    %v4443 = vshrl.u32 %v4442, 7
    %v4444 = vsub.s32 %v4441, %v4443
    %v4445 = vrot.slane %v4429, %v4444
    %vm4446 = vcmask 261312
    %v4447 = vsel %vm4446, %v4445, %v4440
    %v4448 = vlaneseq
    %v4449 = vshrl.u32 %v4448, 7
    %v4450 = vsub.s32 %v4436, %v4449
    %v4451 = vrot.slane %v4432, %v4450
    %v4452 = vlaneseq
    %v4453 = vshrl.u32 %v4452, 7
    %v4454 = vsub.s32 %v4441, %v4453
    %v4455 = vrot.slane %v4435, %v4454
    %v4456 = vsel %vm4446, %v4455, %v4451
    %v4457 = vsel %vm742, %v4456, %v4447
    %vm4459 = vcmask 130048
    %v4460 = vsel %vm4459, %v4418, %v4457
    %vm4461 = vcmask 254976
    %4462 = vst.msk [vmem:[#allocation7] sm:$0x3] %vm4461, %v4460
    // Predicated region
    $region66: #{tpu_custom_call.1} parent=1 // pred_check
      _
    $region67: #{tpu_custom_call.1} parent=1 // pred_check_branch
      %4464 = sbr.rel (0) target = $region69
    $region68: #{tpu_custom_call.1} parent=1 // pred_region
      %s4466 = ssub.s32 32, 32
      %4467 = vsyncadd [#allocation4], %s4466
      %s4469 = sshll.u32 [#allocation7], 4
      %s4470 = int_to_ptr.vmem [resolvable:$true] %s4469
      %4472 = dma.vmem_to_hbm [thread:$0]  %s4470, 32, %s14, [#allocation4]
    $region69: #{tpu_custom_call.1} parent=1 // pred_fallthru
      _
    // Predicated region
    $region70: #{tpu_custom_call.1} parent=1 // pred_check
      _
    $region71: #{tpu_custom_call.1} parent=1 // pred_check_branch
      %4474 = sbr.rel (0) target = $region73
    $region72: #{tpu_custom_call.1} parent=1 // pred_region
      %4475 = dma.done [#allocation4], 32
    $region73: #{tpu_custom_call.1} parent=1 // pred_fallthru
      _
    %4476 = vsyncpa [#allocation3], 1
    %4477 = vsyncpa [#allocation6], 1
    %4478 = vsyncpa [#allocation4], 1

</llo_original>
